<compile_context>
chip_gen: v5e
topology: v5e:2x2
jax: 0.10.0
libtpu: 0.0.40
codegen_flags: <defaults>
</compile_context>

<pallas_src>
import functools
import math

import jax
import jax.numpy as jnp
from jax.experimental import pallas as pl
from jax.experimental.pallas import tpu as pltpu

HIDDEN = 64          # hidden_size
NUM_LAYERS = 2
PRE_LEN = 3
INPUT_SIZE = 12      # == seq_len in the reference module (feature dim)
SEQ_LEN = 12         # number of timesteps used in the demo
GATES = 8 * HIDDEN   # 4 gates x 2 directions, per-gate interleaved (= 512)


# ----------------------------------------------------------------------------
# Fused Pallas kernel: 2-layer bidirectional LSTM + Linear head
# ----------------------------------------------------------------------------
def _fused_bilstm_kernel(T, B,
                         x_ref,
                         wx0f_ref, wx0b_ref, whh0_ref, b0_ref,
                         wx1f_ref, wx1b_ref, whh1_ref, b1_ref,
                         wout_ref, bout_ref,
                         o_ref,
                         gxf_ref, gxb_ref):
    """Fused forward pass.

    x_ref    : (T*B, D_in)   time-major flattened input (row = t*B + b), f32
    wx*_ref  : (D_in, 8H)    input->gates, bf16; fwd (resp. bwd) gate columns
                             filled, the other direction's columns are zero
    whh*_ref : (2H, 8H)      block-diagonal recurrent weights, bf16
    b*_ref   : (1, 8H)       combined biases (b_ih + b_hh), both dirs, f32
    wout_ref : (2H, pre_len) head weight (f32), bout_ref: (1, pre_len)
    o_ref    : (T*B, pre_len) time-major output
    gx*_ref  : (T*B, 8H) f32 VMEM scratch for the hoisted input projections
    Gate column layout: [i_f|i_b | f_f|f_b | g_f|g_b | o_f|o_b], 128 lanes each.
    """
    H = HIDDEN
    H2 = 2 * H   # 128 lanes: one full vreg width per fused gate / state

    def bilstm_layer(in_bf16, wx_f, wx_b, whh, bias):
        # Hoisted input projections (one MXU matmul per direction, M = T*B);
        # bias folded in once, outside the recurrence.
        gxf_ref[...] = (
            jnp.dot(in_bf16, wx_f, preferred_element_type=jnp.float32) + bias)
        gxb_ref[...] = jnp.dot(in_bf16, wx_b,
                               preferred_element_type=jnp.float32)

        h = jnp.zeros((B, H2), jnp.float32)   # [h_fwd | h_bwd]
        c = jnp.zeros((B, H2), jnp.float32)
        fwd, bwd = [], []
        for s in range(T):                    # static full unroll (T == 12)
            # fwd direction consumes time s, bwd direction consumes time T-1-s
            gx = (gxf_ref[s * B:(s + 1) * B, :]
                  + gxb_ref[(T - 1 - s) * B:(T - s) * B, :])
            gates = jnp.dot(h.astype(jnp.bfloat16), whh,
                            preferred_element_type=jnp.float32) + gx
            i_g = jax.nn.sigmoid(gates[:, 0 * H2:1 * H2])   # [i_f | i_b]
            f_g = jax.nn.sigmoid(gates[:, 1 * H2:2 * H2])   # [f_f | f_b]
            g_g = jnp.tanh(gates[:, 2 * H2:3 * H2])         # [g_f | g_b]
            o_g = jax.nn.sigmoid(gates[:, 3 * H2:4 * H2])   # [o_f | o_b]
            c = f_g * c + i_g * g_g
            h = o_g * jnp.tanh(c)
            fwd.append(h[:, :H])              # fwd hidden at time s
            bwd.append(h[:, H:])              # bwd hidden at time T-1-s
        fwd_mat = jnp.concatenate(fwd, axis=0)         # (T*B, H), time-major
        bwd_mat = jnp.concatenate(bwd[::-1], axis=0)   # time-aligned with fwd
        return jnp.concatenate([fwd_mat, bwd_mat], axis=-1)   # (T*B, 2H)

    x_bf = x_ref[...].astype(jnp.bfloat16)
    l0 = bilstm_layer(x_bf, wx0f_ref[...], wx0b_ref[...], whh0_ref[...],
                      b0_ref[...])
    # TODO(synk): nn.LSTM inter-layer dropout(p=0.3) is train-time-only
    # randomness; eval/inference semantics (no dropout) implemented here.
    l1 = bilstm_layer(l0.astype(jnp.bfloat16), wx1f_ref[...], wx1b_ref[...],
                      whh1_ref[...], b1_ref[...])
    o_ref[...] = (jnp.dot(l1, wout_ref[...],
                          preferred_element_type=jnp.float32) + bout_ref[...])


# ----------------------------------------------------------------------------
# Wrapper
# ----------------------------------------------------------------------------
def lstm_forecast_forward(x, packed):
    """Reproduces LSTM.forward: x (B, T, input_size) -> (B, T, pre_len)."""
    B, T, D = x.shape
    # time-major, flattened: row index = t*B + b (tiny XLA copy, fused by jit)
    x_tm = jnp.transpose(x.astype(jnp.float32), (1, 0, 2)).reshape(T * B, D)
    out_flat = pl.pallas_call(
        functools.partial(_fused_bilstm_kernel, T, B),
        out_shape=jax.ShapeDtypeStruct((T * B, PRE_LEN), jnp.float32),
        scratch_shapes=[
            pltpu.VMEM((T * B, GATES), jnp.float32),   # hoisted fwd projection
            pltpu.VMEM((T * B, GATES), jnp.float32),   # hoisted bwd projection
        ],
    )(x_tm, *packed)
    # (T*B, pre_len) time-major -> (B, T, pre_len) to match batch_first PyTorch
    return out_flat.reshape(T, B, PRE_LEN).transpose(1, 0, 2)


# ----------------------------------------------------------------------------
# Deterministic parameter init (PyTorch layout) + one-time kernel repack
# ----------------------------------------------------------------------------
def init_params(key):
    """PyTorch-layout params for nn.LSTM(12, 64, 2, bidirectional) + Linear."""
    params = {}
    bound = 1.0 / math.sqrt(HIDDEN)
    d_in = INPUT_SIZE
    k = key
    for layer in range(NUM_LAYERS):
        lp = {}
        for suf in ("", "_rev"):
            k, k1, k2, k3, k4 = jax.random.split(k, 5)
            lp["w_ih" + suf] = jax.random.uniform(
                k1, (4 * HIDDEN, d_in), jnp.float32, -bound, bound)
            lp["w_hh" + suf] = jax.random.uniform(
                k2, (4 * HIDDEN, HIDDEN), jnp.float32, -bound, bound)
            lp["b_ih" + suf] = jax.random.uniform(
                k3, (4 * HIDDEN,), jnp.float32, -bound, bound)
            lp["b_hh" + suf] = jax.random.uniform(
                k4, (4 * HIDDEN,), jnp.float32, -bound, bound)
        params[f"layer{layer}"] = lp
        d_in = 2 * HIDDEN        # bidirectional concat feeds the next layer
    k, k1, k2 = jax.random.split(k, 3)
    bound_out = 1.0 / math.sqrt(2 * HIDDEN)
    params["out_w"] = jax.random.uniform(
        k1, (PRE_LEN, 2 * HIDDEN), jnp.float32, -bound_out, bound_out)
    params["out_b"] = jax.random.uniform(
        k2, (PRE_LEN,), jnp.float32, -bound_out, bound_out)
    return params


def pack_params(params):
    """Convert PyTorch-layout params to the fused-kernel layout (done once)."""
    H = HIDDEN

    def interleave(cols_f, cols_b):
        # (D, 4H) fwd / bwd gate-blocked [i,f,g,o] -> (D, 8H) per-gate interleave
        d = cols_f.shape[0]
        return jnp.stack(
            [cols_f.reshape(d, 4, H), cols_b.reshape(d, 4, H)], axis=2
        ).reshape(d, 8 * H)

    packed = []
    for layer in range(NUM_LAYERS):
        lp = params[f"layer{layer}"]
        wih_f, wih_b = lp["w_ih"].T, lp["w_ih_rev"].T        # (D_in, 4H)
        whh_f, whh_b = lp["w_hh"].T, lp["w_hh_rev"].T        # (H, 4H)
        zx = jnp.zeros_like(wih_f)
        zh = jnp.zeros_like(whh_f)
        wx_f = interleave(wih_f, zx).astype(jnp.bfloat16)    # (D_in, 8H)
        wx_b = interleave(zx, wih_b).astype(jnp.bfloat16)    # (D_in, 8H)
        whh_big = jnp.concatenate(
            [interleave(whh_f, zh), interleave(zh, whh_b)], axis=0
        ).astype(jnp.bfloat16)                               # (2H, 8H) blockdiag
        b_f = (lp["b_ih"] + lp["b_hh"])[None, :]             # (1, 4H)
        b_b = (lp["b_ih_rev"] + lp["b_hh_rev"])[None, :]
        b_big = interleave(b_f, b_b)                         # (1, 8H), f32
        packed += [wx_f, wx_b, whh_big, b_big]
    packed.append(params["out_w"].T)                         # (2H, pre_len)
    packed.append(params["out_b"][None, :])                  # (1, pre_len)
    return tuple(packed)


# ----------------------------------------------------------------------------
if __name__ == "__main__":
    key = jax.random.PRNGKey(0)
    k_param, k_x = jax.random.split(key)

    params = init_params(k_param)
    packed = pack_params(params)     # one-time weight repack, outside hot path

    batch = 4
    time_steps = SEQ_LEN             # 12 timesteps, input_size=12 features each
    x = jax.random.normal(k_x, (batch, time_steps, INPUT_SIZE), jnp.float32)

    out = jax.jit(lstm_forecast_forward)(x, packed)
    out = jax.block_until_ready(out)

    assert out.shape == (batch, time_steps, PRE_LEN), out.shape
    assert out.dtype == jnp.float32
    assert bool(jnp.all(jnp.isfinite(out)))
    print("KERNEL_OK")
</pallas_src>

<mosaic_0001>
module attributes {stable_mosaic.version = 11 : i64} {
  func.func @_fused_bilstm_kernel(%arg0: memref<48x12xf32, #tpu.memory_space<vmem>>, %arg1: memref<12x512xbf16, #tpu.memory_space<vmem>>, %arg2: memref<12x512xbf16, #tpu.memory_space<vmem>>, %arg3: memref<128x512xbf16, #tpu.memory_space<vmem>>, %arg4: memref<1x512xf32, #tpu.memory_space<vmem>>, %arg5: memref<128x512xbf16, #tpu.memory_space<vmem>>, %arg6: memref<128x512xbf16, #tpu.memory_space<vmem>>, %arg7: memref<128x512xbf16, #tpu.memory_space<vmem>>, %arg8: memref<1x512xf32, #tpu.memory_space<vmem>>, %arg9: memref<128x3xf32, #tpu.memory_space<vmem>>, %arg10: memref<1x3xf32, #tpu.memory_space<vmem>>, %arg11: memref<48x3xf32, #tpu.memory_space<vmem>>, %arg12: memref<48x512xf32, #tpu.memory_space<vmem>>, %arg13: memref<48x512xf32, #tpu.memory_space<vmem>>) attributes {dimension_semantics = [], scalar_prefetch = 0 : i64, scratch_operands = 2 : i64, tpu.core_type = #tpu.core_type<tc>} {
    %c0 = arith.constant 0 : index
    %c0_0 = arith.constant 0 : index
    %0 = vector.load %arg0[%c0, %c0_0] : memref<48x12xf32, #tpu.memory_space<vmem>>, vector<48x12xf32>
    %1 = arith.truncf %0 : vector<48x12xf32> to vector<48x12xbf16>
    %c0_1 = arith.constant 0 : index
    %c0_2 = arith.constant 0 : index
    %2 = vector.load %arg1[%c0_1, %c0_2] : memref<12x512xbf16, #tpu.memory_space<vmem>>, vector<12x512xbf16>
    %c0_3 = arith.constant 0 : index
    %c0_4 = arith.constant 0 : index
    %3 = vector.load %arg2[%c0_3, %c0_4] : memref<12x512xbf16, #tpu.memory_space<vmem>>, vector<12x512xbf16>
    %c0_5 = arith.constant 0 : index
    %c0_6 = arith.constant 0 : index
    %4 = vector.load %arg3[%c0_5, %c0_6] : memref<128x512xbf16, #tpu.memory_space<vmem>>, vector<128x512xbf16>
    %c0_7 = arith.constant 0 : index
    %c0_8 = arith.constant 0 : index
    %5 = vector.load %arg4[%c0_7, %c0_8] : memref<1x512xf32, #tpu.memory_space<vmem>>, vector<1x512xf32>
    %cst = arith.constant dense<0.000000e+00> : vector<48x512xf32>
    %6 = tpu.matmul %1, %2, %cst {dimension_numbers = #tpu.dot_dimension_numbers<[1], [0], [0], [1], [0, 0, 1, 1], [], []>} : vector<48x12xbf16>, vector<12x512xbf16>, vector<48x512xf32> -> vector<48x512xf32>
    %7 = vector.broadcast %5 : vector<1x512xf32> to vector<48x512xf32>
    %8 = arith.addf %6, %7 : vector<48x512xf32>
    %c0_9 = arith.constant 0 : index
    %c0_10 = arith.constant 0 : index
    %9 = vector.load %arg12[%c0_9, %c0_10] : memref<48x512xf32, #tpu.memory_space<vmem>>, vector<48x512xf32>
    tpu.vector_store %arg12[%c0_9, %c0_10], %8 {strides = array<i32>} : memref<48x512xf32, #tpu.memory_space<vmem>>, vector<48x512xf32>,
    %cst_11 = arith.constant dense<0.000000e+00> : vector<48x512xf32>
    %10 = tpu.matmul %1, %3, %cst_11 {dimension_numbers = #tpu.dot_dimension_numbers<[1], [0], [0], [1], [0, 0, 1, 1], [], []>} : vector<48x12xbf16>, vector<12x512xbf16>, vector<48x512xf32> -> vector<48x512xf32>
    %c0_12 = arith.constant 0 : index
    %c0_13 = arith.constant 0 : index
    %11 = vector.load %arg13[%c0_12, %c0_13] : memref<48x512xf32, #tpu.memory_space<vmem>>, vector<48x512xf32>
    tpu.vector_store %arg13[%c0_12, %c0_13], %10 {strides = array<i32>} : memref<48x512xf32, #tpu.memory_space<vmem>>, vector<48x512xf32>,
    %cst_14 = arith.constant 0.000000e+00 : f32
    %12 = vector.broadcast %cst_14 : f32 to vector<4x128xf32>
    %cst_15 = arith.constant 0.000000e+00 : f32
    %13 = vector.broadcast %cst_15 : f32 to vector<4x128xf32>
    %c0_16 = arith.constant 0 : index
    %c0_17 = arith.constant 0 : index
    %14 = vector.load %arg12[%c0_16, %c0_17] : memref<48x512xf32, #tpu.memory_space<vmem>>, vector<4x512xf32>
    %c44 = arith.constant 44 : index
    %c0_18 = arith.constant 0 : index
    %15 = vector.load %arg13[%c44, %c0_18] : memref<48x512xf32, #tpu.memory_space<vmem>>, vector<4x512xf32>
    %16 = arith.addf %14, %15 : vector<4x512xf32>
    %17 = arith.truncf %12 : vector<4x128xf32> to vector<4x128xbf16>
    %cst_19 = arith.constant dense<0.000000e+00> : vector<4x512xf32>
    %18 = tpu.matmul %17, %4, %cst_19 {dimension_numbers = #tpu.dot_dimension_numbers<[1], [0], [0], [1], [0, 0, 1, 1], [], []>} : vector<4x128xbf16>, vector<128x512xbf16>, vector<4x512xf32> -> vector<4x512xf32>
    %19 = arith.addf %18, %16 : vector<4x512xf32>
    %20 = vector.extract_strided_slice %19 {offsets = [0, 0], sizes = [4, 128], strides = [1, 1]} : vector<4x512xf32> to vector<4x128xf32>
    %21 = arith.negf %20 : vector<4x128xf32>
    %22 = math.exp %21 : vector<4x128xf32>
    %cst_20 = arith.constant 1.000000e+00 : f32
    %23 = vector.broadcast %cst_20 : f32 to vector<4x128xf32>
    %24 = arith.addf %23, %22 : vector<4x128xf32>
    %25 = arith.divf %23, %24 : vector<4x128xf32>
    %26 = vector.extract_strided_slice %19 {offsets = [0, 128], sizes = [4, 128], strides = [1, 1]} : vector<4x512xf32> to vector<4x128xf32>
    %27 = arith.negf %26 : vector<4x128xf32>
    %28 = math.exp %27 : vector<4x128xf32>
    %cst_21 = arith.constant 1.000000e+00 : f32
    %29 = vector.broadcast %cst_21 : f32 to vector<4x128xf32>
    %30 = arith.addf %29, %28 : vector<4x128xf32>
    %31 = arith.divf %29, %30 : vector<4x128xf32>
    %32 = vector.extract_strided_slice %19 {offsets = [0, 256], sizes = [4, 128], strides = [1, 1]} : vector<4x512xf32> to vector<4x128xf32>
    %33 = math.tanh %32 : vector<4x128xf32>
    %34 = vector.extract_strided_slice %19 {offsets = [0, 384], sizes = [4, 128], strides = [1, 1]} : vector<4x512xf32> to vector<4x128xf32>
    %35 = arith.negf %34 : vector<4x128xf32>
    %36 = math.exp %35 : vector<4x128xf32>
    %cst_22 = arith.constant 1.000000e+00 : f32
    %37 = vector.broadcast %cst_22 : f32 to vector<4x128xf32>
    %38 = arith.addf %37, %36 : vector<4x128xf32>
    %39 = arith.divf %37, %38 : vector<4x128xf32>
    %40 = arith.mulf %31, %13 : vector<4x128xf32>
    %41 = arith.mulf %25, %33 : vector<4x128xf32>
    %42 = arith.addf %40, %41 : vector<4x128xf32>
    %43 = math.tanh %42 : vector<4x128xf32>
    %44 = arith.mulf %39, %43 : vector<4x128xf32>
    %45 = vector.extract_strided_slice %44 {offsets = [0, 0], sizes = [4, 64], strides = [1, 1]} : vector<4x128xf32> to vector<4x64xf32>
    %46 = vector.extract_strided_slice %44 {offsets = [0, 64], sizes = [4, 64], strides = [1, 1]} : vector<4x128xf32> to vector<4x64xf32>
    %c4 = arith.constant 4 : index
    %c0_23 = arith.constant 0 : index
    %47 = vector.load %arg12[%c4, %c0_23] : memref<48x512xf32, #tpu.memory_space<vmem>>, vector<4x512xf32>
    %c40 = arith.constant 40 : index
    %c0_24 = arith.constant 0 : index
    %48 = vector.load %arg13[%c40, %c0_24] : memref<48x512xf32, #tpu.memory_space<vmem>>, vector<4x512xf32>
    %49 = arith.addf %47, %48 : vector<4x512xf32>
    %50 = arith.truncf %44 : vector<4x128xf32> to vector<4x128xbf16>
    %cst_25 = arith.constant dense<0.000000e+00> : vector<4x512xf32>
    %51 = tpu.matmul %50, %4, %cst_25 {dimension_numbers = #tpu.dot_dimension_numbers<[1], [0], [0], [1], [0, 0, 1, 1], [], []>} : vector<4x128xbf16>, vector<128x512xbf16>, vector<4x512xf32> -> vector<4x512xf32>
    %52 = arith.addf %51, %49 : vector<4x512xf32>
    %53 = vector.extract_strided_slice %52 {offsets = [0, 0], sizes = [4, 128], strides = [1, 1]} : vector<4x512xf32> to vector<4x128xf32>
    %54 = arith.negf %53 : vector<4x128xf32>
    %55 = math.exp %54 : vector<4x128xf32>
    %cst_26 = arith.constant 1.000000e+00 : f32
    %56 = vector.broadcast %cst_26 : f32 to vector<4x128xf32>
    %57 = arith.addf %56, %55 : vector<4x128xf32>
    %58 = arith.divf %56, %57 : vector<4x128xf32>
    %59 = vector.extract_strided_slice %52 {offsets = [0, 128], sizes = [4, 128], strides = [1, 1]} : vector<4x512xf32> to vector<4x128xf32>
    %60 = arith.negf %59 : vector<4x128xf32>
    %61 = math.exp %60 : vector<4x128xf32>
    %cst_27 = arith.constant 1.000000e+00 : f32
    %62 = vector.broadcast %cst_27 : f32 to vector<4x128xf32>
    %63 = arith.addf %62, %61 : vector<4x128xf32>
    %64 = arith.divf %62, %63 : vector<4x128xf32>
    %65 = vector.extract_strided_slice %52 {offsets = [0, 256], sizes = [4, 128], strides = [1, 1]} : vector<4x512xf32> to vector<4x128xf32>
    %66 = math.tanh %65 : vector<4x128xf32>
    %67 = vector.extract_strided_slice %52 {offsets = [0, 384], sizes = [4, 128], strides = [1, 1]} : vector<4x512xf32> to vector<4x128xf32>
    %68 = arith.negf %67 : vector<4x128xf32>
    %69 = math.exp %68 : vector<4x128xf32>
    %cst_28 = arith.constant 1.000000e+00 : f32
    %70 = vector.broadcast %cst_28 : f32 to vector<4x128xf32>
    %71 = arith.addf %70, %69 : vector<4x128xf32>
    %72 = arith.divf %70, %71 : vector<4x128xf32>
    %73 = arith.mulf %64, %42 : vector<4x128xf32>
    %74 = arith.mulf %58, %66 : vector<4x128xf32>
    %75 = arith.addf %73, %74 : vector<4x128xf32>
    %76 = math.tanh %75 : vector<4x128xf32>
    %77 = arith.mulf %72, %76 : vector<4x128xf32>
    %78 = vector.extract_strided_slice %77 {offsets = [0, 0], sizes = [4, 64], strides = [1, 1]} : vector<4x128xf32> to vector<4x64xf32>
    %79 = vector.extract_strided_slice %77 {offsets = [0, 64], sizes = [4, 64], strides = [1, 1]} : vector<4x128xf32> to vector<4x64xf32>
    %c8 = arith.constant 8 : index
    %c0_29 = arith.constant 0 : index
    %80 = vector.load %arg12[%c8, %c0_29] : memref<48x512xf32, #tpu.memory_space<vmem>>, vector<4x512xf32>
    %c36 = arith.constant 36 : index
    %c0_30 = arith.constant 0 : index
    %81 = vector.load %arg13[%c36, %c0_30] : memref<48x512xf32, #tpu.memory_space<vmem>>, vector<4x512xf32>
    %82 = arith.addf %80, %81 : vector<4x512xf32>
    %83 = arith.truncf %77 : vector<4x128xf32> to vector<4x128xbf16>
    %cst_31 = arith.constant dense<0.000000e+00> : vector<4x512xf32>
    %84 = tpu.matmul %83, %4, %cst_31 {dimension_numbers = #tpu.dot_dimension_numbers<[1], [0], [0], [1], [0, 0, 1, 1], [], []>} : vector<4x128xbf16>, vector<128x512xbf16>, vector<4x512xf32> -> vector<4x512xf32>
    %85 = arith.addf %84, %82 : vector<4x512xf32>
    %86 = vector.extract_strided_slice %85 {offsets = [0, 0], sizes = [4, 128], strides = [1, 1]} : vector<4x512xf32> to vector<4x128xf32>
    %87 = arith.negf %86 : vector<4x128xf32>
    %88 = math.exp %87 : vector<4x128xf32>
    %cst_32 = arith.constant 1.000000e+00 : f32
    %89 = vector.broadcast %cst_32 : f32 to vector<4x128xf32>
    %90 = arith.addf %89, %88 : vector<4x128xf32>
    %91 = arith.divf %89, %90 : vector<4x128xf32>
    %92 = vector.extract_strided_slice %85 {offsets = [0, 128], sizes = [4, 128], strides = [1, 1]} : vector<4x512xf32> to vector<4x128xf32>
    %93 = arith.negf %92 : vector<4x128xf32>
    %94 = math.exp %93 : vector<4x128xf32>
    %cst_33 = arith.constant 1.000000e+00 : f32
    %95 = vector.broadcast %cst_33 : f32 to vector<4x128xf32>
    %96 = arith.addf %95, %94 : vector<4x128xf32>
    %97 = arith.divf %95, %96 : vector<4x128xf32>
    %98 = vector.extract_strided_slice %85 {offsets = [0, 256], sizes = [4, 128], strides = [1, 1]} : vector<4x512xf32> to vector<4x128xf32>
    %99 = math.tanh %98 : vector<4x128xf32>
    %100 = vector.extract_strided_slice %85 {offsets = [0, 384], sizes = [4, 128], strides = [1, 1]} : vector<4x512xf32> to vector<4x128xf32>
    %101 = arith.negf %100 : vector<4x128xf32>
    %102 = math.exp %101 : vector<4x128xf32>
    %cst_34 = arith.constant 1.000000e+00 : f32
    %103 = vector.broadcast %cst_34 : f32 to vector<4x128xf32>
    %104 = arith.addf %103, %102 : vector<4x128xf32>
    %105 = arith.divf %103, %104 : vector<4x128xf32>
    %106 = arith.mulf %97, %75 : vector<4x128xf32>
    %107 = arith.mulf %91, %99 : vector<4x128xf32>
    %108 = arith.addf %106, %107 : vector<4x128xf32>
    %109 = math.tanh %108 : vector<4x128xf32>
    %110 = arith.mulf %105, %109 : vector<4x128xf32>
    %111 = vector.extract_strided_slice %110 {offsets = [0, 0], sizes = [4, 64], strides = [1, 1]} : vector<4x128xf32> to vector<4x64xf32>
    %112 = vector.extract_strided_slice %110 {offsets = [0, 64], sizes = [4, 64], strides = [1, 1]} : vector<4x128xf32> to vector<4x64xf32>
    %c12 = arith.constant 12 : index
    %c0_35 = arith.constant 0 : index
    %113 = vector.load %arg12[%c12, %c0_35] : memref<48x512xf32, #tpu.memory_space<vmem>>, vector<4x512xf32>
    %c32 = arith.constant 32 : index
    %c0_36 = arith.constant 0 : index
    %114 = vector.load %arg13[%c32, %c0_36] : memref<48x512xf32, #tpu.memory_space<vmem>>, vector<4x512xf32>
    %115 = arith.addf %113, %114 : vector<4x512xf32>
    %116 = arith.truncf %110 : vector<4x128xf32> to vector<4x128xbf16>
    %cst_37 = arith.constant dense<0.000000e+00> : vector<4x512xf32>
    %117 = tpu.matmul %116, %4, %cst_37 {dimension_numbers = #tpu.dot_dimension_numbers<[1], [0], [0], [1], [0, 0, 1, 1], [], []>} : vector<4x128xbf16>, vector<128x512xbf16>, vector<4x512xf32> -> vector<4x512xf32>
    %118 = arith.addf %117, %115 : vector<4x512xf32>
    %119 = vector.extract_strided_slice %118 {offsets = [0, 0], sizes = [4, 128], strides = [1, 1]} : vector<4x512xf32> to vector<4x128xf32>
    %120 = arith.negf %119 : vector<4x128xf32>
    %121 = math.exp %120 : vector<4x128xf32>
    %cst_38 = arith.constant 1.000000e+00 : f32
    %122 = vector.broadcast %cst_38 : f32 to vector<4x128xf32>
    %123 = arith.addf %122, %121 : vector<4x128xf32>
    %124 = arith.divf %122, %123 : vector<4x128xf32>
    %125 = vector.extract_strided_slice %118 {offsets = [0, 128], sizes = [4, 128], strides = [1, 1]} : vector<4x512xf32> to vector<4x128xf32>
    %126 = arith.negf %125 : vector<4x128xf32>
    %127 = math.exp %126 : vector<4x128xf32>
    %cst_39 = arith.constant 1.000000e+00 : f32
    %128 = vector.broadcast %cst_39 : f32 to vector<4x128xf32>
    %129 = arith.addf %128, %127 : vector<4x128xf32>
    %130 = arith.divf %128, %129 : vector<4x128xf32>
    %131 = vector.extract_strided_slice %118 {offsets = [0, 256], sizes = [4, 128], strides = [1, 1]} : vector<4x512xf32> to vector<4x128xf32>
    %132 = math.tanh %131 : vector<4x128xf32>
    %133 = vector.extract_strided_slice %118 {offsets = [0, 384], sizes = [4, 128], strides = [1, 1]} : vector<4x512xf32> to vector<4x128xf32>
    %134 = arith.negf %133 : vector<4x128xf32>
    %135 = math.exp %134 : vector<4x128xf32>
    %cst_40 = arith.constant 1.000000e+00 : f32
    %136 = vector.broadcast %cst_40 : f32 to vector<4x128xf32>
    %137 = arith.addf %136, %135 : vector<4x128xf32>
    %138 = arith.divf %136, %137 : vector<4x128xf32>
    %139 = arith.mulf %130, %108 : vector<4x128xf32>
    %140 = arith.mulf %124, %132 : vector<4x128xf32>
    %141 = arith.addf %139, %140 : vector<4x128xf32>
    %142 = math.tanh %141 : vector<4x128xf32>
    %143 = arith.mulf %138, %142 : vector<4x128xf32>
    %144 = vector.extract_strided_slice %143 {offsets = [0, 0], sizes = [4, 64], strides = [1, 1]} : vector<4x128xf32> to vector<4x64xf32>
    %145 = vector.extract_strided_slice %143 {offsets = [0, 64], sizes = [4, 64], strides = [1, 1]} : vector<4x128xf32> to vector<4x64xf32>
    %c16 = arith.constant 16 : index
    %c0_41 = arith.constant 0 : index
    %146 = vector.load %arg12[%c16, %c0_41] : memref<48x512xf32, #tpu.memory_space<vmem>>, vector<4x512xf32>
    %c28 = arith.constant 28 : index
    %c0_42 = arith.constant 0 : index
    %147 = vector.load %arg13[%c28, %c0_42] : memref<48x512xf32, #tpu.memory_space<vmem>>, vector<4x512xf32>
    %148 = arith.addf %146, %147 : vector<4x512xf32>
    %149 = arith.truncf %143 : vector<4x128xf32> to vector<4x128xbf16>
    %cst_43 = arith.constant dense<0.000000e+00> : vector<4x512xf32>
    %150 = tpu.matmul %149, %4, %cst_43 {dimension_numbers = #tpu.dot_dimension_numbers<[1], [0], [0], [1], [0, 0, 1, 1], [], []>} : vector<4x128xbf16>, vector<128x512xbf16>, vector<4x512xf32> -> vector<4x512xf32>
    %151 = arith.addf %150, %148 : vector<4x512xf32>
    %152 = vector.extract_strided_slice %151 {offsets = [0, 0], sizes = [4, 128], strides = [1, 1]} : vector<4x512xf32> to vector<4x128xf32>
    %153 = arith.negf %152 : vector<4x128xf32>
    %154 = math.exp %153 : vector<4x128xf32>
    %cst_44 = arith.constant 1.000000e+00 : f32
    %155 = vector.broadcast %cst_44 : f32 to vector<4x128xf32>
    %156 = arith.addf %155, %154 : vector<4x128xf32>
    %157 = arith.divf %155, %156 : vector<4x128xf32>
    %158 = vector.extract_strided_slice %151 {offsets = [0, 128], sizes = [4, 128], strides = [1, 1]} : vector<4x512xf32> to vector<4x128xf32>
    %159 = arith.negf %158 : vector<4x128xf32>
    %160 = math.exp %159 : vector<4x128xf32>
    %cst_45 = arith.constant 1.000000e+00 : f32
    %161 = vector.broadcast %cst_45 : f32 to vector<4x128xf32>
    %162 = arith.addf %161, %160 : vector<4x128xf32>
    %163 = arith.divf %161, %162 : vector<4x128xf32>
    %164 = vector.extract_strided_slice %151 {offsets = [0, 256], sizes = [4, 128], strides = [1, 1]} : vector<4x512xf32> to vector<4x128xf32>
    %165 = math.tanh %164 : vector<4x128xf32>
    %166 = vector.extract_strided_slice %151 {offsets = [0, 384], sizes = [4, 128], strides = [1, 1]} : vector<4x512xf32> to vector<4x128xf32>
    %167 = arith.negf %166 : vector<4x128xf32>
    %168 = math.exp %167 : vector<4x128xf32>
    %cst_46 = arith.constant 1.000000e+00 : f32
    %169 = vector.broadcast %cst_46 : f32 to vector<4x128xf32>
    %170 = arith.addf %169, %168 : vector<4x128xf32>
    %171 = arith.divf %169, %170 : vector<4x128xf32>
    %172 = arith.mulf %163, %141 : vector<4x128xf32>
    %173 = arith.mulf %157, %165 : vector<4x128xf32>
    %174 = arith.addf %172, %173 : vector<4x128xf32>
    %175 = math.tanh %174 : vector<4x128xf32>
    %176 = arith.mulf %171, %175 : vector<4x128xf32>
    %177 = vector.extract_strided_slice %176 {offsets = [0, 0], sizes = [4, 64], strides = [1, 1]} : vector<4x128xf32> to vector<4x64xf32>
    %178 = vector.extract_strided_slice %176 {offsets = [0, 64], sizes = [4, 64], strides = [1, 1]} : vector<4x128xf32> to vector<4x64xf32>
    %c20 = arith.constant 20 : index
    %c0_47 = arith.constant 0 : index
    %179 = vector.load %arg12[%c20, %c0_47] : memref<48x512xf32, #tpu.memory_space<vmem>>, vector<4x512xf32>
    %c24 = arith.constant 24 : index
    %c0_48 = arith.constant 0 : index
    %180 = vector.load %arg13[%c24, %c0_48] : memref<48x512xf32, #tpu.memory_space<vmem>>, vector<4x512xf32>
    %181 = arith.addf %179, %180 : vector<4x512xf32>
    %182 = arith.truncf %176 : vector<4x128xf32> to vector<4x128xbf16>
    %cst_49 = arith.constant dense<0.000000e+00> : vector<4x512xf32>
    %183 = tpu.matmul %182, %4, %cst_49 {dimension_numbers = #tpu.dot_dimension_numbers<[1], [0], [0], [1], [0, 0, 1, 1], [], []>} : vector<4x128xbf16>, vector<128x512xbf16>, vector<4x512xf32> -> vector<4x512xf32>
    %184 = arith.addf %183, %181 : vector<4x512xf32>
    %185 = vector.extract_strided_slice %184 {offsets = [0, 0], sizes = [4, 128], strides = [1, 1]} : vector<4x512xf32> to vector<4x128xf32>
    %186 = arith.negf %185 : vector<4x128xf32>
    %187 = math.exp %186 : vector<4x128xf32>
    %cst_50 = arith.constant 1.000000e+00 : f32
    %188 = vector.broadcast %cst_50 : f32 to vector<4x128xf32>
    %189 = arith.addf %188, %187 : vector<4x128xf32>
    %190 = arith.divf %188, %189 : vector<4x128xf32>
    %191 = vector.extract_strided_slice %184 {offsets = [0, 128], sizes = [4, 128], strides = [1, 1]} : vector<4x512xf32> to vector<4x128xf32>
    %192 = arith.negf %191 : vector<4x128xf32>
    %193 = math.exp %192 : vector<4x128xf32>
    %cst_51 = arith.constant 1.000000e+00 : f32
    %194 = vector.broadcast %cst_51 : f32 to vector<4x128xf32>
    %195 = arith.addf %194, %193 : vector<4x128xf32>
    %196 = arith.divf %194, %195 : vector<4x128xf32>
    %197 = vector.extract_strided_slice %184 {offsets = [0, 256], sizes = [4, 128], strides = [1, 1]} : vector<4x512xf32> to vector<4x128xf32>
    %198 = math.tanh %197 : vector<4x128xf32>
    %199 = vector.extract_strided_slice %184 {offsets = [0, 384], sizes = [4, 128], strides = [1, 1]} : vector<4x512xf32> to vector<4x128xf32>
    %200 = arith.negf %199 : vector<4x128xf32>
    %201 = math.exp %200 : vector<4x128xf32>
    %cst_52 = arith.constant 1.000000e+00 : f32
    %202 = vector.broadcast %cst_52 : f32 to vector<4x128xf32>
    %203 = arith.addf %202, %201 : vector<4x128xf32>
    %204 = arith.divf %202, %203 : vector<4x128xf32>
    %205 = arith.mulf %196, %174 : vector<4x128xf32>
    %206 = arith.mulf %190, %198 : vector<4x128xf32>
    %207 = arith.addf %205, %206 : vector<4x128xf32>
    %208 = math.tanh %207 : vector<4x128xf32>
    %209 = arith.mulf %204, %208 : vector<4x128xf32>
    %210 = vector.extract_strided_slice %209 {offsets = [0, 0], sizes = [4, 64], strides = [1, 1]} : vector<4x128xf32> to vector<4x64xf32>
    %211 = vector.extract_strided_slice %209 {offsets = [0, 64], sizes = [4, 64], strides = [1, 1]} : vector<4x128xf32> to vector<4x64xf32>
    %c24_53 = arith.constant 24 : index
    %c0_54 = arith.constant 0 : index
    %212 = vector.load %arg12[%c24_53, %c0_54] : memref<48x512xf32, #tpu.memory_space<vmem>>, vector<4x512xf32>
    %c20_55 = arith.constant 20 : index
    %c0_56 = arith.constant 0 : index
    %213 = vector.load %arg13[%c20_55, %c0_56] : memref<48x512xf32, #tpu.memory_space<vmem>>, vector<4x512xf32>
    %214 = arith.addf %212, %213 : vector<4x512xf32>
    %215 = arith.truncf %209 : vector<4x128xf32> to vector<4x128xbf16>
    %cst_57 = arith.constant dense<0.000000e+00> : vector<4x512xf32>
    %216 = tpu.matmul %215, %4, %cst_57 {dimension_numbers = #tpu.dot_dimension_numbers<[1], [0], [0], [1], [0, 0, 1, 1], [], []>} : vector<4x128xbf16>, vector<128x512xbf16>, vector<4x512xf32> -> vector<4x512xf32>
    %217 = arith.addf %216, %214 : vector<4x512xf32>
    %218 = vector.extract_strided_slice %217 {offsets = [0, 0], sizes = [4, 128], strides = [1, 1]} : vector<4x512xf32> to vector<4x128xf32>
    %219 = arith.negf %218 : vector<4x128xf32>
    %220 = math.exp %219 : vector<4x128xf32>
    %cst_58 = arith.constant 1.000000e+00 : f32
    %221 = vector.broadcast %cst_58 : f32 to vector<4x128xf32>
    %222 = arith.addf %221, %220 : vector<4x128xf32>
    %223 = arith.divf %221, %222 : vector<4x128xf32>
    %224 = vector.extract_strided_slice %217 {offsets = [0, 128], sizes = [4, 128], strides = [1, 1]} : vector<4x512xf32> to vector<4x128xf32>
    %225 = arith.negf %224 : vector<4x128xf32>
    %226 = math.exp %225 : vector<4x128xf32>
    %cst_59 = arith.constant 1.000000e+00 : f32
    %227 = vector.broadcast %cst_59 : f32 to vector<4x128xf32>
    %228 = arith.addf %227, %226 : vector<4x128xf32>
    %229 = arith.divf %227, %228 : vector<4x128xf32>
    %230 = vector.extract_strided_slice %217 {offsets = [0, 256], sizes = [4, 128], strides = [1, 1]} : vector<4x512xf32> to vector<4x128xf32>
    %231 = math.tanh %230 : vector<4x128xf32>
    %232 = vector.extract_strided_slice %217 {offsets = [0, 384], sizes = [4, 128], strides = [1, 1]} : vector<4x512xf32> to vector<4x128xf32>
    %233 = arith.negf %232 : vector<4x128xf32>
    %234 = math.exp %233 : vector<4x128xf32>
    %cst_60 = arith.constant 1.000000e+00 : f32
    %235 = vector.broadcast %cst_60 : f32 to vector<4x128xf32>
    %236 = arith.addf %235, %234 : vector<4x128xf32>
    %237 = arith.divf %235, %236 : vector<4x128xf32>
    %238 = arith.mulf %229, %207 : vector<4x128xf32>
    %239 = arith.mulf %223, %231 : vector<4x128xf32>
    %240 = arith.addf %238, %239 : vector<4x128xf32>
    %241 = math.tanh %240 : vector<4x128xf32>
    %242 = arith.mulf %237, %241 : vector<4x128xf32>
    %243 = vector.extract_strided_slice %242 {offsets = [0, 0], sizes = [4, 64], strides = [1, 1]} : vector<4x128xf32> to vector<4x64xf32>
    %244 = vector.extract_strided_slice %242 {offsets = [0, 64], sizes = [4, 64], strides = [1, 1]} : vector<4x128xf32> to vector<4x64xf32>
    %c28_61 = arith.constant 28 : index
    %c0_62 = arith.constant 0 : index
    %245 = vector.load %arg12[%c28_61, %c0_62] : memref<48x512xf32, #tpu.memory_space<vmem>>, vector<4x512xf32>
    %c16_63 = arith.constant 16 : index
    %c0_64 = arith.constant 0 : index
    %246 = vector.load %arg13[%c16_63, %c0_64] : memref<48x512xf32, #tpu.memory_space<vmem>>, vector<4x512xf32>
    %247 = arith.addf %245, %246 : vector<4x512xf32>
    %248 = arith.truncf %242 : vector<4x128xf32> to vector<4x128xbf16>
    %cst_65 = arith.constant dense<0.000000e+00> : vector<4x512xf32>
    %249 = tpu.matmul %248, %4, %cst_65 {dimension_numbers = #tpu.dot_dimension_numbers<[1], [0], [0], [1], [0, 0, 1, 1], [], []>} : vector<4x128xbf16>, vector<128x512xbf16>, vector<4x512xf32> -> vector<4x512xf32>
    %250 = arith.addf %249, %247 : vector<4x512xf32>
    %251 = vector.extract_strided_slice %250 {offsets = [0, 0], sizes = [4, 128], strides = [1, 1]} : vector<4x512xf32> to vector<4x128xf32>
    %252 = arith.negf %251 : vector<4x128xf32>
    %253 = math.exp %252 : vector<4x128xf32>
    %cst_66 = arith.constant 1.000000e+00 : f32
    %254 = vector.broadcast %cst_66 : f32 to vector<4x128xf32>
    %255 = arith.addf %254, %253 : vector<4x128xf32>
    %256 = arith.divf %254, %255 : vector<4x128xf32>
    %257 = vector.extract_strided_slice %250 {offsets = [0, 128], sizes = [4, 128], strides = [1, 1]} : vector<4x512xf32> to vector<4x128xf32>
    %258 = arith.negf %257 : vector<4x128xf32>
    %259 = math.exp %258 : vector<4x128xf32>
    %cst_67 = arith.constant 1.000000e+00 : f32
    %260 = vector.broadcast %cst_67 : f32 to vector<4x128xf32>
    %261 = arith.addf %260, %259 : vector<4x128xf32>
    %262 = arith.divf %260, %261 : vector<4x128xf32>
    %263 = vector.extract_strided_slice %250 {offsets = [0, 256], sizes = [4, 128], strides = [1, 1]} : vector<4x512xf32> to vector<4x128xf32>
    %264 = math.tanh %263 : vector<4x128xf32>
    %265 = vector.extract_strided_slice %250 {offsets = [0, 384], sizes = [4, 128], strides = [1, 1]} : vector<4x512xf32> to vector<4x128xf32>
    %266 = arith.negf %265 : vector<4x128xf32>
    %267 = math.exp %266 : vector<4x128xf32>
    %cst_68 = arith.constant 1.000000e+00 : f32
    %268 = vector.broadcast %cst_68 : f32 to vector<4x128xf32>
    %269 = arith.addf %268, %267 : vector<4x128xf32>
    %270 = arith.divf %268, %269 : vector<4x128xf32>
    %271 = arith.mulf %262, %240 : vector<4x128xf32>
    %272 = arith.mulf %256, %264 : vector<4x128xf32>
    %273 = arith.addf %271, %272 : vector<4x128xf32>
    %274 = math.tanh %273 : vector<4x128xf32>
    %275 = arith.mulf %270, %274 : vector<4x128xf32>
    %276 = vector.extract_strided_slice %275 {offsets = [0, 0], sizes = [4, 64], strides = [1, 1]} : vector<4x128xf32> to vector<4x64xf32>
    %277 = vector.extract_strided_slice %275 {offsets = [0, 64], sizes = [4, 64], strides = [1, 1]} : vector<4x128xf32> to vector<4x64xf32>
    %c32_69 = arith.constant 32 : index
    %c0_70 = arith.constant 0 : index
    %278 = vector.load %arg12[%c32_69, %c0_70] : memref<48x512xf32, #tpu.memory_space<vmem>>, vector<4x512xf32>
    %c12_71 = arith.constant 12 : index
    %c0_72 = arith.constant 0 : index
    %279 = vector.load %arg13[%c12_71, %c0_72] : memref<48x512xf32, #tpu.memory_space<vmem>>, vector<4x512xf32>
    %280 = arith.addf %278, %279 : vector<4x512xf32>
    %281 = arith.truncf %275 : vector<4x128xf32> to vector<4x128xbf16>
    %cst_73 = arith.constant dense<0.000000e+00> : vector<4x512xf32>
    %282 = tpu.matmul %281, %4, %cst_73 {dimension_numbers = #tpu.dot_dimension_numbers<[1], [0], [0], [1], [0, 0, 1, 1], [], []>} : vector<4x128xbf16>, vector<128x512xbf16>, vector<4x512xf32> -> vector<4x512xf32>
    %283 = arith.addf %282, %280 : vector<4x512xf32>
    %284 = vector.extract_strided_slice %283 {offsets = [0, 0], sizes = [4, 128], strides = [1, 1]} : vector<4x512xf32> to vector<4x128xf32>
    %285 = arith.negf %284 : vector<4x128xf32>
    %286 = math.exp %285 : vector<4x128xf32>
    %cst_74 = arith.constant 1.000000e+00 : f32
    %287 = vector.broadcast %cst_74 : f32 to vector<4x128xf32>
    %288 = arith.addf %287, %286 : vector<4x128xf32>
    %289 = arith.divf %287, %288 : vector<4x128xf32>
    %290 = vector.extract_strided_slice %283 {offsets = [0, 128], sizes = [4, 128], strides = [1, 1]} : vector<4x512xf32> to vector<4x128xf32>
    %291 = arith.negf %290 : vector<4x128xf32>
    %292 = math.exp %291 : vector<4x128xf32>
    %cst_75 = arith.constant 1.000000e+00 : f32
    %293 = vector.broadcast %cst_75 : f32 to vector<4x128xf32>
    %294 = arith.addf %293, %292 : vector<4x128xf32>
    %295 = arith.divf %293, %294 : vector<4x128xf32>
    %296 = vector.extract_strided_slice %283 {offsets = [0, 256], sizes = [4, 128], strides = [1, 1]} : vector<4x512xf32> to vector<4x128xf32>
    %297 = math.tanh %296 : vector<4x128xf32>
    %298 = vector.extract_strided_slice %283 {offsets = [0, 384], sizes = [4, 128], strides = [1, 1]} : vector<4x512xf32> to vector<4x128xf32>
    %299 = arith.negf %298 : vector<4x128xf32>
    %300 = math.exp %299 : vector<4x128xf32>
    %cst_76 = arith.constant 1.000000e+00 : f32
    %301 = vector.broadcast %cst_76 : f32 to vector<4x128xf32>
    %302 = arith.addf %301, %300 : vector<4x128xf32>
    %303 = arith.divf %301, %302 : vector<4x128xf32>
    %304 = arith.mulf %295, %273 : vector<4x128xf32>
    %305 = arith.mulf %289, %297 : vector<4x128xf32>
    %306 = arith.addf %304, %305 : vector<4x128xf32>
    %307 = math.tanh %306 : vector<4x128xf32>
    %308 = arith.mulf %303, %307 : vector<4x128xf32>
    %309 = vector.extract_strided_slice %308 {offsets = [0, 0], sizes = [4, 64], strides = [1, 1]} : vector<4x128xf32> to vector<4x64xf32>
    %310 = vector.extract_strided_slice %308 {offsets = [0, 64], sizes = [4, 64], strides = [1, 1]} : vector<4x128xf32> to vector<4x64xf32>
    %c36_77 = arith.constant 36 : index
    %c0_78 = arith.constant 0 : index
    %311 = vector.load %arg12[%c36_77, %c0_78] : memref<48x512xf32, #tpu.memory_space<vmem>>, vector<4x512xf32>
    %c8_79 = arith.constant 8 : index
    %c0_80 = arith.constant 0 : index
    %312 = vector.load %arg13[%c8_79, %c0_80] : memref<48x512xf32, #tpu.memory_space<vmem>>, vector<4x512xf32>
    %313 = arith.addf %311, %312 : vector<4x512xf32>
    %314 = arith.truncf %308 : vector<4x128xf32> to vector<4x128xbf16>
    %cst_81 = arith.constant dense<0.000000e+00> : vector<4x512xf32>
    %315 = tpu.matmul %314, %4, %cst_81 {dimension_numbers = #tpu.dot_dimension_numbers<[1], [0], [0], [1], [0, 0, 1, 1], [], []>} : vector<4x128xbf16>, vector<128x512xbf16>, vector<4x512xf32> -> vector<4x512xf32>
    %316 = arith.addf %315, %313 : vector<4x512xf32>
    %317 = vector.extract_strided_slice %316 {offsets = [0, 0], sizes = [4, 128], strides = [1, 1]} : vector<4x512xf32> to vector<4x128xf32>
    %318 = arith.negf %317 : vector<4x128xf32>
    %319 = math.exp %318 : vector<4x128xf32>
    %cst_82 = arith.constant 1.000000e+00 : f32
    %320 = vector.broadcast %cst_82 : f32 to vector<4x128xf32>
    %321 = arith.addf %320, %319 : vector<4x128xf32>
    %322 = arith.divf %320, %321 : vector<4x128xf32>
    %323 = vector.extract_strided_slice %316 {offsets = [0, 128], sizes = [4, 128], strides = [1, 1]} : vector<4x512xf32> to vector<4x128xf32>
    %324 = arith.negf %323 : vector<4x128xf32>
    %325 = math.exp %324 : vector<4x128xf32>
    %cst_83 = arith.constant 1.000000e+00 : f32
    %326 = vector.broadcast %cst_83 : f32 to vector<4x128xf32>
    %327 = arith.addf %326, %325 : vector<4x128xf32>
    %328 = arith.divf %326, %327 : vector<4x128xf32>
    %329 = vector.extract_strided_slice %316 {offsets = [0, 256], sizes = [4, 128], strides = [1, 1]} : vector<4x512xf32> to vector<4x128xf32>
    %330 = math.tanh %329 : vector<4x128xf32>
    %331 = vector.extract_strided_slice %316 {offsets = [0, 384], sizes = [4, 128], strides = [1, 1]} : vector<4x512xf32> to vector<4x128xf32>
    %332 = arith.negf %331 : vector<4x128xf32>
    %333 = math.exp %332 : vector<4x128xf32>
    %cst_84 = arith.constant 1.000000e+00 : f32
    %334 = vector.broadcast %cst_84 : f32 to vector<4x128xf32>
    %335 = arith.addf %334, %333 : vector<4x128xf32>
    %336 = arith.divf %334, %335 : vector<4x128xf32>
    %337 = arith.mulf %328, %306 : vector<4x128xf32>
    %338 = arith.mulf %322, %330 : vector<4x128xf32>
    %339 = arith.addf %337, %338 : vector<4x128xf32>
    %340 = math.tanh %339 : vector<4x128xf32>
    %341 = arith.mulf %336, %340 : vector<4x128xf32>
    %342 = vector.extract_strided_slice %341 {offsets = [0, 0], sizes = [4, 64], strides = [1, 1]} : vector<4x128xf32> to vector<4x64xf32>
    %343 = vector.extract_strided_slice %341 {offsets = [0, 64], sizes = [4, 64], strides = [1, 1]} : vector<4x128xf32> to vector<4x64xf32>
    %c40_85 = arith.constant 40 : index
    %c0_86 = arith.constant 0 : index
    %344 = vector.load %arg12[%c40_85, %c0_86] : memref<48x512xf32, #tpu.memory_space<vmem>>, vector<4x512xf32>
    %c4_87 = arith.constant 4 : index
    %c0_88 = arith.constant 0 : index
    %345 = vector.load %arg13[%c4_87, %c0_88] : memref<48x512xf32, #tpu.memory_space<vmem>>, vector<4x512xf32>
    %346 = arith.addf %344, %345 : vector<4x512xf32>
    %347 = arith.truncf %341 : vector<4x128xf32> to vector<4x128xbf16>
    %cst_89 = arith.constant dense<0.000000e+00> : vector<4x512xf32>
    %348 = tpu.matmul %347, %4, %cst_89 {dimension_numbers = #tpu.dot_dimension_numbers<[1], [0], [0], [1], [0, 0, 1, 1], [], []>} : vector<4x128xbf16>, vector<128x512xbf16>, vector<4x512xf32> -> vector<4x512xf32>
    %349 = arith.addf %348, %346 : vector<4x512xf32>
    %350 = vector.extract_strided_slice %349 {offsets = [0, 0], sizes = [4, 128], strides = [1, 1]} : vector<4x512xf32> to vector<4x128xf32>
    %351 = arith.negf %350 : vector<4x128xf32>
    %352 = math.exp %351 : vector<4x128xf32>
    %cst_90 = arith.constant 1.000000e+00 : f32
    %353 = vector.broadcast %cst_90 : f32 to vector<4x128xf32>
    %354 = arith.addf %353, %352 : vector<4x128xf32>
    %355 = arith.divf %353, %354 : vector<4x128xf32>
    %356 = vector.extract_strided_slice %349 {offsets = [0, 128], sizes = [4, 128], strides = [1, 1]} : vector<4x512xf32> to vector<4x128xf32>
    %357 = arith.negf %356 : vector<4x128xf32>
    %358 = math.exp %357 : vector<4x128xf32>
    %cst_91 = arith.constant 1.000000e+00 : f32
    %359 = vector.broadcast %cst_91 : f32 to vector<4x128xf32>
    %360 = arith.addf %359, %358 : vector<4x128xf32>
    %361 = arith.divf %359, %360 : vector<4x128xf32>
    %362 = vector.extract_strided_slice %349 {offsets = [0, 256], sizes = [4, 128], strides = [1, 1]} : vector<4x512xf32> to vector<4x128xf32>
    %363 = math.tanh %362 : vector<4x128xf32>
    %364 = vector.extract_strided_slice %349 {offsets = [0, 384], sizes = [4, 128], strides = [1, 1]} : vector<4x512xf32> to vector<4x128xf32>
    %365 = arith.negf %364 : vector<4x128xf32>
    %366 = math.exp %365 : vector<4x128xf32>
    %cst_92 = arith.constant 1.000000e+00 : f32
    %367 = vector.broadcast %cst_92 : f32 to vector<4x128xf32>
    %368 = arith.addf %367, %366 : vector<4x128xf32>
    %369 = arith.divf %367, %368 : vector<4x128xf32>
    %370 = arith.mulf %361, %339 : vector<4x128xf32>
    %371 = arith.mulf %355, %363 : vector<4x128xf32>
    %372 = arith.addf %370, %371 : vector<4x128xf32>
    %373 = math.tanh %372 : vector<4x128xf32>
    %374 = arith.mulf %369, %373 : vector<4x128xf32>
    %375 = vector.extract_strided_slice %374 {offsets = [0, 0], sizes = [4, 64], strides = [1, 1]} : vector<4x128xf32> to vector<4x64xf32>
    %376 = vector.extract_strided_slice %374 {offsets = [0, 64], sizes = [4, 64], strides = [1, 1]} : vector<4x128xf32> to vector<4x64xf32>
    %c44_93 = arith.constant 44 : index
    %c0_94 = arith.constant 0 : index
    %377 = vector.load %arg12[%c44_93, %c0_94] : memref<48x512xf32, #tpu.memory_space<vmem>>, vector<4x512xf32>
    %c0_95 = arith.constant 0 : index
    %c0_96 = arith.constant 0 : index
    %378 = vector.load %arg13[%c0_95, %c0_96] : memref<48x512xf32, #tpu.memory_space<vmem>>, vector<4x512xf32>
    %379 = arith.addf %377, %378 : vector<4x512xf32>
    %380 = arith.truncf %374 : vector<4x128xf32> to vector<4x128xbf16>
    %cst_97 = arith.constant dense<0.000000e+00> : vector<4x512xf32>
    %381 = tpu.matmul %380, %4, %cst_97 {dimension_numbers = #tpu.dot_dimension_numbers<[1], [0], [0], [1], [0, 0, 1, 1], [], []>} : vector<4x128xbf16>, vector<128x512xbf16>, vector<4x512xf32> -> vector<4x512xf32>
    %382 = arith.addf %381, %379 : vector<4x512xf32>
    %383 = vector.extract_strided_slice %382 {offsets = [0, 0], sizes = [4, 128], strides = [1, 1]} : vector<4x512xf32> to vector<4x128xf32>
    %384 = arith.negf %383 : vector<4x128xf32>
    %385 = math.exp %384 : vector<4x128xf32>
    %cst_98 = arith.constant 1.000000e+00 : f32
    %386 = vector.broadcast %cst_98 : f32 to vector<4x128xf32>
    %387 = arith.addf %386, %385 : vector<4x128xf32>
    %388 = arith.divf %386, %387 : vector<4x128xf32>
    %389 = vector.extract_strided_slice %382 {offsets = [0, 128], sizes = [4, 128], strides = [1, 1]} : vector<4x512xf32> to vector<4x128xf32>
    %390 = arith.negf %389 : vector<4x128xf32>
    %391 = math.exp %390 : vector<4x128xf32>
    %cst_99 = arith.constant 1.000000e+00 : f32
    %392 = vector.broadcast %cst_99 : f32 to vector<4x128xf32>
    %393 = arith.addf %392, %391 : vector<4x128xf32>
    %394 = arith.divf %392, %393 : vector<4x128xf32>
    %395 = vector.extract_strided_slice %382 {offsets = [0, 256], sizes = [4, 128], strides = [1, 1]} : vector<4x512xf32> to vector<4x128xf32>
    %396 = math.tanh %395 : vector<4x128xf32>
    %397 = vector.extract_strided_slice %382 {offsets = [0, 384], sizes = [4, 128], strides = [1, 1]} : vector<4x512xf32> to vector<4x128xf32>
    %398 = arith.negf %397 : vector<4x128xf32>
    %399 = math.exp %398 : vector<4x128xf32>
    %cst_100 = arith.constant 1.000000e+00 : f32
    %400 = vector.broadcast %cst_100 : f32 to vector<4x128xf32>
    %401 = arith.addf %400, %399 : vector<4x128xf32>
    %402 = arith.divf %400, %401 : vector<4x128xf32>
    %403 = arith.mulf %394, %372 : vector<4x128xf32>
    %404 = arith.mulf %388, %396 : vector<4x128xf32>
    %405 = arith.addf %403, %404 : vector<4x128xf32>
    %406 = math.tanh %405 : vector<4x128xf32>
    %407 = arith.mulf %402, %406 : vector<4x128xf32>
    %408 = vector.extract_strided_slice %407 {offsets = [0, 0], sizes = [4, 64], strides = [1, 1]} : vector<4x128xf32> to vector<4x64xf32>
    %409 = vector.extract_strided_slice %407 {offsets = [0, 64], sizes = [4, 64], strides = [1, 1]} : vector<4x128xf32> to vector<4x64xf32>
    %410 = tpu.concatenate %45, %78, %111, %144, %177, %210, %243, %276, %309, %342, %375, %408 in 0 : vector<4x64xf32>, vector<4x64xf32>, vector<4x64xf32>, vector<4x64xf32>, vector<4x64xf32>, vector<4x64xf32>, vector<4x64xf32>, vector<4x64xf32>, vector<4x64xf32>, vector<4x64xf32>, vector<4x64xf32>, vector<4x64xf32> -> vector<48x64xf32>
    %411 = tpu.concatenate %409, %376, %343, %310, %277, %244, %211, %178, %145, %112, %79, %46 in 0 : vector<4x64xf32>, vector<4x64xf32>, vector<4x64xf32>, vector<4x64xf32>, vector<4x64xf32>, vector<4x64xf32>, vector<4x64xf32>, vector<4x64xf32>, vector<4x64xf32>, vector<4x64xf32>, vector<4x64xf32>, vector<4x64xf32> -> vector<48x64xf32>
    %412 = tpu.concatenate %410, %411 in 1 : vector<48x64xf32>, vector<48x64xf32> -> vector<48x128xf32>
    %413 = arith.truncf %412 : vector<48x128xf32> to vector<48x128xbf16>
    %c0_101 = arith.constant 0 : index
    %c0_102 = arith.constant 0 : index
    %414 = vector.load %arg5[%c0_101, %c0_102] : memref<128x512xbf16, #tpu.memory_space<vmem>>, vector<128x512xbf16>
    %c0_103 = arith.constant 0 : index
    %c0_104 = arith.constant 0 : index
    %415 = vector.load %arg6[%c0_103, %c0_104] : memref<128x512xbf16, #tpu.memory_space<vmem>>, vector<128x512xbf16>
    %c0_105 = arith.constant 0 : index
    %c0_106 = arith.constant 0 : index
    %416 = vector.load %arg7[%c0_105, %c0_106] : memref<128x512xbf16, #tpu.memory_space<vmem>>, vector<128x512xbf16>
    %c0_107 = arith.constant 0 : index
    %c0_108 = arith.constant 0 : index
    %417 = vector.load %arg8[%c0_107, %c0_108] : memref<1x512xf32, #tpu.memory_space<vmem>>, vector<1x512xf32>
    %cst_109 = arith.constant dense<0.000000e+00> : vector<48x512xf32>
    %418 = tpu.matmul %413, %414, %cst_109 {dimension_numbers = #tpu.dot_dimension_numbers<[1], [0], [0], [1], [0, 0, 1, 1], [], []>} : vector<48x128xbf16>, vector<128x512xbf16>, vector<48x512xf32> -> vector<48x512xf32>
    %419 = vector.broadcast %417 : vector<1x512xf32> to vector<48x512xf32>
    %420 = arith.addf %418, %419 : vector<48x512xf32>
    %c0_110 = arith.constant 0 : index
    %c0_111 = arith.constant 0 : index
    %421 = vector.load %arg12[%c0_110, %c0_111] : memref<48x512xf32, #tpu.memory_space<vmem>>, vector<48x512xf32>
    tpu.vector_store %arg12[%c0_110, %c0_111], %420 {strides = array<i32>} : memref<48x512xf32, #tpu.memory_space<vmem>>, vector<48x512xf32>,
    %cst_112 = arith.constant dense<0.000000e+00> : vector<48x512xf32>
    %422 = tpu.matmul %413, %415, %cst_112 {dimension_numbers = #tpu.dot_dimension_numbers<[1], [0], [0], [1], [0, 0, 1, 1], [], []>} : vector<48x128xbf16>, vector<128x512xbf16>, vector<48x512xf32> -> vector<48x512xf32>
    %c0_113 = arith.constant 0 : index
    %c0_114 = arith.constant 0 : index
    %423 = vector.load %arg13[%c0_113, %c0_114] : memref<48x512xf32, #tpu.memory_space<vmem>>, vector<48x512xf32>
    tpu.vector_store %arg13[%c0_113, %c0_114], %422 {strides = array<i32>} : memref<48x512xf32, #tpu.memory_space<vmem>>, vector<48x512xf32>,
    %cst_115 = arith.constant 0.000000e+00 : f32
    %424 = vector.broadcast %cst_115 : f32 to vector<4x128xf32>
    %cst_116 = arith.constant 0.000000e+00 : f32
    %425 = vector.broadcast %cst_116 : f32 to vector<4x128xf32>
    %c0_117 = arith.constant 0 : index
    %c0_118 = arith.constant 0 : index
    %426 = vector.load %arg12[%c0_117, %c0_118] : memref<48x512xf32, #tpu.memory_space<vmem>>, vector<4x512xf32>
    %c44_119 = arith.constant 44 : index
    %c0_120 = arith.constant 0 : index
    %427 = vector.load %arg13[%c44_119, %c0_120] : memref<48x512xf32, #tpu.memory_space<vmem>>, vector<4x512xf32>
    %428 = arith.addf %426, %427 : vector<4x512xf32>
    %429 = arith.truncf %424 : vector<4x128xf32> to vector<4x128xbf16>
    %cst_121 = arith.constant dense<0.000000e+00> : vector<4x512xf32>
    %430 = tpu.matmul %429, %416, %cst_121 {dimension_numbers = #tpu.dot_dimension_numbers<[1], [0], [0], [1], [0, 0, 1, 1], [], []>} : vector<4x128xbf16>, vector<128x512xbf16>, vector<4x512xf32> -> vector<4x512xf32>
    %431 = arith.addf %430, %428 : vector<4x512xf32>
    %432 = vector.extract_strided_slice %431 {offsets = [0, 0], sizes = [4, 128], strides = [1, 1]} : vector<4x512xf32> to vector<4x128xf32>
    %433 = arith.negf %432 : vector<4x128xf32>
    %434 = math.exp %433 : vector<4x128xf32>
    %cst_122 = arith.constant 1.000000e+00 : f32
    %435 = vector.broadcast %cst_122 : f32 to vector<4x128xf32>
    %436 = arith.addf %435, %434 : vector<4x128xf32>
    %437 = arith.divf %435, %436 : vector<4x128xf32>
    %438 = vector.extract_strided_slice %431 {offsets = [0, 128], sizes = [4, 128], strides = [1, 1]} : vector<4x512xf32> to vector<4x128xf32>
    %439 = arith.negf %438 : vector<4x128xf32>
    %440 = math.exp %439 : vector<4x128xf32>
    %cst_123 = arith.constant 1.000000e+00 : f32
    %441 = vector.broadcast %cst_123 : f32 to vector<4x128xf32>
    %442 = arith.addf %441, %440 : vector<4x128xf32>
    %443 = arith.divf %441, %442 : vector<4x128xf32>
    %444 = vector.extract_strided_slice %431 {offsets = [0, 256], sizes = [4, 128], strides = [1, 1]} : vector<4x512xf32> to vector<4x128xf32>
    %445 = math.tanh %444 : vector<4x128xf32>
    %446 = vector.extract_strided_slice %431 {offsets = [0, 384], sizes = [4, 128], strides = [1, 1]} : vector<4x512xf32> to vector<4x128xf32>
    %447 = arith.negf %446 : vector<4x128xf32>
    %448 = math.exp %447 : vector<4x128xf32>
    %cst_124 = arith.constant 1.000000e+00 : f32
    %449 = vector.broadcast %cst_124 : f32 to vector<4x128xf32>
    %450 = arith.addf %449, %448 : vector<4x128xf32>
    %451 = arith.divf %449, %450 : vector<4x128xf32>
    %452 = arith.mulf %443, %425 : vector<4x128xf32>
    %453 = arith.mulf %437, %445 : vector<4x128xf32>
    %454 = arith.addf %452, %453 : vector<4x128xf32>
    %455 = math.tanh %454 : vector<4x128xf32>
    %456 = arith.mulf %451, %455 : vector<4x128xf32>
    %457 = vector.extract_strided_slice %456 {offsets = [0, 0], sizes = [4, 64], strides = [1, 1]} : vector<4x128xf32> to vector<4x64xf32>
    %458 = vector.extract_strided_slice %456 {offsets = [0, 64], sizes = [4, 64], strides = [1, 1]} : vector<4x128xf32> to vector<4x64xf32>
    %c4_125 = arith.constant 4 : index
    %c0_126 = arith.constant 0 : index
    %459 = vector.load %arg12[%c4_125, %c0_126] : memref<48x512xf32, #tpu.memory_space<vmem>>, vector<4x512xf32>
    %c40_127 = arith.constant 40 : index
    %c0_128 = arith.constant 0 : index
    %460 = vector.load %arg13[%c40_127, %c0_128] : memref<48x512xf32, #tpu.memory_space<vmem>>, vector<4x512xf32>
    %461 = arith.addf %459, %460 : vector<4x512xf32>
    %462 = arith.truncf %456 : vector<4x128xf32> to vector<4x128xbf16>
    %cst_129 = arith.constant dense<0.000000e+00> : vector<4x512xf32>
    %463 = tpu.matmul %462, %416, %cst_129 {dimension_numbers = #tpu.dot_dimension_numbers<[1], [0], [0], [1], [0, 0, 1, 1], [], []>} : vector<4x128xbf16>, vector<128x512xbf16>, vector<4x512xf32> -> vector<4x512xf32>
    %464 = arith.addf %463, %461 : vector<4x512xf32>
    %465 = vector.extract_strided_slice %464 {offsets = [0, 0], sizes = [4, 128], strides = [1, 1]} : vector<4x512xf32> to vector<4x128xf32>
    %466 = arith.negf %465 : vector<4x128xf32>
    %467 = math.exp %466 : vector<4x128xf32>
    %cst_130 = arith.constant 1.000000e+00 : f32
    %468 = vector.broadcast %cst_130 : f32 to vector<4x128xf32>
    %469 = arith.addf %468, %467 : vector<4x128xf32>
    %470 = arith.divf %468, %469 : vector<4x128xf32>
    %471 = vector.extract_strided_slice %464 {offsets = [0, 128], sizes = [4, 128], strides = [1, 1]} : vector<4x512xf32> to vector<4x128xf32>
    %472 = arith.negf %471 : vector<4x128xf32>
    %473 = math.exp %472 : vector<4x128xf32>
    %cst_131 = arith.constant 1.000000e+00 : f32
    %474 = vector.broadcast %cst_131 : f32 to vector<4x128xf32>
    %475 = arith.addf %474, %473 : vector<4x128xf32>
    %476 = arith.divf %474, %475 : vector<4x128xf32>
    %477 = vector.extract_strided_slice %464 {offsets = [0, 256], sizes = [4, 128], strides = [1, 1]} : vector<4x512xf32> to vector<4x128xf32>
    %478 = math.tanh %477 : vector<4x128xf32>
    %479 = vector.extract_strided_slice %464 {offsets = [0, 384], sizes = [4, 128], strides = [1, 1]} : vector<4x512xf32> to vector<4x128xf32>
    %480 = arith.negf %479 : vector<4x128xf32>
    %481 = math.exp %480 : vector<4x128xf32>
    %cst_132 = arith.constant 1.000000e+00 : f32
    %482 = vector.broadcast %cst_132 : f32 to vector<4x128xf32>
    %483 = arith.addf %482, %481 : vector<4x128xf32>
    %484 = arith.divf %482, %483 : vector<4x128xf32>
    %485 = arith.mulf %476, %454 : vector<4x128xf32>
    %486 = arith.mulf %470, %478 : vector<4x128xf32>
    %487 = arith.addf %485, %486 : vector<4x128xf32>
    %488 = math.tanh %487 : vector<4x128xf32>
    %489 = arith.mulf %484, %488 : vector<4x128xf32>
    %490 = vector.extract_strided_slice %489 {offsets = [0, 0], sizes = [4, 64], strides = [1, 1]} : vector<4x128xf32> to vector<4x64xf32>
    %491 = vector.extract_strided_slice %489 {offsets = [0, 64], sizes = [4, 64], strides = [1, 1]} : vector<4x128xf32> to vector<4x64xf32>
    %c8_133 = arith.constant 8 : index
    %c0_134 = arith.constant 0 : index
    %492 = vector.load %arg12[%c8_133, %c0_134] : memref<48x512xf32, #tpu.memory_space<vmem>>, vector<4x512xf32>
    %c36_135 = arith.constant 36 : index
    %c0_136 = arith.constant 0 : index
    %493 = vector.load %arg13[%c36_135, %c0_136] : memref<48x512xf32, #tpu.memory_space<vmem>>, vector<4x512xf32>
    %494 = arith.addf %492, %493 : vector<4x512xf32>
    %495 = arith.truncf %489 : vector<4x128xf32> to vector<4x128xbf16>
    %cst_137 = arith.constant dense<0.000000e+00> : vector<4x512xf32>
    %496 = tpu.matmul %495, %416, %cst_137 {dimension_numbers = #tpu.dot_dimension_numbers<[1], [0], [0], [1], [0, 0, 1, 1], [], []>} : vector<4x128xbf16>, vector<128x512xbf16>, vector<4x512xf32> -> vector<4x512xf32>
    %497 = arith.addf %496, %494 : vector<4x512xf32>
    %498 = vector.extract_strided_slice %497 {offsets = [0, 0], sizes = [4, 128], strides = [1, 1]} : vector<4x512xf32> to vector<4x128xf32>
    %499 = arith.negf %498 : vector<4x128xf32>
    %500 = math.exp %499 : vector<4x128xf32>
    %cst_138 = arith.constant 1.000000e+00 : f32
    %501 = vector.broadcast %cst_138 : f32 to vector<4x128xf32>
    %502 = arith.addf %501, %500 : vector<4x128xf32>
    %503 = arith.divf %501, %502 : vector<4x128xf32>
    %504 = vector.extract_strided_slice %497 {offsets = [0, 128], sizes = [4, 128], strides = [1, 1]} : vector<4x512xf32> to vector<4x128xf32>
    %505 = arith.negf %504 : vector<4x128xf32>
    %506 = math.exp %505 : vector<4x128xf32>
    %cst_139 = arith.constant 1.000000e+00 : f32
    %507 = vector.broadcast %cst_139 : f32 to vector<4x128xf32>
    %508 = arith.addf %507, %506 : vector<4x128xf32>
    %509 = arith.divf %507, %508 : vector<4x128xf32>
    %510 = vector.extract_strided_slice %497 {offsets = [0, 256], sizes = [4, 128], strides = [1, 1]} : vector<4x512xf32> to vector<4x128xf32>
    %511 = math.tanh %510 : vector<4x128xf32>
    %512 = vector.extract_strided_slice %497 {offsets = [0, 384], sizes = [4, 128], strides = [1, 1]} : vector<4x512xf32> to vector<4x128xf32>
    %513 = arith.negf %512 : vector<4x128xf32>
    %514 = math.exp %513 : vector<4x128xf32>
    %cst_140 = arith.constant 1.000000e+00 : f32
    %515 = vector.broadcast %cst_140 : f32 to vector<4x128xf32>
    %516 = arith.addf %515, %514 : vector<4x128xf32>
    %517 = arith.divf %515, %516 : vector<4x128xf32>
    %518 = arith.mulf %509, %487 : vector<4x128xf32>
    %519 = arith.mulf %503, %511 : vector<4x128xf32>
    %520 = arith.addf %518, %519 : vector<4x128xf32>
    %521 = math.tanh %520 : vector<4x128xf32>
    %522 = arith.mulf %517, %521 : vector<4x128xf32>
    %523 = vector.extract_strided_slice %522 {offsets = [0, 0], sizes = [4, 64], strides = [1, 1]} : vector<4x128xf32> to vector<4x64xf32>
    %524 = vector.extract_strided_slice %522 {offsets = [0, 64], sizes = [4, 64], strides = [1, 1]} : vector<4x128xf32> to vector<4x64xf32>
    %c12_141 = arith.constant 12 : index
    %c0_142 = arith.constant 0 : index
    %525 = vector.load %arg12[%c12_141, %c0_142] : memref<48x512xf32, #tpu.memory_space<vmem>>, vector<4x512xf32>
    %c32_143 = arith.constant 32 : index
    %c0_144 = arith.constant 0 : index
    %526 = vector.load %arg13[%c32_143, %c0_144] : memref<48x512xf32, #tpu.memory_space<vmem>>, vector<4x512xf32>
    %527 = arith.addf %525, %526 : vector<4x512xf32>
    %528 = arith.truncf %522 : vector<4x128xf32> to vector<4x128xbf16>
    %cst_145 = arith.constant dense<0.000000e+00> : vector<4x512xf32>
    %529 = tpu.matmul %528, %416, %cst_145 {dimension_numbers = #tpu.dot_dimension_numbers<[1], [0], [0], [1], [0, 0, 1, 1], [], []>} : vector<4x128xbf16>, vector<128x512xbf16>, vector<4x512xf32> -> vector<4x512xf32>
    %530 = arith.addf %529, %527 : vector<4x512xf32>
    %531 = vector.extract_strided_slice %530 {offsets = [0, 0], sizes = [4, 128], strides = [1, 1]} : vector<4x512xf32> to vector<4x128xf32>
    %532 = arith.negf %531 : vector<4x128xf32>
    %533 = math.exp %532 : vector<4x128xf32>
    %cst_146 = arith.constant 1.000000e+00 : f32
    %534 = vector.broadcast %cst_146 : f32 to vector<4x128xf32>
    %535 = arith.addf %534, %533 : vector<4x128xf32>
    %536 = arith.divf %534, %535 : vector<4x128xf32>
    %537 = vector.extract_strided_slice %530 {offsets = [0, 128], sizes = [4, 128], strides = [1, 1]} : vector<4x512xf32> to vector<4x128xf32>
    %538 = arith.negf %537 : vector<4x128xf32>
    %539 = math.exp %538 : vector<4x128xf32>
    %cst_147 = arith.constant 1.000000e+00 : f32
    %540 = vector.broadcast %cst_147 : f32 to vector<4x128xf32>
    %541 = arith.addf %540, %539 : vector<4x128xf32>
    %542 = arith.divf %540, %541 : vector<4x128xf32>
    %543 = vector.extract_strided_slice %530 {offsets = [0, 256], sizes = [4, 128], strides = [1, 1]} : vector<4x512xf32> to vector<4x128xf32>
    %544 = math.tanh %543 : vector<4x128xf32>
    %545 = vector.extract_strided_slice %530 {offsets = [0, 384], sizes = [4, 128], strides = [1, 1]} : vector<4x512xf32> to vector<4x128xf32>
    %546 = arith.negf %545 : vector<4x128xf32>
    %547 = math.exp %546 : vector<4x128xf32>
    %cst_148 = arith.constant 1.000000e+00 : f32
    %548 = vector.broadcast %cst_148 : f32 to vector<4x128xf32>
    %549 = arith.addf %548, %547 : vector<4x128xf32>
    %550 = arith.divf %548, %549 : vector<4x128xf32>
    %551 = arith.mulf %542, %520 : vector<4x128xf32>
    %552 = arith.mulf %536, %544 : vector<4x128xf32>
    %553 = arith.addf %551, %552 : vector<4x128xf32>
    %554 = math.tanh %553 : vector<4x128xf32>
    %555 = arith.mulf %550, %554 : vector<4x128xf32>
    %556 = vector.extract_strided_slice %555 {offsets = [0, 0], sizes = [4, 64], strides = [1, 1]} : vector<4x128xf32> to vector<4x64xf32>
    %557 = vector.extract_strided_slice %555 {offsets = [0, 64], sizes = [4, 64], strides = [1, 1]} : vector<4x128xf32> to vector<4x64xf32>
    %c16_149 = arith.constant 16 : index
    %c0_150 = arith.constant 0 : index
    %558 = vector.load %arg12[%c16_149, %c0_150] : memref<48x512xf32, #tpu.memory_space<vmem>>, vector<4x512xf32>
    %c28_151 = arith.constant 28 : index
    %c0_152 = arith.constant 0 : index
    %559 = vector.load %arg13[%c28_151, %c0_152] : memref<48x512xf32, #tpu.memory_space<vmem>>, vector<4x512xf32>
    %560 = arith.addf %558, %559 : vector<4x512xf32>
    %561 = arith.truncf %555 : vector<4x128xf32> to vector<4x128xbf16>
    %cst_153 = arith.constant dense<0.000000e+00> : vector<4x512xf32>
    %562 = tpu.matmul %561, %416, %cst_153 {dimension_numbers = #tpu.dot_dimension_numbers<[1], [0], [0], [1], [0, 0, 1, 1], [], []>} : vector<4x128xbf16>, vector<128x512xbf16>, vector<4x512xf32> -> vector<4x512xf32>
    %563 = arith.addf %562, %560 : vector<4x512xf32>
    %564 = vector.extract_strided_slice %563 {offsets = [0, 0], sizes = [4, 128], strides = [1, 1]} : vector<4x512xf32> to vector<4x128xf32>
    %565 = arith.negf %564 : vector<4x128xf32>
    %566 = math.exp %565 : vector<4x128xf32>
    %cst_154 = arith.constant 1.000000e+00 : f32
    %567 = vector.broadcast %cst_154 : f32 to vector<4x128xf32>
    %568 = arith.addf %567, %566 : vector<4x128xf32>
    %569 = arith.divf %567, %568 : vector<4x128xf32>
    %570 = vector.extract_strided_slice %563 {offsets = [0, 128], sizes = [4, 128], strides = [1, 1]} : vector<4x512xf32> to vector<4x128xf32>
    %571 = arith.negf %570 : vector<4x128xf32>
    %572 = math.exp %571 : vector<4x128xf32>
    %cst_155 = arith.constant 1.000000e+00 : f32
    %573 = vector.broadcast %cst_155 : f32 to vector<4x128xf32>
    %574 = arith.addf %573, %572 : vector<4x128xf32>
    %575 = arith.divf %573, %574 : vector<4x128xf32>
    %576 = vector.extract_strided_slice %563 {offsets = [0, 256], sizes = [4, 128], strides = [1, 1]} : vector<4x512xf32> to vector<4x128xf32>
    %577 = math.tanh %576 : vector<4x128xf32>
    %578 = vector.extract_strided_slice %563 {offsets = [0, 384], sizes = [4, 128], strides = [1, 1]} : vector<4x512xf32> to vector<4x128xf32>
    %579 = arith.negf %578 : vector<4x128xf32>
    %580 = math.exp %579 : vector<4x128xf32>
    %cst_156 = arith.constant 1.000000e+00 : f32
    %581 = vector.broadcast %cst_156 : f32 to vector<4x128xf32>
    %582 = arith.addf %581, %580 : vector<4x128xf32>
    %583 = arith.divf %581, %582 : vector<4x128xf32>
    %584 = arith.mulf %575, %553 : vector<4x128xf32>
    %585 = arith.mulf %569, %577 : vector<4x128xf32>
    %586 = arith.addf %584, %585 : vector<4x128xf32>
    %587 = math.tanh %586 : vector<4x128xf32>
    %588 = arith.mulf %583, %587 : vector<4x128xf32>
    %589 = vector.extract_strided_slice %588 {offsets = [0, 0], sizes = [4, 64], strides = [1, 1]} : vector<4x128xf32> to vector<4x64xf32>
    %590 = vector.extract_strided_slice %588 {offsets = [0, 64], sizes = [4, 64], strides = [1, 1]} : vector<4x128xf32> to vector<4x64xf32>
    %c20_157 = arith.constant 20 : index
    %c0_158 = arith.constant 0 : index
    %591 = vector.load %arg12[%c20_157, %c0_158] : memref<48x512xf32, #tpu.memory_space<vmem>>, vector<4x512xf32>
    %c24_159 = arith.constant 24 : index
    %c0_160 = arith.constant 0 : index
    %592 = vector.load %arg13[%c24_159, %c0_160] : memref<48x512xf32, #tpu.memory_space<vmem>>, vector<4x512xf32>
    %593 = arith.addf %591, %592 : vector<4x512xf32>
    %594 = arith.truncf %588 : vector<4x128xf32> to vector<4x128xbf16>
    %cst_161 = arith.constant dense<0.000000e+00> : vector<4x512xf32>
    %595 = tpu.matmul %594, %416, %cst_161 {dimension_numbers = #tpu.dot_dimension_numbers<[1], [0], [0], [1], [0, 0, 1, 1], [], []>} : vector<4x128xbf16>, vector<128x512xbf16>, vector<4x512xf32> -> vector<4x512xf32>
    %596 = arith.addf %595, %593 : vector<4x512xf32>
    %597 = vector.extract_strided_slice %596 {offsets = [0, 0], sizes = [4, 128], strides = [1, 1]} : vector<4x512xf32> to vector<4x128xf32>
    %598 = arith.negf %597 : vector<4x128xf32>
    %599 = math.exp %598 : vector<4x128xf32>
    %cst_162 = arith.constant 1.000000e+00 : f32
    %600 = vector.broadcast %cst_162 : f32 to vector<4x128xf32>
    %601 = arith.addf %600, %599 : vector<4x128xf32>
    %602 = arith.divf %600, %601 : vector<4x128xf32>
    %603 = vector.extract_strided_slice %596 {offsets = [0, 128], sizes = [4, 128], strides = [1, 1]} : vector<4x512xf32> to vector<4x128xf32>
    %604 = arith.negf %603 : vector<4x128xf32>
    %605 = math.exp %604 : vector<4x128xf32>
    %cst_163 = arith.constant 1.000000e+00 : f32
    %606 = vector.broadcast %cst_163 : f32 to vector<4x128xf32>
    %607 = arith.addf %606, %605 : vector<4x128xf32>
    %608 = arith.divf %606, %607 : vector<4x128xf32>
    %609 = vector.extract_strided_slice %596 {offsets = [0, 256], sizes = [4, 128], strides = [1, 1]} : vector<4x512xf32> to vector<4x128xf32>
    %610 = math.tanh %609 : vector<4x128xf32>
    %611 = vector.extract_strided_slice %596 {offsets = [0, 384], sizes = [4, 128], strides = [1, 1]} : vector<4x512xf32> to vector<4x128xf32>
    %612 = arith.negf %611 : vector<4x128xf32>
    %613 = math.exp %612 : vector<4x128xf32>
    %cst_164 = arith.constant 1.000000e+00 : f32
    %614 = vector.broadcast %cst_164 : f32 to vector<4x128xf32>
    %615 = arith.addf %614, %613 : vector<4x128xf32>
    %616 = arith.divf %614, %615 : vector<4x128xf32>
    %617 = arith.mulf %608, %586 : vector<4x128xf32>
    %618 = arith.mulf %602, %610 : vector<4x128xf32>
    %619 = arith.addf %617, %618 : vector<4x128xf32>
    %620 = math.tanh %619 : vector<4x128xf32>
    %621 = arith.mulf %616, %620 : vector<4x128xf32>
    %622 = vector.extract_strided_slice %621 {offsets = [0, 0], sizes = [4, 64], strides = [1, 1]} : vector<4x128xf32> to vector<4x64xf32>
    %623 = vector.extract_strided_slice %621 {offsets = [0, 64], sizes = [4, 64], strides = [1, 1]} : vector<4x128xf32> to vector<4x64xf32>
    %c24_165 = arith.constant 24 : index
    %c0_166 = arith.constant 0 : index
    %624 = vector.load %arg12[%c24_165, %c0_166] : memref<48x512xf32, #tpu.memory_space<vmem>>, vector<4x512xf32>
    %c20_167 = arith.constant 20 : index
    %c0_168 = arith.constant 0 : index
    %625 = vector.load %arg13[%c20_167, %c0_168] : memref<48x512xf32, #tpu.memory_space<vmem>>, vector<4x512xf32>
    %626 = arith.addf %624, %625 : vector<4x512xf32>
    %627 = arith.truncf %621 : vector<4x128xf32> to vector<4x128xbf16>
    %cst_169 = arith.constant dense<0.000000e+00> : vector<4x512xf32>
    %628 = tpu.matmul %627, %416, %cst_169 {dimension_numbers = #tpu.dot_dimension_numbers<[1], [0], [0], [1], [0, 0, 1, 1], [], []>} : vector<4x128xbf16>, vector<128x512xbf16>, vector<4x512xf32> -> vector<4x512xf32>
    %629 = arith.addf %628, %626 : vector<4x512xf32>
    %630 = vector.extract_strided_slice %629 {offsets = [0, 0], sizes = [4, 128], strides = [1, 1]} : vector<4x512xf32> to vector<4x128xf32>
    %631 = arith.negf %630 : vector<4x128xf32>
    %632 = math.exp %631 : vector<4x128xf32>
    %cst_170 = arith.constant 1.000000e+00 : f32
    %633 = vector.broadcast %cst_170 : f32 to vector<4x128xf32>
    %634 = arith.addf %633, %632 : vector<4x128xf32>
    %635 = arith.divf %633, %634 : vector<4x128xf32>
    %636 = vector.extract_strided_slice %629 {offsets = [0, 128], sizes = [4, 128], strides = [1, 1]} : vector<4x512xf32> to vector<4x128xf32>
    %637 = arith.negf %636 : vector<4x128xf32>
    %638 = math.exp %637 : vector<4x128xf32>
    %cst_171 = arith.constant 1.000000e+00 : f32
    %639 = vector.broadcast %cst_171 : f32 to vector<4x128xf32>
    %640 = arith.addf %639, %638 : vector<4x128xf32>
    %641 = arith.divf %639, %640 : vector<4x128xf32>
    %642 = vector.extract_strided_slice %629 {offsets = [0, 256], sizes = [4, 128], strides = [1, 1]} : vector<4x512xf32> to vector<4x128xf32>
    %643 = math.tanh %642 : vector<4x128xf32>
    %644 = vector.extract_strided_slice %629 {offsets = [0, 384], sizes = [4, 128], strides = [1, 1]} : vector<4x512xf32> to vector<4x128xf32>
    %645 = arith.negf %644 : vector<4x128xf32>
    %646 = math.exp %645 : vector<4x128xf32>
    %cst_172 = arith.constant 1.000000e+00 : f32
    %647 = vector.broadcast %cst_172 : f32 to vector<4x128xf32>
    %648 = arith.addf %647, %646 : vector<4x128xf32>
    %649 = arith.divf %647, %648 : vector<4x128xf32>
    %650 = arith.mulf %641, %619 : vector<4x128xf32>
    %651 = arith.mulf %635, %643 : vector<4x128xf32>
    %652 = arith.addf %650, %651 : vector<4x128xf32>
    %653 = math.tanh %652 : vector<4x128xf32>
    %654 = arith.mulf %649, %653 : vector<4x128xf32>
    %655 = vector.extract_strided_slice %654 {offsets = [0, 0], sizes = [4, 64], strides = [1, 1]} : vector<4x128xf32> to vector<4x64xf32>
    %656 = vector.extract_strided_slice %654 {offsets = [0, 64], sizes = [4, 64], strides = [1, 1]} : vector<4x128xf32> to vector<4x64xf32>
    %c28_173 = arith.constant 28 : index
    %c0_174 = arith.constant 0 : index
    %657 = vector.load %arg12[%c28_173, %c0_174] : memref<48x512xf32, #tpu.memory_space<vmem>>, vector<4x512xf32>
    %c16_175 = arith.constant 16 : index
    %c0_176 = arith.constant 0 : index
    %658 = vector.load %arg13[%c16_175, %c0_176] : memref<48x512xf32, #tpu.memory_space<vmem>>, vector<4x512xf32>
    %659 = arith.addf %657, %658 : vector<4x512xf32>
    %660 = arith.truncf %654 : vector<4x128xf32> to vector<4x128xbf16>
    %cst_177 = arith.constant dense<0.000000e+00> : vector<4x512xf32>
    %661 = tpu.matmul %660, %416, %cst_177 {dimension_numbers = #tpu.dot_dimension_numbers<[1], [0], [0], [1], [0, 0, 1, 1], [], []>} : vector<4x128xbf16>, vector<128x512xbf16>, vector<4x512xf32> -> vector<4x512xf32>
    %662 = arith.addf %661, %659 : vector<4x512xf32>
    %663 = vector.extract_strided_slice %662 {offsets = [0, 0], sizes = [4, 128], strides = [1, 1]} : vector<4x512xf32> to vector<4x128xf32>
    %664 = arith.negf %663 : vector<4x128xf32>
    %665 = math.exp %664 : vector<4x128xf32>
    %cst_178 = arith.constant 1.000000e+00 : f32
    %666 = vector.broadcast %cst_178 : f32 to vector<4x128xf32>
    %667 = arith.addf %666, %665 : vector<4x128xf32>
    %668 = arith.divf %666, %667 : vector<4x128xf32>
    %669 = vector.extract_strided_slice %662 {offsets = [0, 128], sizes = [4, 128], strides = [1, 1]} : vector<4x512xf32> to vector<4x128xf32>
    %670 = arith.negf %669 : vector<4x128xf32>
    %671 = math.exp %670 : vector<4x128xf32>
    %cst_179 = arith.constant 1.000000e+00 : f32
    %672 = vector.broadcast %cst_179 : f32 to vector<4x128xf32>
    %673 = arith.addf %672, %671 : vector<4x128xf32>
    %674 = arith.divf %672, %673 : vector<4x128xf32>
    %675 = vector.extract_strided_slice %662 {offsets = [0, 256], sizes = [4, 128], strides = [1, 1]} : vector<4x512xf32> to vector<4x128xf32>
    %676 = math.tanh %675 : vector<4x128xf32>
    %677 = vector.extract_strided_slice %662 {offsets = [0, 384], sizes = [4, 128], strides = [1, 1]} : vector<4x512xf32> to vector<4x128xf32>
    %678 = arith.negf %677 : vector<4x128xf32>
    %679 = math.exp %678 : vector<4x128xf32>
    %cst_180 = arith.constant 1.000000e+00 : f32
    %680 = vector.broadcast %cst_180 : f32 to vector<4x128xf32>
    %681 = arith.addf %680, %679 : vector<4x128xf32>
    %682 = arith.divf %680, %681 : vector<4x128xf32>
    %683 = arith.mulf %674, %652 : vector<4x128xf32>
    %684 = arith.mulf %668, %676 : vector<4x128xf32>
    %685 = arith.addf %683, %684 : vector<4x128xf32>
    %686 = math.tanh %685 : vector<4x128xf32>
    %687 = arith.mulf %682, %686 : vector<4x128xf32>
    %688 = vector.extract_strided_slice %687 {offsets = [0, 0], sizes = [4, 64], strides = [1, 1]} : vector<4x128xf32> to vector<4x64xf32>
    %689 = vector.extract_strided_slice %687 {offsets = [0, 64], sizes = [4, 64], strides = [1, 1]} : vector<4x128xf32> to vector<4x64xf32>
    %c32_181 = arith.constant 32 : index
    %c0_182 = arith.constant 0 : index
    %690 = vector.load %arg12[%c32_181, %c0_182] : memref<48x512xf32, #tpu.memory_space<vmem>>, vector<4x512xf32>
    %c12_183 = arith.constant 12 : index
    %c0_184 = arith.constant 0 : index
    %691 = vector.load %arg13[%c12_183, %c0_184] : memref<48x512xf32, #tpu.memory_space<vmem>>, vector<4x512xf32>
    %692 = arith.addf %690, %691 : vector<4x512xf32>
    %693 = arith.truncf %687 : vector<4x128xf32> to vector<4x128xbf16>
    %cst_185 = arith.constant dense<0.000000e+00> : vector<4x512xf32>
    %694 = tpu.matmul %693, %416, %cst_185 {dimension_numbers = #tpu.dot_dimension_numbers<[1], [0], [0], [1], [0, 0, 1, 1], [], []>} : vector<4x128xbf16>, vector<128x512xbf16>, vector<4x512xf32> -> vector<4x512xf32>
    %695 = arith.addf %694, %692 : vector<4x512xf32>
    %696 = vector.extract_strided_slice %695 {offsets = [0, 0], sizes = [4, 128], strides = [1, 1]} : vector<4x512xf32> to vector<4x128xf32>
    %697 = arith.negf %696 : vector<4x128xf32>
    %698 = math.exp %697 : vector<4x128xf32>
    %cst_186 = arith.constant 1.000000e+00 : f32
    %699 = vector.broadcast %cst_186 : f32 to vector<4x128xf32>
    %700 = arith.addf %699, %698 : vector<4x128xf32>
    %701 = arith.divf %699, %700 : vector<4x128xf32>
    %702 = vector.extract_strided_slice %695 {offsets = [0, 128], sizes = [4, 128], strides = [1, 1]} : vector<4x512xf32> to vector<4x128xf32>
    %703 = arith.negf %702 : vector<4x128xf32>
    %704 = math.exp %703 : vector<4x128xf32>
    %cst_187 = arith.constant 1.000000e+00 : f32
    %705 = vector.broadcast %cst_187 : f32 to vector<4x128xf32>
    %706 = arith.addf %705, %704 : vector<4x128xf32>
    %707 = arith.divf %705, %706 : vector<4x128xf32>
    %708 = vector.extract_strided_slice %695 {offsets = [0, 256], sizes = [4, 128], strides = [1, 1]} : vector<4x512xf32> to vector<4x128xf32>
    %709 = math.tanh %708 : vector<4x128xf32>
    %710 = vector.extract_strided_slice %695 {offsets = [0, 384], sizes = [4, 128], strides = [1, 1]} : vector<4x512xf32> to vector<4x128xf32>
    %711 = arith.negf %710 : vector<4x128xf32>
    %712 = math.exp %711 : vector<4x128xf32>
    %cst_188 = arith.constant 1.000000e+00 : f32
    %713 = vector.broadcast %cst_188 : f32 to vector<4x128xf32>
    %714 = arith.addf %713, %712 : vector<4x128xf32>
    %715 = arith.divf %713, %714 : vector<4x128xf32>
    %716 = arith.mulf %707, %685 : vector<4x128xf32>
    %717 = arith.mulf %701, %709 : vector<4x128xf32>
    %718 = arith.addf %716, %717 : vector<4x128xf32>
    %719 = math.tanh %718 : vector<4x128xf32>
    %720 = arith.mulf %715, %719 : vector<4x128xf32>
    %721 = vector.extract_strided_slice %720 {offsets = [0, 0], sizes = [4, 64], strides = [1, 1]} : vector<4x128xf32> to vector<4x64xf32>
    %722 = vector.extract_strided_slice %720 {offsets = [0, 64], sizes = [4, 64], strides = [1, 1]} : vector<4x128xf32> to vector<4x64xf32>
    %c36_189 = arith.constant 36 : index
    %c0_190 = arith.constant 0 : index
    %723 = vector.load %arg12[%c36_189, %c0_190] : memref<48x512xf32, #tpu.memory_space<vmem>>, vector<4x512xf32>
    %c8_191 = arith.constant 8 : index
    %c0_192 = arith.constant 0 : index
    %724 = vector.load %arg13[%c8_191, %c0_192] : memref<48x512xf32, #tpu.memory_space<vmem>>, vector<4x512xf32>
    %725 = arith.addf %723, %724 : vector<4x512xf32>
    %726 = arith.truncf %720 : vector<4x128xf32> to vector<4x128xbf16>
    %cst_193 = arith.constant dense<0.000000e+00> : vector<4x512xf32>
    %727 = tpu.matmul %726, %416, %cst_193 {dimension_numbers = #tpu.dot_dimension_numbers<[1], [0], [0], [1], [0, 0, 1, 1], [], []>} : vector<4x128xbf16>, vector<128x512xbf16>, vector<4x512xf32> -> vector<4x512xf32>
    %728 = arith.addf %727, %725 : vector<4x512xf32>
    %729 = vector.extract_strided_slice %728 {offsets = [0, 0], sizes = [4, 128], strides = [1, 1]} : vector<4x512xf32> to vector<4x128xf32>
    %730 = arith.negf %729 : vector<4x128xf32>
    %731 = math.exp %730 : vector<4x128xf32>
    %cst_194 = arith.constant 1.000000e+00 : f32
    %732 = vector.broadcast %cst_194 : f32 to vector<4x128xf32>
    %733 = arith.addf %732, %731 : vector<4x128xf32>
    %734 = arith.divf %732, %733 : vector<4x128xf32>
    %735 = vector.extract_strided_slice %728 {offsets = [0, 128], sizes = [4, 128], strides = [1, 1]} : vector<4x512xf32> to vector<4x128xf32>
    %736 = arith.negf %735 : vector<4x128xf32>
    %737 = math.exp %736 : vector<4x128xf32>
    %cst_195 = arith.constant 1.000000e+00 : f32
    %738 = vector.broadcast %cst_195 : f32 to vector<4x128xf32>
    %739 = arith.addf %738, %737 : vector<4x128xf32>
    %740 = arith.divf %738, %739 : vector<4x128xf32>
    %741 = vector.extract_strided_slice %728 {offsets = [0, 256], sizes = [4, 128], strides = [1, 1]} : vector<4x512xf32> to vector<4x128xf32>
    %742 = math.tanh %741 : vector<4x128xf32>
    %743 = vector.extract_strided_slice %728 {offsets = [0, 384], sizes = [4, 128], strides = [1, 1]} : vector<4x512xf32> to vector<4x128xf32>
    %744 = arith.negf %743 : vector<4x128xf32>
    %745 = math.exp %744 : vector<4x128xf32>
    %cst_196 = arith.constant 1.000000e+00 : f32
    %746 = vector.broadcast %cst_196 : f32 to vector<4x128xf32>
    %747 = arith.addf %746, %745 : vector<4x128xf32>
    %748 = arith.divf %746, %747 : vector<4x128xf32>
    %749 = arith.mulf %740, %718 : vector<4x128xf32>
    %750 = arith.mulf %734, %742 : vector<4x128xf32>
    %751 = arith.addf %749, %750 : vector<4x128xf32>
    %752 = math.tanh %751 : vector<4x128xf32>
    %753 = arith.mulf %748, %752 : vector<4x128xf32>
    %754 = vector.extract_strided_slice %753 {offsets = [0, 0], sizes = [4, 64], strides = [1, 1]} : vector<4x128xf32> to vector<4x64xf32>
    %755 = vector.extract_strided_slice %753 {offsets = [0, 64], sizes = [4, 64], strides = [1, 1]} : vector<4x128xf32> to vector<4x64xf32>
    %c40_197 = arith.constant 40 : index
    %c0_198 = arith.constant 0 : index
    %756 = vector.load %arg12[%c40_197, %c0_198] : memref<48x512xf32, #tpu.memory_space<vmem>>, vector<4x512xf32>
    %c4_199 = arith.constant 4 : index
    %c0_200 = arith.constant 0 : index
    %757 = vector.load %arg13[%c4_199, %c0_200] : memref<48x512xf32, #tpu.memory_space<vmem>>, vector<4x512xf32>
    %758 = arith.addf %756, %757 : vector<4x512xf32>
    %759 = arith.truncf %753 : vector<4x128xf32> to vector<4x128xbf16>
    %cst_201 = arith.constant dense<0.000000e+00> : vector<4x512xf32>
    %760 = tpu.matmul %759, %416, %cst_201 {dimension_numbers = #tpu.dot_dimension_numbers<[1], [0], [0], [1], [0, 0, 1, 1], [], []>} : vector<4x128xbf16>, vector<128x512xbf16>, vector<4x512xf32> -> vector<4x512xf32>
    %761 = arith.addf %760, %758 : vector<4x512xf32>
    %762 = vector.extract_strided_slice %761 {offsets = [0, 0], sizes = [4, 128], strides = [1, 1]} : vector<4x512xf32> to vector<4x128xf32>
    %763 = arith.negf %762 : vector<4x128xf32>
    %764 = math.exp %763 : vector<4x128xf32>
    %cst_202 = arith.constant 1.000000e+00 : f32
    %765 = vector.broadcast %cst_202 : f32 to vector<4x128xf32>
    %766 = arith.addf %765, %764 : vector<4x128xf32>
    %767 = arith.divf %765, %766 : vector<4x128xf32>
    %768 = vector.extract_strided_slice %761 {offsets = [0, 128], sizes = [4, 128], strides = [1, 1]} : vector<4x512xf32> to vector<4x128xf32>
    %769 = arith.negf %768 : vector<4x128xf32>
    %770 = math.exp %769 : vector<4x128xf32>
    %cst_203 = arith.constant 1.000000e+00 : f32
    %771 = vector.broadcast %cst_203 : f32 to vector<4x128xf32>
    %772 = arith.addf %771, %770 : vector<4x128xf32>
    %773 = arith.divf %771, %772 : vector<4x128xf32>
    %774 = vector.extract_strided_slice %761 {offsets = [0, 256], sizes = [4, 128], strides = [1, 1]} : vector<4x512xf32> to vector<4x128xf32>
    %775 = math.tanh %774 : vector<4x128xf32>
    %776 = vector.extract_strided_slice %761 {offsets = [0, 384], sizes = [4, 128], strides = [1, 1]} : vector<4x512xf32> to vector<4x128xf32>
    %777 = arith.negf %776 : vector<4x128xf32>
    %778 = math.exp %777 : vector<4x128xf32>
    %cst_204 = arith.constant 1.000000e+00 : f32
    %779 = vector.broadcast %cst_204 : f32 to vector<4x128xf32>
    %780 = arith.addf %779, %778 : vector<4x128xf32>
    %781 = arith.divf %779, %780 : vector<4x128xf32>
    %782 = arith.mulf %773, %751 : vector<4x128xf32>
    %783 = arith.mulf %767, %775 : vector<4x128xf32>
    %784 = arith.addf %782, %783 : vector<4x128xf32>
    %785 = math.tanh %784 : vector<4x128xf32>
    %786 = arith.mulf %781, %785 : vector<4x128xf32>
    %787 = vector.extract_strided_slice %786 {offsets = [0, 0], sizes = [4, 64], strides = [1, 1]} : vector<4x128xf32> to vector<4x64xf32>
    %788 = vector.extract_strided_slice %786 {offsets = [0, 64], sizes = [4, 64], strides = [1, 1]} : vector<4x128xf32> to vector<4x64xf32>
    %c44_205 = arith.constant 44 : index
    %c0_206 = arith.constant 0 : index
    %789 = vector.load %arg12[%c44_205, %c0_206] : memref<48x512xf32, #tpu.memory_space<vmem>>, vector<4x512xf32>
    %c0_207 = arith.constant 0 : index
    %c0_208 = arith.constant 0 : index
    %790 = vector.load %arg13[%c0_207, %c0_208] : memref<48x512xf32, #tpu.memory_space<vmem>>, vector<4x512xf32>
    %791 = arith.addf %789, %790 : vector<4x512xf32>
    %792 = arith.truncf %786 : vector<4x128xf32> to vector<4x128xbf16>
    %cst_209 = arith.constant dense<0.000000e+00> : vector<4x512xf32>
    %793 = tpu.matmul %792, %416, %cst_209 {dimension_numbers = #tpu.dot_dimension_numbers<[1], [0], [0], [1], [0, 0, 1, 1], [], []>} : vector<4x128xbf16>, vector<128x512xbf16>, vector<4x512xf32> -> vector<4x512xf32>
    %794 = arith.addf %793, %791 : vector<4x512xf32>
    %795 = vector.extract_strided_slice %794 {offsets = [0, 0], sizes = [4, 128], strides = [1, 1]} : vector<4x512xf32> to vector<4x128xf32>
    %796 = arith.negf %795 : vector<4x128xf32>
    %797 = math.exp %796 : vector<4x128xf32>
    %cst_210 = arith.constant 1.000000e+00 : f32
    %798 = vector.broadcast %cst_210 : f32 to vector<4x128xf32>
    %799 = arith.addf %798, %797 : vector<4x128xf32>
    %800 = arith.divf %798, %799 : vector<4x128xf32>
    %801 = vector.extract_strided_slice %794 {offsets = [0, 128], sizes = [4, 128], strides = [1, 1]} : vector<4x512xf32> to vector<4x128xf32>
    %802 = arith.negf %801 : vector<4x128xf32>
    %803 = math.exp %802 : vector<4x128xf32>
    %cst_211 = arith.constant 1.000000e+00 : f32
    %804 = vector.broadcast %cst_211 : f32 to vector<4x128xf32>
    %805 = arith.addf %804, %803 : vector<4x128xf32>
    %806 = arith.divf %804, %805 : vector<4x128xf32>
    %807 = vector.extract_strided_slice %794 {offsets = [0, 256], sizes = [4, 128], strides = [1, 1]} : vector<4x512xf32> to vector<4x128xf32>
    %808 = math.tanh %807 : vector<4x128xf32>
    %809 = vector.extract_strided_slice %794 {offsets = [0, 384], sizes = [4, 128], strides = [1, 1]} : vector<4x512xf32> to vector<4x128xf32>
    %810 = arith.negf %809 : vector<4x128xf32>
    %811 = math.exp %810 : vector<4x128xf32>
    %cst_212 = arith.constant 1.000000e+00 : f32
    %812 = vector.broadcast %cst_212 : f32 to vector<4x128xf32>
    %813 = arith.addf %812, %811 : vector<4x128xf32>
    %814 = arith.divf %812, %813 : vector<4x128xf32>
    %815 = arith.mulf %806, %784 : vector<4x128xf32>
    %816 = arith.mulf %800, %808 : vector<4x128xf32>
    %817 = arith.addf %815, %816 : vector<4x128xf32>
    %818 = math.tanh %817 : vector<4x128xf32>
    %819 = arith.mulf %814, %818 : vector<4x128xf32>
    %820 = vector.extract_strided_slice %819 {offsets = [0, 0], sizes = [4, 64], strides = [1, 1]} : vector<4x128xf32> to vector<4x64xf32>
    %821 = vector.extract_strided_slice %819 {offsets = [0, 64], sizes = [4, 64], strides = [1, 1]} : vector<4x128xf32> to vector<4x64xf32>
    %822 = tpu.concatenate %457, %490, %523, %556, %589, %622, %655, %688, %721, %754, %787, %820 in 0 : vector<4x64xf32>, vector<4x64xf32>, vector<4x64xf32>, vector<4x64xf32>, vector<4x64xf32>, vector<4x64xf32>, vector<4x64xf32>, vector<4x64xf32>, vector<4x64xf32>, vector<4x64xf32>, vector<4x64xf32>, vector<4x64xf32> -> vector<48x64xf32>
    %823 = tpu.concatenate %821, %788, %755, %722, %689, %656, %623, %590, %557, %524, %491, %458 in 0 : vector<4x64xf32>, vector<4x64xf32>, vector<4x64xf32>, vector<4x64xf32>, vector<4x64xf32>, vector<4x64xf32>, vector<4x64xf32>, vector<4x64xf32>, vector<4x64xf32>, vector<4x64xf32>, vector<4x64xf32>, vector<4x64xf32> -> vector<48x64xf32>
    %824 = tpu.concatenate %822, %823 in 1 : vector<48x64xf32>, vector<48x64xf32> -> vector<48x128xf32>
    %c0_213 = arith.constant 0 : index
    %c0_214 = arith.constant 0 : index
    %825 = vector.load %arg9[%c0_213, %c0_214] : memref<128x3xf32, #tpu.memory_space<vmem>>, vector<128x3xf32>
    %cst_215 = arith.constant dense<0.000000e+00> : vector<48x3xf32>
    %826 = tpu.matmul %824, %825, %cst_215 {dimension_numbers = #tpu.dot_dimension_numbers<[1], [0], [0], [1], [0, 0, 1, 1], [], []>} : vector<48x128xf32>, vector<128x3xf32>, vector<48x3xf32> -> vector<48x3xf32>
    %c0_216 = arith.constant 0 : index
    %c0_217 = arith.constant 0 : index
    %827 = vector.load %arg10[%c0_216, %c0_217] : memref<1x3xf32, #tpu.memory_space<vmem>>, vector<1x3xf32>
    %828 = vector.broadcast %827 : vector<1x3xf32> to vector<48x3xf32>
    %829 = arith.addf %826, %828 : vector<48x3xf32>
    %c0_218 = arith.constant 0 : index
    %c0_219 = arith.constant 0 : index
    %830 = vector.load %arg11[%c0_218, %c0_219] : memref<48x3xf32, #tpu.memory_space<vmem>>, vector<48x3xf32>
    tpu.vector_store %arg11[%c0_218, %c0_219], %829 {strides = array<i32>} : memref<48x3xf32, #tpu.memory_space<vmem>>, vector<48x3xf32>,
    return
  }
}

</mosaic_0001>

<llo_original>
// kernel: lstm_forecast_forward.1
$region0: #{lstm_forecast_forward.1}
  #allocation0 [shape = 'u32[]', space=smem, size = 0x4, offset = 0x4, fixed_abs, tag = 'smem constant byte address 0x4 - core index']
  #allocation1 [shape = 'u32[72,128]{1,0:T(1,128)}', space=vmem, size = 0x9000, scoped, tag = 'internal scratch']
  #allocation2 [shape = 'f32[48,512]{1,0:T(8,128)}', space=vmem, size = 0x18000, scoped, tag = 'scratch operand']
  #allocation3 [shape = 'f32[48,512]{1,0:T(8,128)}', space=vmem, size = 0x18000, scoped, tag = 'scratch operand']
  %s0 = inlined_call_operand.vmem [shape: f32[48,12], index: 0, kind: input, shape index: {}]
  %s1 = inlined_call_operand.vmem [shape: bf16[12,512], index: 1, kind: input, shape index: {}]
  %s2 = inlined_call_operand.vmem [shape: bf16[12,512], index: 2, kind: input, shape index: {}]
  %s3 = inlined_call_operand.hbm [shape: bf16[128,512], index: 3, kind: input, shape index: {}]
  %s4 = inlined_call_operand.vmem [shape: f32[1,512], index: 4, kind: input, shape index: {}]
  %s5 = inlined_call_operand.hbm [shape: bf16[128,512], index: 5, kind: input, shape index: {}]
  %s6 = inlined_call_operand.hbm [shape: bf16[128,512], index: 6, kind: input, shape index: {}]
  %s7 = inlined_call_operand.hbm [shape: bf16[128,512], index: 7, kind: input, shape index: {}]
  %s8 = inlined_call_operand.vmem [shape: f32[1,512], index: 8, kind: input, shape index: {}]
  %s9 = inlined_call_operand.vmem [shape: f32[128,3], index: 9, kind: input, shape index: {}]
  %s10 = inlined_call_operand.vmem [shape: f32[1,3], index: 10, kind: input, shape index: {}]
  %s11 = inlined_call_operand.vmem [shape: f32[48,3], index: 11, kind: output, shape index: {}]
  %s12 = sld [smem:[#allocation0]]
  $region70: #{lstm_forecast_forward.1} parent=0
    _
  %s14 = ssub.s32 1, %s12
  %s15 = scalar_select 0, %s14, %s12
  $region1: #{lstm_forecast_forward.1} parent=0
    #allocation4 [shape = 'u8[131072]{0}', space=vmem, size = 0x20000, scoped, tag = 'input window, operand 3, single buffered']
    #allocation5 [shape = 's32[1]{0}', space=sflag, size = 0x4, scoped, tag = 'scoped memory for lstm_forecast_forward.1']
    #allocation6 [shape = 'u8[131072]{0}', space=vmem, size = 0x20000, scoped, tag = 'input window, operand 5, single buffered']
    #allocation7 [shape = 's32[1]{0}', space=sflag, size = 0x4, scoped, tag = 'scoped memory for lstm_forecast_forward.1']
    #allocation8 [shape = 'u8[131072]{0}', space=vmem, size = 0x20000, scoped, tag = 'input window, operand 6, single buffered']
    #allocation9 [shape = 'u8[131072]{0}', space=vmem, size = 0x20000, scoped, tag = 'input window, operand 7, single buffered']
    #allocation10 [shape = 's32[1]{0}', space=sflag, size = 0x4, scoped, tag = 'scoped memory for lstm_forecast_forward.1']
    %16 = vsyncpa [#allocation5], 0
    %17 = vsyncpa [#allocation7], 0
    %18 = vsyncpa [#allocation10], 0
    // Predicated region
    $region2: #{lstm_forecast_forward.1} parent=1 // pred_check
      _
    $region3: #{lstm_forecast_forward.1} parent=1 // pred_check_branch
      %20 = sbr.rel (0) target = $region5
    $region4: #{lstm_forecast_forward.1} parent=1 // pred_region
      _
    $region5: #{lstm_forecast_forward.1} parent=1 // pred_fallthru
      _
    // Predicated region
    $region6: #{lstm_forecast_forward.1} parent=1 // pred_check
      _
    $region7: #{lstm_forecast_forward.1} parent=1 // pred_check_branch
      %22 = sbr.rel (0) target = $region9
    $region8: #{lstm_forecast_forward.1} parent=1 // pred_region
      _
    $region9: #{lstm_forecast_forward.1} parent=1 // pred_fallthru
      _
    // Predicated region
    $region10: #{lstm_forecast_forward.1} parent=1 // pred_check
      _
    $region11: #{lstm_forecast_forward.1} parent=1 // pred_check_branch
      %24 = sbr.rel (0) target = $region13
    $region12: #{lstm_forecast_forward.1} parent=1 // pred_region
      _
    $region13: #{lstm_forecast_forward.1} parent=1 // pred_fallthru
      _
    // Predicated region
    $region14: #{lstm_forecast_forward.1} parent=1 // pred_check
      _
    $region15: #{lstm_forecast_forward.1} parent=1 // pred_check_branch
      %26 = sbr.rel (0) target = $region17
    $region16: #{lstm_forecast_forward.1} parent=1 // pred_region
      %28 = vsyncadd [#allocation5], 0
      %s29 = sshll.u32 %s3, 4
      %s30 = int_to_ptr.hbm [resolvable:$true] %s29
      %s31 = sshll.u32 [#allocation4], 4
      %s32 = int_to_ptr.vmem [resolvable:$true] %s31
      %37 = dma.hbm_to_vmem [thread:$0]  %s30, 4096, %s32, [#allocation5], 256, 256, 16
    $region17: #{lstm_forecast_forward.1} parent=1 // pred_fallthru
      _
    // Predicated region
    $region18: #{lstm_forecast_forward.1} parent=1 // pred_check
      _
    $region19: #{lstm_forecast_forward.1} parent=1 // pred_check_branch
      %39 = sbr.rel (0) target = $region21
    $region20: #{lstm_forecast_forward.1} parent=1 // pred_region
      _
    $region21: #{lstm_forecast_forward.1} parent=1 // pred_fallthru
      _
    // Predicated region
    $region22: #{lstm_forecast_forward.1} parent=1 // pred_check
      _
    $region23: #{lstm_forecast_forward.1} parent=1 // pred_check_branch
      %41 = sbr.rel (0) target = $region25
    $region24: #{lstm_forecast_forward.1} parent=1 // pred_region
      %43 = vsyncadd [#allocation7], 0
      %s44 = sshll.u32 %s5, 4
      %s45 = int_to_ptr.hbm [resolvable:$true] %s44
      %s46 = sshll.u32 [#allocation6], 4
      %s47 = int_to_ptr.vmem [resolvable:$true] %s46
      %52 = dma.hbm_to_vmem [thread:$0]  %s45, 4096, %s47, [#allocation7], 256, 256, 16
    $region25: #{lstm_forecast_forward.1} parent=1 // pred_fallthru
      _
    // Predicated region
    $region26: #{lstm_forecast_forward.1} parent=1 // pred_check
      _
    $region27: #{lstm_forecast_forward.1} parent=1 // pred_check_branch
      %54 = sbr.rel (0) target = $region29
    $region28: #{lstm_forecast_forward.1} parent=1 // pred_region
      %56 = vsyncadd [#allocation7], 0
      %s57 = sshll.u32 %s6, 4
      %s58 = int_to_ptr.hbm [resolvable:$true] %s57
      %s59 = sshll.u32 [#allocation8], 4
      %s60 = int_to_ptr.vmem [resolvable:$true] %s59
      %65 = dma.hbm_to_vmem [thread:$0]  %s58, 4096, %s60, [#allocation7], 256, 256, 16
    $region29: #{lstm_forecast_forward.1} parent=1 // pred_fallthru
      _
    // Predicated region
    $region30: #{lstm_forecast_forward.1} parent=1 // pred_check
      _
    $region31: #{lstm_forecast_forward.1} parent=1 // pred_check_branch
      %67 = sbr.rel (0) target = $region33
    $region32: #{lstm_forecast_forward.1} parent=1 // pred_region
      %69 = vsyncadd [#allocation10], 0
      %s70 = sshll.u32 %s7, 4
      %s71 = int_to_ptr.hbm [resolvable:$true] %s70
      %s72 = sshll.u32 [#allocation9], 4
      %s73 = int_to_ptr.vmem [resolvable:$true] %s72
      %78 = dma.hbm_to_vmem [thread:$0]  %s71, 4096, %s73, [#allocation10], 256, 256, 16
    $region33: #{lstm_forecast_forward.1} parent=1 // pred_fallthru
      _
    // Predicated region
    $region34: #{lstm_forecast_forward.1} parent=1 // pred_check
      _
    $region35: #{lstm_forecast_forward.1} parent=1 // pred_check_branch
      %80 = sbr.rel (0) target = $region37
    $region36: #{lstm_forecast_forward.1} parent=1 // pred_region
      _
    $region37: #{lstm_forecast_forward.1} parent=1 // pred_fallthru
      _
    // Predicated region
    $region38: #{lstm_forecast_forward.1} parent=1 // pred_check
      _
    $region39: #{lstm_forecast_forward.1} parent=1 // pred_check_branch
      %82 = sbr.rel (0) target = $region41
    $region40: #{lstm_forecast_forward.1} parent=1 // pred_region
      _
    $region41: #{lstm_forecast_forward.1} parent=1 // pred_fallthru
      _
    // Predicated region
    $region42: #{lstm_forecast_forward.1} parent=1 // pred_check
      _
    $region43: #{lstm_forecast_forward.1} parent=1 // pred_check_branch
      %84 = sbr.rel (0) target = $region45
    $region44: #{lstm_forecast_forward.1} parent=1 // pred_region
      _
    $region45: #{lstm_forecast_forward.1} parent=1 // pred_fallthru
      _
    // Predicated region
    $region46: #{lstm_forecast_forward.1} parent=1 // pred_check
      _
    $region47: #{lstm_forecast_forward.1} parent=1 // pred_check_branch
      %86 = sbr.rel (0) target = $region49
    $region48: #{lstm_forecast_forward.1} parent=1 // pred_region
      %88 = dma.done [#allocation5], 4096
    $region49: #{lstm_forecast_forward.1} parent=1 // pred_fallthru
      _
    // Predicated region
    $region50: #{lstm_forecast_forward.1} parent=1 // pred_check
      _
    $region51: #{lstm_forecast_forward.1} parent=1 // pred_check_branch
      %90 = sbr.rel (0) target = $region53
    $region52: #{lstm_forecast_forward.1} parent=1 // pred_region
      %92 = dma.done [#allocation7], 4096
    $region53: #{lstm_forecast_forward.1} parent=1 // pred_fallthru
      _
    // Predicated region
    $region54: #{lstm_forecast_forward.1} parent=1 // pred_check
      _
    $region55: #{lstm_forecast_forward.1} parent=1 // pred_check_branch
      %94 = sbr.rel (0) target = $region57
    $region56: #{lstm_forecast_forward.1} parent=1 // pred_region
      %96 = dma.done [#allocation7], 4096
    $region57: #{lstm_forecast_forward.1} parent=1 // pred_fallthru
      _
    // Predicated region
    $region58: #{lstm_forecast_forward.1} parent=1 // pred_check
      _
    $region59: #{lstm_forecast_forward.1} parent=1 // pred_check_branch
      %98 = sbr.rel (0) target = $region61
    $region60: #{lstm_forecast_forward.1} parent=1 // pred_region
      %100 = dma.done [#allocation10], 4096
    $region61: #{lstm_forecast_forward.1} parent=1 // pred_fallthru
      _
    %v102 = vld [vmem:[%s0] sm:$0xff]
    %v103 = vld [vmem:[%s0 + $0x8] sm:$0xff]
    %v104 = vld [vmem:[%s0 + $0x10] sm:$0xff]
    %v105 = vld [vmem:[%s0 + $0x18] sm:$0xff]
    %v106 = vld [vmem:[%s0 + $0x20] sm:$0xff]
    %v107 = vld [vmem:[%s0 + $0x28] sm:$0xff]
    %v108 = vpack.c.bf16 %v103, %v102
    %v109 = vpack.c.bf16 %v105, %v104
    %v110 = vpack.c.bf16 %v107, %v106
    %v111 = vld [vmem:[%s1] sm:$0xff]
    %v112 = vld [vmem:[%s1 + $0x8] sm:$0xff]
    %v113 = vld [vmem:[%s1 + $0x10] sm:$0x33]
    %v114 = vld [vmem:[%s1 + $0x18] sm:$0x33]
    %v115 = vld [vmem:[%s2] sm:$0xff]
    %v116 = vld [vmem:[%s2 + $0x8] sm:$0xff]
    %v117 = vld [vmem:[%s2 + $0x10] sm:$0x33]
    %v118 = vld [vmem:[%s2 + $0x18] sm:$0x33]
    %v119 = vld [vmem:[#allocation4] sm:$0xff]
    %v120 = vld [vmem:[#allocation4 + $0x8] sm:$0xff]
    %v121 = vld [vmem:[#allocation4 + $0x10] sm:$0xff]
    %v122 = vld [vmem:[#allocation4 + $0x18] sm:$0xff]
    %v123 = vld [vmem:[#allocation4 + $0x20] sm:$0xff]
    %v124 = vld [vmem:[#allocation4 + $0x28] sm:$0xff]
    %v125 = vld [vmem:[#allocation4 + $0x30] sm:$0xff]
    %v126 = vld [vmem:[#allocation4 + $0x38] sm:$0xff]
    %v127 = vld [vmem:[#allocation4 + $0x40] sm:$0xff]
    %v128 = vld [vmem:[#allocation4 + $0x48] sm:$0xff]
    %v129 = vld [vmem:[#allocation4 + $0x50] sm:$0xff]
    %v130 = vld [vmem:[#allocation4 + $0x58] sm:$0xff]
    %v131 = vld [vmem:[#allocation4 + $0x60] sm:$0xff]
    %v132 = vld [vmem:[#allocation4 + $0x68] sm:$0xff]
    %v133 = vld [vmem:[#allocation4 + $0x70] sm:$0xff]
    %v134 = vld [vmem:[#allocation4 + $0x78] sm:$0xff]
    %v135 = vld [vmem:[#allocation4 + $0x80] sm:$0xff]
    %v136 = vld [vmem:[#allocation4 + $0x88] sm:$0xff]
    %v137 = vld [vmem:[#allocation4 + $0x90] sm:$0xff]
    %v138 = vld [vmem:[#allocation4 + $0x98] sm:$0xff]
    %v139 = vld [vmem:[#allocation4 + $0xa0] sm:$0xff]
    %v140 = vld [vmem:[#allocation4 + $0xa8] sm:$0xff]
    %v141 = vld [vmem:[#allocation4 + $0xb0] sm:$0xff]
    %v142 = vld [vmem:[#allocation4 + $0xb8] sm:$0xff]
    %v143 = vld [vmem:[#allocation4 + $0xc0] sm:$0xff]
    %v144 = vld [vmem:[#allocation4 + $0xc8] sm:$0xff]
    %v145 = vld [vmem:[#allocation4 + $0xd0] sm:$0xff]
    %v146 = vld [vmem:[#allocation4 + $0xd8] sm:$0xff]
    %v147 = vld [vmem:[#allocation4 + $0xe0] sm:$0xff]
    %v148 = vld [vmem:[#allocation4 + $0xe8] sm:$0xff]
    %v149 = vld [vmem:[#allocation4 + $0xf0] sm:$0xff]
    %v150 = vld [vmem:[#allocation4 + $0xf8] sm:$0xff]
    %v151 = vld [vmem:[%s4] sm:$0xf]
    %v153 = vperm.slane %v151, 0
    %v154 = vperm.slane %v151, 1
    %v155 = vperm.slane %v151, 2
    %v156 = vperm.slane %v151, 3
    %v165 = vunpack.c.l.b16 %v111
    %v166 = vunpack.c.h.b16 %v111
    %v167 = vunpack.c.l.b16 %v112
    %v168 = vunpack.c.h.b16 %v112
    %v169 = vunpack.c.l.b16 %v113
    %v170 = vunpack.c.h.b16 %v113
    %v171 = vunpack.c.l.b16 %v114
    %v172 = vunpack.c.h.b16 %v114
    %v173 = vpack.c.b16 %v169, %v165
    %v174 = vpack.c.b16 %v170, %v166
    %v175 = vpack.c.b16 %v171, %v167
    %v176 = vpack.c.b16 %v172, %v168
    %vm177 = vcmask 97280
    %v179 = vsel %vm177, %v108, 0
    %v182 = vsel %vm177, %v109, 0
    %v185 = vsel %vm177, %v110, 0
    %vm187 = vcmask 1045504
    %v189 = vsel %vm187, %v173, 0
    %v192 = vsel %vm187, %v174, 0
    %v195 = vsel %vm187, %v175, 0
    %v198 = vsel %vm187, %v176, 0
    %200 = vmatpush.bf16.msra.mxu0 0
    %201 = vmatpush.bf16.msra.mxu0 0
    %202 = vmatpush.bf16.msra.mxu0 0
    %203 = vmatpush.bf16.msra.mxu0 0
    %204 = vmatpush.bf16.msra.mxu0 0
    %205 = vmatpush.bf16.msra.mxu0 0
    %206 = vmatpush.bf16.msra.mxu0 0
    %207 = vmatpush.bf16.msra.mxu0 %v189
    %208 = vmatmul.bf16.gmra.mxu0 %v179
    %v209 = vpop.f32.mrf.mxu0
    %v210 = vadd.f32 %v153, %v209
    %v211 = vpop.f32.mrf.mxu0
    %v212 = vadd.f32 %v153, %v211
    %213 = vmatmul.bf16.gmra.mxu0 %v182
    %v214 = vpop.f32.mrf.mxu0
    %v215 = vadd.f32 %v153, %v214
    %v216 = vpop.f32.mrf.mxu0
    %v217 = vadd.f32 %v153, %v216
    %218 = vmatmul.bf16.gmra.mxu0 %v185
    %v219 = vpop.f32.mrf.mxu0
    %v220 = vadd.f32 %v153, %v219
    %v221 = vpop.f32.mrf.mxu0
    %v222 = vadd.f32 %v153, %v221
    %223 = vdwg.mxu0
    %224 = vmatpush.bf16.msra.mxu0 0
    %225 = vmatpush.bf16.msra.mxu0 0
    %226 = vmatpush.bf16.msra.mxu0 0
    %227 = vmatpush.bf16.msra.mxu0 0
    %228 = vmatpush.bf16.msra.mxu0 0
    %229 = vmatpush.bf16.msra.mxu0 0
    %230 = vmatpush.bf16.msra.mxu0 0
    %231 = vmatpush.bf16.msra.mxu0 %v192
    %232 = vmatmul.bf16.gmra.mxu0 %v179
    %v233 = vpop.f32.mrf.mxu0
    %v234 = vadd.f32 %v154, %v233
    %v235 = vpop.f32.mrf.mxu0
    %v236 = vadd.f32 %v154, %v235
    %237 = vmatmul.bf16.gmra.mxu0 %v182
    %v238 = vpop.f32.mrf.mxu0
    %v239 = vadd.f32 %v154, %v238
    %v240 = vpop.f32.mrf.mxu0
    %v241 = vadd.f32 %v154, %v240
    %242 = vmatmul.bf16.gmra.mxu0 %v185
    %v243 = vpop.f32.mrf.mxu0
    %v244 = vadd.f32 %v154, %v243
    %v245 = vpop.f32.mrf.mxu0
    %v246 = vadd.f32 %v154, %v245
    %247 = vdwg.mxu0
    %248 = vmatpush.bf16.msra.mxu0 0
    %249 = vmatpush.bf16.msra.mxu0 0
    %250 = vmatpush.bf16.msra.mxu0 0
    %251 = vmatpush.bf16.msra.mxu0 0
    %252 = vmatpush.bf16.msra.mxu0 0
    %253 = vmatpush.bf16.msra.mxu0 0
    %254 = vmatpush.bf16.msra.mxu0 0
    %255 = vmatpush.bf16.msra.mxu0 %v195
    %256 = vmatmul.bf16.gmra.mxu0 %v179
    %v257 = vpop.f32.mrf.mxu0
    %v258 = vadd.f32 %v155, %v257
    %v259 = vpop.f32.mrf.mxu0
    %v260 = vadd.f32 %v155, %v259
    %261 = vmatmul.bf16.gmra.mxu0 %v182
    %v262 = vpop.f32.mrf.mxu0
    %v263 = vadd.f32 %v155, %v262
    %v264 = vpop.f32.mrf.mxu0
    %v265 = vadd.f32 %v155, %v264
    %266 = vmatmul.bf16.gmra.mxu0 %v185
    %v267 = vpop.f32.mrf.mxu0
    %v268 = vadd.f32 %v155, %v267
    %v269 = vpop.f32.mrf.mxu0
    %v270 = vadd.f32 %v155, %v269
    %271 = vdwg.mxu0
    %272 = vmatpush.bf16.msra.mxu0 0
    %273 = vmatpush.bf16.msra.mxu0 0
    %274 = vmatpush.bf16.msra.mxu0 0
    %275 = vmatpush.bf16.msra.mxu0 0
    %276 = vmatpush.bf16.msra.mxu0 0
    %277 = vmatpush.bf16.msra.mxu0 0
    %278 = vmatpush.bf16.msra.mxu0 0
    %279 = vmatpush.bf16.msra.mxu0 %v198
    %280 = vmatmul.bf16.gmra.mxu0 %v179
    %v281 = vpop.f32.mrf.mxu0
    %v282 = vadd.f32 %v156, %v281
    %v283 = vpop.f32.mrf.mxu0
    %v284 = vadd.f32 %v156, %v283
    %285 = vmatmul.bf16.gmra.mxu0 %v182
    %v286 = vpop.f32.mrf.mxu0
    %v287 = vadd.f32 %v156, %v286
    %v288 = vpop.f32.mrf.mxu0
    %v289 = vadd.f32 %v156, %v288
    %290 = vmatmul.bf16.gmra.mxu0 %v185
    %v291 = vpop.f32.mrf.mxu0
    %v292 = vadd.f32 %v156, %v291
    %v293 = vpop.f32.mrf.mxu0
    %v294 = vadd.f32 %v156, %v293
    %295 = vdwg.mxu0
    %296 = vst [vmem:[#allocation2] sm:$0xff] %v210
    %297 = vst [vmem:[#allocation2 + $0x8] sm:$0xff] %v234
    %298 = vst [vmem:[#allocation2 + $0x10] sm:$0xff] %v258
    %299 = vst [vmem:[#allocation2 + $0x18] sm:$0xff] %v282
    %300 = vst [vmem:[#allocation2 + $0x20] sm:$0xff] %v212
    %301 = vst [vmem:[#allocation2 + $0x28] sm:$0xff] %v236
    %302 = vst [vmem:[#allocation2 + $0x30] sm:$0xff] %v260
    %303 = vst [vmem:[#allocation2 + $0x38] sm:$0xff] %v284
    %304 = vst [vmem:[#allocation2 + $0x40] sm:$0xff] %v215
    %305 = vst [vmem:[#allocation2 + $0x48] sm:$0xff] %v239
    %306 = vst [vmem:[#allocation2 + $0x50] sm:$0xff] %v263
    %307 = vst [vmem:[#allocation2 + $0x58] sm:$0xff] %v287
    %308 = vst [vmem:[#allocation2 + $0x60] sm:$0xff] %v217
    %309 = vst [vmem:[#allocation2 + $0x68] sm:$0xff] %v241
    %310 = vst [vmem:[#allocation2 + $0x70] sm:$0xff] %v265
    %311 = vst [vmem:[#allocation2 + $0x78] sm:$0xff] %v289
    %312 = vst [vmem:[#allocation2 + $0x80] sm:$0xff] %v220
    %313 = vst [vmem:[#allocation2 + $0x88] sm:$0xff] %v244
    %314 = vst [vmem:[#allocation2 + $0x90] sm:$0xff] %v268
    %315 = vst [vmem:[#allocation2 + $0x98] sm:$0xff] %v292
    %316 = vst [vmem:[#allocation2 + $0xa0] sm:$0xff] %v222
    %317 = vst [vmem:[#allocation2 + $0xa8] sm:$0xff] %v246
    %318 = vst [vmem:[#allocation2 + $0xb0] sm:$0xff] %v270
    %319 = vst [vmem:[#allocation2 + $0xb8] sm:$0xff] %v294
    %v324 = vunpack.c.l.b16 %v115
    %v325 = vunpack.c.h.b16 %v115
    %v326 = vunpack.c.l.b16 %v116
    %v327 = vunpack.c.h.b16 %v116
    %v328 = vunpack.c.l.b16 %v117
    %v329 = vunpack.c.h.b16 %v117
    %v330 = vunpack.c.l.b16 %v118
    %v331 = vunpack.c.h.b16 %v118
    %v332 = vpack.c.b16 %v328, %v324
    %v333 = vpack.c.b16 %v329, %v325
    %v334 = vpack.c.b16 %v330, %v326
    %v335 = vpack.c.b16 %v331, %v327
    %v337 = vsel %vm187, %v332, 0
    %v340 = vsel %vm187, %v333, 0
    %v343 = vsel %vm187, %v334, 0
    %v346 = vsel %vm187, %v335, 0
    %348 = vmatpush.bf16.msra.mxu0 0
    %349 = vmatpush.bf16.msra.mxu0 0
    %350 = vmatpush.bf16.msra.mxu0 0
    %351 = vmatpush.bf16.msra.mxu0 0
    %352 = vmatpush.bf16.msra.mxu0 0
    %353 = vmatpush.bf16.msra.mxu0 0
    %354 = vmatpush.bf16.msra.mxu0 0
    %355 = vmatpush.bf16.msra.mxu0 %v337
    %356 = vmatmul.bf16.gmra.mxu0 %v179
    %v357 = vpop.f32.mrf.mxu0
    %v358 = vadd.f32 0.0, %v357
    %v359 = vpop.f32.mrf.mxu0
    %v360 = vadd.f32 0.0, %v359
    %361 = vmatmul.bf16.gmra.mxu0 %v182
    %v362 = vpop.f32.mrf.mxu0
    %v363 = vadd.f32 0.0, %v362
    %v364 = vpop.f32.mrf.mxu0
    %v365 = vadd.f32 0.0, %v364
    %366 = vmatmul.bf16.gmra.mxu0 %v185
    %v367 = vpop.f32.mrf.mxu0
    %v368 = vadd.f32 0.0, %v367
    %v369 = vpop.f32.mrf.mxu0
    %v370 = vadd.f32 0.0, %v369
    %371 = vdwg.mxu0
    %372 = vmatpush.bf16.msra.mxu0 0
    %373 = vmatpush.bf16.msra.mxu0 0
    %374 = vmatpush.bf16.msra.mxu0 0
    %375 = vmatpush.bf16.msra.mxu0 0
    %376 = vmatpush.bf16.msra.mxu0 0
    %377 = vmatpush.bf16.msra.mxu0 0
    %378 = vmatpush.bf16.msra.mxu0 0
    %379 = vmatpush.bf16.msra.mxu0 %v340
    %380 = vmatmul.bf16.gmra.mxu0 %v179
    %v381 = vpop.f32.mrf.mxu0
    %v382 = vadd.f32 0.0, %v381
    %v383 = vpop.f32.mrf.mxu0
    %v384 = vadd.f32 0.0, %v383
    %385 = vmatmul.bf16.gmra.mxu0 %v182
    %v386 = vpop.f32.mrf.mxu0
    %v387 = vadd.f32 0.0, %v386
    %v388 = vpop.f32.mrf.mxu0
    %v389 = vadd.f32 0.0, %v388
    %390 = vmatmul.bf16.gmra.mxu0 %v185
    %v391 = vpop.f32.mrf.mxu0
    %v392 = vadd.f32 0.0, %v391
    %v393 = vpop.f32.mrf.mxu0
    %v394 = vadd.f32 0.0, %v393
    %395 = vdwg.mxu0
    %396 = vmatpush.bf16.msra.mxu0 0
    %397 = vmatpush.bf16.msra.mxu0 0
    %398 = vmatpush.bf16.msra.mxu0 0
    %399 = vmatpush.bf16.msra.mxu0 0
    %400 = vmatpush.bf16.msra.mxu0 0
    %401 = vmatpush.bf16.msra.mxu0 0
    %402 = vmatpush.bf16.msra.mxu0 0
    %403 = vmatpush.bf16.msra.mxu0 %v343
    %404 = vmatmul.bf16.gmra.mxu0 %v179
    %v405 = vpop.f32.mrf.mxu0
    %v406 = vadd.f32 0.0, %v405
    %v407 = vpop.f32.mrf.mxu0
    %v408 = vadd.f32 0.0, %v407
    %409 = vmatmul.bf16.gmra.mxu0 %v182
    %v410 = vpop.f32.mrf.mxu0
    %v411 = vadd.f32 0.0, %v410
    %v412 = vpop.f32.mrf.mxu0
    %v413 = vadd.f32 0.0, %v412
    %414 = vmatmul.bf16.gmra.mxu0 %v185
    %v415 = vpop.f32.mrf.mxu0
    %v416 = vadd.f32 0.0, %v415
    %v417 = vpop.f32.mrf.mxu0
    %v418 = vadd.f32 0.0, %v417
    %419 = vdwg.mxu0
    %420 = vmatpush.bf16.msra.mxu0 0
    %421 = vmatpush.bf16.msra.mxu0 0
    %422 = vmatpush.bf16.msra.mxu0 0
    %423 = vmatpush.bf16.msra.mxu0 0
    %424 = vmatpush.bf16.msra.mxu0 0
    %425 = vmatpush.bf16.msra.mxu0 0
    %426 = vmatpush.bf16.msra.mxu0 0
    %427 = vmatpush.bf16.msra.mxu0 %v346
    %428 = vmatmul.bf16.gmra.mxu0 %v179
    %v429 = vpop.f32.mrf.mxu0
    %v430 = vadd.f32 0.0, %v429
    %v431 = vpop.f32.mrf.mxu0
    %v432 = vadd.f32 0.0, %v431
    %433 = vmatmul.bf16.gmra.mxu0 %v182
    %v434 = vpop.f32.mrf.mxu0
    %v435 = vadd.f32 0.0, %v434
    %v436 = vpop.f32.mrf.mxu0
    %v437 = vadd.f32 0.0, %v436
    %438 = vmatmul.bf16.gmra.mxu0 %v185
    %v439 = vpop.f32.mrf.mxu0
    %v440 = vadd.f32 0.0, %v439
    %v441 = vpop.f32.mrf.mxu0
    %v442 = vadd.f32 0.0, %v441
    %443 = vdwg.mxu0
    %444 = vst [vmem:[#allocation3] sm:$0xff] %v358
    %445 = vst [vmem:[#allocation3 + $0x8] sm:$0xff] %v382
    %446 = vst [vmem:[#allocation3 + $0x10] sm:$0xff] %v406
    %447 = vst [vmem:[#allocation3 + $0x18] sm:$0xff] %v430
    %448 = vst [vmem:[#allocation3 + $0x20] sm:$0xff] %v360
    %449 = vst [vmem:[#allocation3 + $0x28] sm:$0xff] %v384
    %450 = vst [vmem:[#allocation3 + $0x30] sm:$0xff] %v408
    %451 = vst [vmem:[#allocation3 + $0x38] sm:$0xff] %v432
    %452 = vst [vmem:[#allocation3 + $0x40] sm:$0xff] %v363
    %453 = vst [vmem:[#allocation3 + $0x48] sm:$0xff] %v387
    %454 = vst [vmem:[#allocation3 + $0x50] sm:$0xff] %v411
    %455 = vst [vmem:[#allocation3 + $0x58] sm:$0xff] %v435
    %456 = vst [vmem:[#allocation3 + $0x60] sm:$0xff] %v365
    %457 = vst [vmem:[#allocation3 + $0x68] sm:$0xff] %v389
    %458 = vst [vmem:[#allocation3 + $0x70] sm:$0xff] %v413
    %459 = vst [vmem:[#allocation3 + $0x78] sm:$0xff] %v437
    %460 = vst [vmem:[#allocation3 + $0x80] sm:$0xff] %v368
    %461 = vst [vmem:[#allocation3 + $0x88] sm:$0xff] %v392
    %462 = vst [vmem:[#allocation3 + $0x90] sm:$0xff] %v416
    %463 = vst [vmem:[#allocation3 + $0x98] sm:$0xff] %v440
    %464 = vst [vmem:[#allocation3 + $0xa0] sm:$0xff] %v370
    %465 = vst [vmem:[#allocation3 + $0xa8] sm:$0xff] %v394
    %466 = vst [vmem:[#allocation3 + $0xb0] sm:$0xff] %v418
    %467 = vst [vmem:[#allocation3 + $0xb8] sm:$0xff] %v442
    %v468 = vld [vmem:[#allocation2] sm:$0xf]
    %v469 = vld [vmem:[#allocation2 + $0x8] sm:$0xf]
    %v470 = vld [vmem:[#allocation2 + $0x10] sm:$0xf]
    %v471 = vld [vmem:[#allocation2 + $0x18] sm:$0xf]
    %v472 = vld [vmem:[#allocation3 + $0xa0] sm:$0xf0]
    %v473 = vld [vmem:[#allocation3 + $0xa8] sm:$0xf0]
    %v474 = vld [vmem:[#allocation3 + $0xb0] sm:$0xf0]
    %v475 = vld [vmem:[#allocation3 + $0xb8] sm:$0xf0]
    %v480 = vrot.slane %v472, 4
    %v481 = vrot.slane %v473, 4
    %v482 = vrot.slane %v474, 4
    %v483 = vrot.slane %v475, 4
    %v488 = vadd.f32 %v468, %v480
    %v489 = vadd.f32 %v469, %v481
    %v490 = vadd.f32 %v470, %v482
    %v491 = vadd.f32 %v471, %v483
    %v524 = vunpack.c.l.b16 %v119
    %v525 = vunpack.c.h.b16 %v119
    %v526 = vunpack.c.l.b16 %v120
    %v527 = vunpack.c.h.b16 %v120
    %v528 = vunpack.c.l.b16 %v121
    %v529 = vunpack.c.h.b16 %v121
    %v530 = vunpack.c.l.b16 %v122
    %v531 = vunpack.c.h.b16 %v122
    %v532 = vunpack.c.l.b16 %v123
    %v533 = vunpack.c.h.b16 %v123
    %v534 = vunpack.c.l.b16 %v124
    %v535 = vunpack.c.h.b16 %v124
    %v536 = vunpack.c.l.b16 %v125
    %v537 = vunpack.c.h.b16 %v125
    %v538 = vunpack.c.l.b16 %v126
    %v539 = vunpack.c.h.b16 %v126
    %v540 = vunpack.c.l.b16 %v127
    %v541 = vunpack.c.h.b16 %v127
    %v542 = vunpack.c.l.b16 %v128
    %v543 = vunpack.c.h.b16 %v128
    %v544 = vunpack.c.l.b16 %v129
    %v545 = vunpack.c.h.b16 %v129
    %v546 = vunpack.c.l.b16 %v130
    %v547 = vunpack.c.h.b16 %v130
    %v548 = vunpack.c.l.b16 %v131
    %v549 = vunpack.c.h.b16 %v131
    %v550 = vunpack.c.l.b16 %v132
    %v551 = vunpack.c.h.b16 %v132
    %v552 = vunpack.c.l.b16 %v133
    %v553 = vunpack.c.h.b16 %v133
    %v554 = vunpack.c.l.b16 %v134
    %v555 = vunpack.c.h.b16 %v134
    %v556 = vunpack.c.l.b16 %v135
    %v557 = vunpack.c.h.b16 %v135
    %v558 = vunpack.c.l.b16 %v136
    %v559 = vunpack.c.h.b16 %v136
    %v560 = vunpack.c.l.b16 %v137
    %v561 = vunpack.c.h.b16 %v137
    %v562 = vunpack.c.l.b16 %v138
    %v563 = vunpack.c.h.b16 %v138
    %v564 = vunpack.c.l.b16 %v139
    %v565 = vunpack.c.h.b16 %v139
    %v566 = vunpack.c.l.b16 %v140
    %v567 = vunpack.c.h.b16 %v140
    %v568 = vunpack.c.l.b16 %v141
    %v569 = vunpack.c.h.b16 %v141
    %v570 = vunpack.c.l.b16 %v142
    %v571 = vunpack.c.h.b16 %v142
    %v572 = vunpack.c.l.b16 %v143
    %v573 = vunpack.c.h.b16 %v143
    %v574 = vunpack.c.l.b16 %v144
    %v575 = vunpack.c.h.b16 %v144
    %v576 = vunpack.c.l.b16 %v145
    %v577 = vunpack.c.h.b16 %v145
    %v578 = vunpack.c.l.b16 %v146
    %v579 = vunpack.c.h.b16 %v146
    %v580 = vunpack.c.l.b16 %v147
    %v581 = vunpack.c.h.b16 %v147
    %v582 = vunpack.c.l.b16 %v148
    %v583 = vunpack.c.h.b16 %v148
    %v584 = vunpack.c.l.b16 %v149
    %v585 = vunpack.c.h.b16 %v149
    %v586 = vunpack.c.l.b16 %v150
    %v587 = vunpack.c.h.b16 %v150
    %v588 = vpack.c.b16 %v528, %v524
    %v589 = vpack.c.b16 %v529, %v525
    %v590 = vpack.c.b16 %v530, %v526
    %v591 = vpack.c.b16 %v531, %v527
    %v592 = vpack.c.b16 %v536, %v532
    %v593 = vpack.c.b16 %v537, %v533
    %v594 = vpack.c.b16 %v538, %v534
    %v595 = vpack.c.b16 %v539, %v535
    %v596 = vpack.c.b16 %v544, %v540
    %v597 = vpack.c.b16 %v545, %v541
    %v598 = vpack.c.b16 %v546, %v542
    %v599 = vpack.c.b16 %v547, %v543
    %v600 = vpack.c.b16 %v552, %v548
    %v601 = vpack.c.b16 %v553, %v549
    %v602 = vpack.c.b16 %v554, %v550
    %v603 = vpack.c.b16 %v555, %v551
    %v604 = vpack.c.b16 %v560, %v556
    %v605 = vpack.c.b16 %v561, %v557
    %v606 = vpack.c.b16 %v562, %v558
    %v607 = vpack.c.b16 %v563, %v559
    %v608 = vpack.c.b16 %v568, %v564
    %v609 = vpack.c.b16 %v569, %v565
    %v610 = vpack.c.b16 %v570, %v566
    %v611 = vpack.c.b16 %v571, %v567
    %v612 = vpack.c.b16 %v576, %v572
    %v613 = vpack.c.b16 %v577, %v573
    %v614 = vpack.c.b16 %v578, %v574
    %v615 = vpack.c.b16 %v579, %v575
    %v616 = vpack.c.b16 %v584, %v580
    %v617 = vpack.c.b16 %v585, %v581
    %v618 = vpack.c.b16 %v586, %v582
    %v619 = vpack.c.b16 %v587, %v583
    %652 = vmatpush.bf16.msra.mxu0 %v616
    %653 = vmatpush.bf16.msra.mxu0 %v612
    %654 = vmatpush.bf16.msra.mxu0 %v608
    %655 = vmatpush.bf16.msra.mxu0 %v604
    %656 = vmatpush.bf16.msra.mxu0 %v600
    %657 = vmatpush.bf16.msra.mxu0 %v596
    %658 = vmatpush.bf16.msra.mxu0 %v592
    %659 = vmatpush.bf16.msra.mxu0 %v588
    %660 = vmatmul.bf16.gmra.mxu0 0
    %v661 = vpop.f32.mrf.mxu0
    %v662 = vadd.f32 %v488, %v661
    %v663 = vpop.f32.mrf.mxu0
    %664 = vdwg.mxu0
    %665 = vmatpush.bf16.msra.mxu0 %v617
    %666 = vmatpush.bf16.msra.mxu0 %v613
    %667 = vmatpush.bf16.msra.mxu0 %v609
    %668 = vmatpush.bf16.msra.mxu0 %v605
    %669 = vmatpush.bf16.msra.mxu0 %v601
    %670 = vmatpush.bf16.msra.mxu0 %v597
    %671 = vmatpush.bf16.msra.mxu0 %v593
    %672 = vmatpush.bf16.msra.mxu0 %v589
    %673 = vmatmul.bf16.gmra.mxu0 0
    %v674 = vpop.f32.mrf.mxu0
    %v675 = vadd.f32 %v489, %v674
    %v676 = vpop.f32.mrf.mxu0
    %677 = vdwg.mxu0
    %678 = vmatpush.bf16.msra.mxu0 %v618
    %679 = vmatpush.bf16.msra.mxu0 %v614
    %680 = vmatpush.bf16.msra.mxu0 %v610
    %681 = vmatpush.bf16.msra.mxu0 %v606
    %682 = vmatpush.bf16.msra.mxu0 %v602
    %683 = vmatpush.bf16.msra.mxu0 %v598
    %684 = vmatpush.bf16.msra.mxu0 %v594
    %685 = vmatpush.bf16.msra.mxu0 %v590
    %686 = vmatmul.bf16.gmra.mxu0 0
    %v687 = vpop.f32.mrf.mxu0
    %v688 = vadd.f32 %v490, %v687
    %v689 = vpop.f32.mrf.mxu0
    %690 = vdwg.mxu0
    %691 = vmatpush.bf16.msra.mxu0 %v619
    %692 = vmatpush.bf16.msra.mxu0 %v615
    %693 = vmatpush.bf16.msra.mxu0 %v611
    %694 = vmatpush.bf16.msra.mxu0 %v607
    %695 = vmatpush.bf16.msra.mxu0 %v603
    %696 = vmatpush.bf16.msra.mxu0 %v599
    %697 = vmatpush.bf16.msra.mxu0 %v595
    %698 = vmatpush.bf16.msra.mxu0 %v591
    %699 = vmatmul.bf16.gmra.mxu0 0
    %v700 = vpop.f32.mrf.mxu0
    %v701 = vadd.f32 %v491, %v700
    %v702 = vpop.f32.mrf.mxu0
    %703 = vdwg.mxu0
    %v704 = vxor.u32 %v662, 2147483648
    %v705 = vmul.f32 %v704, 1.442695
    %v706 = vpow.pop %v705
    %v707 = vadd.f32 %v706, 1.0
    %v708 = vrcp.pop %v707
    %v709 = vmul.f32 %v707, %v708
    %v710 = vsub.f32 1.0, %v709
    %v711 = vmul.f32 %v708, %v710
    %v712 = vadd.f32 %v708, %v711
    %vm713 = vweird.f32 %v707
    %vm714 = vweird.f32 %v708
    %vm715 = vmor %vm713, %vm714
    %v716 = vsel %vm715, %v708, %v712
    %v717 = vand.u32 2147483647, %v707
    %vm718 = vcmp.eq.f32.partialorder %v717, 8.507059e+37
    %v719 = vand.u32 %v707, 2147483648
    %v720 = vor.u32 1.1754944e-38, %v719
    %v721 = vsel %vm718, %v720, %v716
    %v722 = vmul.f32 1.0, %v721
    %v723 = vxor.u32 %v675, 2147483648
    %v724 = vmul.f32 %v723, 1.442695
    %v725 = vpow.pop %v724
    %v726 = vadd.f32 %v725, 1.0
    %v727 = vrcp.pop %v726
    %v728 = vmul.f32 %v726, %v727
    %v729 = vsub.f32 1.0, %v728
    %v730 = vmul.f32 %v727, %v729
    %v731 = vadd.f32 %v727, %v730
    %vm732 = vweird.f32 %v726
    %vm733 = vweird.f32 %v727
    %vm734 = vmor %vm732, %vm733
    %v735 = vsel %vm734, %v727, %v731
    %v736 = vand.u32 2147483647, %v726
    %vm737 = vcmp.eq.f32.partialorder %v736, 8.507059e+37
    %v738 = vand.u32 %v726, 2147483648
    %v739 = vor.u32 1.1754944e-38, %v738
    %v740 = vsel %vm737, %v739, %v735
    %v741 = vmul.f32 1.0, %v740
    %v742 = vtanh.pop %v688
    %v743 = vxor.u32 %v701, 2147483648
    %v744 = vmul.f32 %v743, 1.442695
    %v745 = vpow.pop %v744
    %v746 = vadd.f32 %v745, 1.0
    %v747 = vrcp.pop %v746
    %v748 = vmul.f32 %v746, %v747
    %v749 = vsub.f32 1.0, %v748
    %v750 = vmul.f32 %v747, %v749
    %v751 = vadd.f32 %v747, %v750
    %vm752 = vweird.f32 %v746
    %vm753 = vweird.f32 %v747
    %vm754 = vmor %vm752, %vm753
    %v755 = vsel %vm754, %v747, %v751
    %v756 = vand.u32 2147483647, %v746
    %vm757 = vcmp.eq.f32.partialorder %v756, 8.507059e+37
    %v758 = vand.u32 %v746, 2147483648
    %v759 = vor.u32 1.1754944e-38, %v758
    %v760 = vsel %vm757, %v759, %v755
    %v761 = vmul.f32 1.0, %v760
    %v762 = vmul.f32 %v741, 0.0
    %v763 = vmul.f32 %v722, %v742
    %v764 = vadd.f32 %v762, %v763
    %v765 = vtanh.pop %v764
    %v766 = vmul.f32 %v761, %v765
    %v767 = vld [vmem:[#allocation2] sm:$0xf0]
    %v768 = vld [vmem:[#allocation2 + $0x8] sm:$0xf0]
    %v769 = vld [vmem:[#allocation2 + $0x10] sm:$0xf0]
    %v770 = vld [vmem:[#allocation2 + $0x18] sm:$0xf0]
    %v771 = vld [vmem:[#allocation3 + $0xa0] sm:$0xf]
    %v772 = vld [vmem:[#allocation3 + $0xa8] sm:$0xf]
    %v773 = vld [vmem:[#allocation3 + $0xb0] sm:$0xf]
    %v774 = vld [vmem:[#allocation3 + $0xb8] sm:$0xf]
    %v779 = vrot.slane %v771, 4
    %v780 = vrot.slane %v772, 4
    %v781 = vrot.slane %v773, 4
    %v782 = vrot.slane %v774, 4
    %v787 = vadd.f32 %v767, %v779
    %v788 = vadd.f32 %v768, %v780
    %v789 = vadd.f32 %v769, %v781
    %v790 = vadd.f32 %v770, %v782
    %v791 = vpack.c.bf16 %v766, %v766
    %v796 = vrot.slane %v787, 4
    %v797 = vrot.slane %v788, 4
    %v798 = vrot.slane %v789, 4
    %v799 = vrot.slane %v790, 4
    %804 = vmatpush.bf16.msra.mxu0 %v616
    %805 = vmatpush.bf16.msra.mxu0 %v612
    %806 = vmatpush.bf16.msra.mxu0 %v608
    %807 = vmatpush.bf16.msra.mxu0 %v604
    %808 = vmatpush.bf16.msra.mxu0 %v600
    %809 = vmatpush.bf16.msra.mxu0 %v596
    %810 = vmatpush.bf16.msra.mxu0 %v592
    %811 = vmatpush.bf16.msra.mxu0 %v588
    %812 = vmatmul.bf16.gmra.mxu0 %v791
    %v813 = vpop.f32.mrf.mxu0
    %v814 = vadd.f32 %v796, %v813
    %v815 = vpop.f32.mrf.mxu0
    %816 = vdwg.mxu0
    %817 = vmatpush.bf16.msra.mxu0 %v617
    %818 = vmatpush.bf16.msra.mxu0 %v613
    %819 = vmatpush.bf16.msra.mxu0 %v609
    %820 = vmatpush.bf16.msra.mxu0 %v605
    %821 = vmatpush.bf16.msra.mxu0 %v601
    %822 = vmatpush.bf16.msra.mxu0 %v597
    %823 = vmatpush.bf16.msra.mxu0 %v593
    %824 = vmatpush.bf16.msra.mxu0 %v589
    %825 = vmatmul.bf16.gmra.mxu0 %v791
    %v826 = vpop.f32.mrf.mxu0
    %v827 = vadd.f32 %v797, %v826
    %v828 = vpop.f32.mrf.mxu0
    %829 = vdwg.mxu0
    %830 = vmatpush.bf16.msra.mxu0 %v618
    %831 = vmatpush.bf16.msra.mxu0 %v614
    %832 = vmatpush.bf16.msra.mxu0 %v610
    %833 = vmatpush.bf16.msra.mxu0 %v606
    %834 = vmatpush.bf16.msra.mxu0 %v602
    %835 = vmatpush.bf16.msra.mxu0 %v598
    %836 = vmatpush.bf16.msra.mxu0 %v594
    %837 = vmatpush.bf16.msra.mxu0 %v590
    %838 = vmatmul.bf16.gmra.mxu0 %v791
    %v839 = vpop.f32.mrf.mxu0
    %v840 = vadd.f32 %v798, %v839
    %v841 = vpop.f32.mrf.mxu0
    %842 = vdwg.mxu0
    %843 = vmatpush.bf16.msra.mxu0 %v619
    %844 = vmatpush.bf16.msra.mxu0 %v615
    %845 = vmatpush.bf16.msra.mxu0 %v611
    %846 = vmatpush.bf16.msra.mxu0 %v607
    %847 = vmatpush.bf16.msra.mxu0 %v603
    %848 = vmatpush.bf16.msra.mxu0 %v599
    %849 = vmatpush.bf16.msra.mxu0 %v595
    %850 = vmatpush.bf16.msra.mxu0 %v591
    %851 = vmatmul.bf16.gmra.mxu0 %v791
    %v852 = vpop.f32.mrf.mxu0
    %v853 = vadd.f32 %v799, %v852
    %v854 = vpop.f32.mrf.mxu0
    %855 = vdwg.mxu0
    %v856 = vxor.u32 %v814, 2147483648
    %v857 = vmul.f32 %v856, 1.442695
    %v858 = vpow.pop %v857
    %v859 = vadd.f32 %v858, 1.0
    %v860 = vrcp.pop %v859
    %v861 = vmul.f32 %v859, %v860
    %v862 = vsub.f32 1.0, %v861
    %v863 = vmul.f32 %v860, %v862
    %v864 = vadd.f32 %v860, %v863
    %vm865 = vweird.f32 %v859
    %vm866 = vweird.f32 %v860
    %vm867 = vmor %vm865, %vm866
    %v868 = vsel %vm867, %v860, %v864
    %v869 = vand.u32 2147483647, %v859
    %vm870 = vcmp.eq.f32.partialorder %v869, 8.507059e+37
    %v871 = vand.u32 %v859, 2147483648
    %v872 = vor.u32 1.1754944e-38, %v871
    %v873 = vsel %vm870, %v872, %v868
    %v874 = vmul.f32 1.0, %v873
    %v875 = vxor.u32 %v827, 2147483648
    %v876 = vmul.f32 %v875, 1.442695
    %v877 = vpow.pop %v876
    %v878 = vadd.f32 %v877, 1.0
    %v879 = vrcp.pop %v878
    %v880 = vmul.f32 %v878, %v879
    %v881 = vsub.f32 1.0, %v880
    %v882 = vmul.f32 %v879, %v881
    %v883 = vadd.f32 %v879, %v882
    %vm884 = vweird.f32 %v878
    %vm885 = vweird.f32 %v879
    %vm886 = vmor %vm884, %vm885
    %v887 = vsel %vm886, %v879, %v883
    %v888 = vand.u32 2147483647, %v878
    %vm889 = vcmp.eq.f32.partialorder %v888, 8.507059e+37
    %v890 = vand.u32 %v878, 2147483648
    %v891 = vor.u32 1.1754944e-38, %v890
    %v892 = vsel %vm889, %v891, %v887
    %v893 = vmul.f32 1.0, %v892
    %v894 = vtanh.pop %v840
    %v895 = vxor.u32 %v853, 2147483648
    %v896 = vmul.f32 %v895, 1.442695
    %v897 = vpow.pop %v896
    %v898 = vadd.f32 %v897, 1.0
    %v899 = vrcp.pop %v898
    %v900 = vmul.f32 %v898, %v899
    %v901 = vsub.f32 1.0, %v900
    %v902 = vmul.f32 %v899, %v901
    %v903 = vadd.f32 %v899, %v902
    %vm904 = vweird.f32 %v898
    %vm905 = vweird.f32 %v899
    %vm906 = vmor %vm904, %vm905
    %v907 = vsel %vm906, %v899, %v903
    %v908 = vand.u32 2147483647, %v898
    %vm909 = vcmp.eq.f32.partialorder %v908, 8.507059e+37
    %v910 = vand.u32 %v898, 2147483648
    %v911 = vor.u32 1.1754944e-38, %v910
    %v912 = vsel %vm909, %v911, %v907
    %v913 = vmul.f32 1.0, %v912
    %v914 = vmul.f32 %v893, %v764
    %v915 = vmul.f32 %v874, %v894
    %v916 = vadd.f32 %v914, %v915
    %v917 = vtanh.pop %v916
    %v918 = vmul.f32 %v913, %v917
    %v919 = vld [vmem:[#allocation2 + $0x20] sm:$0xf]
    %v920 = vld [vmem:[#allocation2 + $0x28] sm:$0xf]
    %v921 = vld [vmem:[#allocation2 + $0x30] sm:$0xf]
    %v922 = vld [vmem:[#allocation2 + $0x38] sm:$0xf]
    %v923 = vld [vmem:[#allocation3 + $0x80] sm:$0xf0]
    %v924 = vld [vmem:[#allocation3 + $0x88] sm:$0xf0]
    %v925 = vld [vmem:[#allocation3 + $0x90] sm:$0xf0]
    %v926 = vld [vmem:[#allocation3 + $0x98] sm:$0xf0]
    %v931 = vrot.slane %v923, 4
    %v932 = vrot.slane %v924, 4
    %v933 = vrot.slane %v925, 4
    %v934 = vrot.slane %v926, 4
    %v939 = vadd.f32 %v919, %v931
    %v940 = vadd.f32 %v920, %v932
    %v941 = vadd.f32 %v921, %v933
    %v942 = vadd.f32 %v922, %v934
    %v943 = vpack.c.bf16 %v918, %v918
    %944 = vmatpush.bf16.msra.mxu0 %v616
    %945 = vmatpush.bf16.msra.mxu0 %v612
    %946 = vmatpush.bf16.msra.mxu0 %v608
    %947 = vmatpush.bf16.msra.mxu0 %v604
    %948 = vmatpush.bf16.msra.mxu0 %v600
    %949 = vmatpush.bf16.msra.mxu0 %v596
    %950 = vmatpush.bf16.msra.mxu0 %v592
    %951 = vmatpush.bf16.msra.mxu0 %v588
    %952 = vmatmul.bf16.gmra.mxu0 %v943
    %v953 = vpop.f32.mrf.mxu0
    %v954 = vadd.f32 %v939, %v953
    %v955 = vpop.f32.mrf.mxu0
    %956 = vdwg.mxu0
    %957 = vmatpush.bf16.msra.mxu0 %v617
    %958 = vmatpush.bf16.msra.mxu0 %v613
    %959 = vmatpush.bf16.msra.mxu0 %v609
    %960 = vmatpush.bf16.msra.mxu0 %v605
    %961 = vmatpush.bf16.msra.mxu0 %v601
    %962 = vmatpush.bf16.msra.mxu0 %v597
    %963 = vmatpush.bf16.msra.mxu0 %v593
    %964 = vmatpush.bf16.msra.mxu0 %v589
    %965 = vmatmul.bf16.gmra.mxu0 %v943
    %v966 = vpop.f32.mrf.mxu0
    %v967 = vadd.f32 %v940, %v966
    %v968 = vpop.f32.mrf.mxu0
    %969 = vdwg.mxu0
    %970 = vmatpush.bf16.msra.mxu0 %v618
    %971 = vmatpush.bf16.msra.mxu0 %v614
    %972 = vmatpush.bf16.msra.mxu0 %v610
    %973 = vmatpush.bf16.msra.mxu0 %v606
    %974 = vmatpush.bf16.msra.mxu0 %v602
    %975 = vmatpush.bf16.msra.mxu0 %v598
    %976 = vmatpush.bf16.msra.mxu0 %v594
    %977 = vmatpush.bf16.msra.mxu0 %v590
    %978 = vmatmul.bf16.gmra.mxu0 %v943
    %v979 = vpop.f32.mrf.mxu0
    %v980 = vadd.f32 %v941, %v979
    %v981 = vpop.f32.mrf.mxu0
    %982 = vdwg.mxu0
    %983 = vmatpush.bf16.msra.mxu0 %v619
    %984 = vmatpush.bf16.msra.mxu0 %v615
    %985 = vmatpush.bf16.msra.mxu0 %v611
    %986 = vmatpush.bf16.msra.mxu0 %v607
    %987 = vmatpush.bf16.msra.mxu0 %v603
    %988 = vmatpush.bf16.msra.mxu0 %v599
    %989 = vmatpush.bf16.msra.mxu0 %v595
    %990 = vmatpush.bf16.msra.mxu0 %v591
    %991 = vmatmul.bf16.gmra.mxu0 %v943
    %v992 = vpop.f32.mrf.mxu0
    %v993 = vadd.f32 %v942, %v992
    %v994 = vpop.f32.mrf.mxu0
    %995 = vdwg.mxu0
    %v996 = vxor.u32 %v954, 2147483648
    %v997 = vmul.f32 %v996, 1.442695
    %v998 = vpow.pop %v997
    %v999 = vadd.f32 %v998, 1.0
    %v1000 = vrcp.pop %v999
    %v1001 = vmul.f32 %v999, %v1000
    %v1002 = vsub.f32 1.0, %v1001
    %v1003 = vmul.f32 %v1000, %v1002
    %v1004 = vadd.f32 %v1000, %v1003
    %vm1005 = vweird.f32 %v999
    %vm1006 = vweird.f32 %v1000
    %vm1007 = vmor %vm1005, %vm1006
    %v1008 = vsel %vm1007, %v1000, %v1004
    %v1009 = vand.u32 2147483647, %v999
    %vm1010 = vcmp.eq.f32.partialorder %v1009, 8.507059e+37
    %v1011 = vand.u32 %v999, 2147483648
    %v1012 = vor.u32 1.1754944e-38, %v1011
    %v1013 = vsel %vm1010, %v1012, %v1008
    %v1014 = vmul.f32 1.0, %v1013
    %v1015 = vxor.u32 %v967, 2147483648
    %v1016 = vmul.f32 %v1015, 1.442695
    %v1017 = vpow.pop %v1016
    %v1018 = vadd.f32 %v1017, 1.0
    %v1019 = vrcp.pop %v1018
    %v1020 = vmul.f32 %v1018, %v1019
    %v1021 = vsub.f32 1.0, %v1020
    %v1022 = vmul.f32 %v1019, %v1021
    %v1023 = vadd.f32 %v1019, %v1022
    %vm1024 = vweird.f32 %v1018
    %vm1025 = vweird.f32 %v1019
    %vm1026 = vmor %vm1024, %vm1025
    %v1027 = vsel %vm1026, %v1019, %v1023
    %v1028 = vand.u32 2147483647, %v1018
    %vm1029 = vcmp.eq.f32.partialorder %v1028, 8.507059e+37
    %v1030 = vand.u32 %v1018, 2147483648
    %v1031 = vor.u32 1.1754944e-38, %v1030
    %v1032 = vsel %vm1029, %v1031, %v1027
    %v1033 = vmul.f32 1.0, %v1032
    %v1034 = vtanh.pop %v980
    %v1035 = vxor.u32 %v993, 2147483648
    %v1036 = vmul.f32 %v1035, 1.442695
    %v1037 = vpow.pop %v1036
    %v1038 = vadd.f32 %v1037, 1.0
    %v1039 = vrcp.pop %v1038
    %v1040 = vmul.f32 %v1038, %v1039
    %v1041 = vsub.f32 1.0, %v1040
    %v1042 = vmul.f32 %v1039, %v1041
    %v1043 = vadd.f32 %v1039, %v1042
    %vm1044 = vweird.f32 %v1038
    %vm1045 = vweird.f32 %v1039
    %vm1046 = vmor %vm1044, %vm1045
    %v1047 = vsel %vm1046, %v1039, %v1043
    %v1048 = vand.u32 2147483647, %v1038
    %vm1049 = vcmp.eq.f32.partialorder %v1048, 8.507059e+37
    %v1050 = vand.u32 %v1038, 2147483648
    %v1051 = vor.u32 1.1754944e-38, %v1050
    %v1052 = vsel %vm1049, %v1051, %v1047
    %v1053 = vmul.f32 1.0, %v1052
    %v1054 = vmul.f32 %v1033, %v916
    %v1055 = vmul.f32 %v1014, %v1034
    %v1056 = vadd.f32 %v1054, %v1055
    %v1057 = vtanh.pop %v1056
    %v1058 = vmul.f32 %v1053, %v1057
    %v1059 = vld [vmem:[#allocation2 + $0x20] sm:$0xf0]
    %v1060 = vld [vmem:[#allocation2 + $0x28] sm:$0xf0]
    %v1061 = vld [vmem:[#allocation2 + $0x30] sm:$0xf0]
    %v1062 = vld [vmem:[#allocation2 + $0x38] sm:$0xf0]
    %v1063 = vld [vmem:[#allocation3 + $0x80] sm:$0xf]
    %v1064 = vld [vmem:[#allocation3 + $0x88] sm:$0xf]
    %v1065 = vld [vmem:[#allocation3 + $0x90] sm:$0xf]
    %v1066 = vld [vmem:[#allocation3 + $0x98] sm:$0xf]
    %v1071 = vrot.slane %v1063, 4
    %v1072 = vrot.slane %v1064, 4
    %v1073 = vrot.slane %v1065, 4
    %v1074 = vrot.slane %v1066, 4
    %v1079 = vadd.f32 %v1059, %v1071
    %v1080 = vadd.f32 %v1060, %v1072
    %v1081 = vadd.f32 %v1061, %v1073
    %v1082 = vadd.f32 %v1062, %v1074
    %v1083 = vpack.c.bf16 %v1058, %v1058
    %v1088 = vrot.slane %v1079, 4
    %v1089 = vrot.slane %v1080, 4
    %v1090 = vrot.slane %v1081, 4
    %v1091 = vrot.slane %v1082, 4
    %1096 = vmatpush.bf16.msra.mxu0 %v616
    %1097 = vmatpush.bf16.msra.mxu0 %v612
    %1098 = vmatpush.bf16.msra.mxu0 %v608
    %1099 = vmatpush.bf16.msra.mxu0 %v604
    %1100 = vmatpush.bf16.msra.mxu0 %v600
    %1101 = vmatpush.bf16.msra.mxu0 %v596
    %1102 = vmatpush.bf16.msra.mxu0 %v592
    %1103 = vmatpush.bf16.msra.mxu0 %v588
    %1104 = vmatmul.bf16.gmra.mxu0 %v1083
    %v1105 = vpop.f32.mrf.mxu0
    %v1106 = vadd.f32 %v1088, %v1105
    %v1107 = vpop.f32.mrf.mxu0
    %1108 = vdwg.mxu0
    %1109 = vmatpush.bf16.msra.mxu0 %v617
    %1110 = vmatpush.bf16.msra.mxu0 %v613
    %1111 = vmatpush.bf16.msra.mxu0 %v609
    %1112 = vmatpush.bf16.msra.mxu0 %v605
    %1113 = vmatpush.bf16.msra.mxu0 %v601
    %1114 = vmatpush.bf16.msra.mxu0 %v597
    %1115 = vmatpush.bf16.msra.mxu0 %v593
    %1116 = vmatpush.bf16.msra.mxu0 %v589
    %1117 = vmatmul.bf16.gmra.mxu0 %v1083
    %v1118 = vpop.f32.mrf.mxu0
    %v1119 = vadd.f32 %v1089, %v1118
    %v1120 = vpop.f32.mrf.mxu0
    %1121 = vdwg.mxu0
    %1122 = vmatpush.bf16.msra.mxu0 %v618
    %1123 = vmatpush.bf16.msra.mxu0 %v614
    %1124 = vmatpush.bf16.msra.mxu0 %v610
    %1125 = vmatpush.bf16.msra.mxu0 %v606
    %1126 = vmatpush.bf16.msra.mxu0 %v602
    %1127 = vmatpush.bf16.msra.mxu0 %v598
    %1128 = vmatpush.bf16.msra.mxu0 %v594
    %1129 = vmatpush.bf16.msra.mxu0 %v590
    %1130 = vmatmul.bf16.gmra.mxu0 %v1083
    %v1131 = vpop.f32.mrf.mxu0
    %v1132 = vadd.f32 %v1090, %v1131
    %v1133 = vpop.f32.mrf.mxu0
    %1134 = vdwg.mxu0
    %1135 = vmatpush.bf16.msra.mxu0 %v619
    %1136 = vmatpush.bf16.msra.mxu0 %v615
    %1137 = vmatpush.bf16.msra.mxu0 %v611
    %1138 = vmatpush.bf16.msra.mxu0 %v607
    %1139 = vmatpush.bf16.msra.mxu0 %v603
    %1140 = vmatpush.bf16.msra.mxu0 %v599
    %1141 = vmatpush.bf16.msra.mxu0 %v595
    %1142 = vmatpush.bf16.msra.mxu0 %v591
    %1143 = vmatmul.bf16.gmra.mxu0 %v1083
    %v1144 = vpop.f32.mrf.mxu0
    %v1145 = vadd.f32 %v1091, %v1144
    %v1146 = vpop.f32.mrf.mxu0
    %1147 = vdwg.mxu0
    %v1148 = vxor.u32 %v1106, 2147483648
    %v1149 = vmul.f32 %v1148, 1.442695
    %v1150 = vpow.pop %v1149
    %v1151 = vadd.f32 %v1150, 1.0
    %v1152 = vrcp.pop %v1151
    %v1153 = vmul.f32 %v1151, %v1152
    %v1154 = vsub.f32 1.0, %v1153
    %v1155 = vmul.f32 %v1152, %v1154
    %v1156 = vadd.f32 %v1152, %v1155
    %vm1157 = vweird.f32 %v1151
    %vm1158 = vweird.f32 %v1152
    %vm1159 = vmor %vm1157, %vm1158
    %v1160 = vsel %vm1159, %v1152, %v1156
    %v1161 = vand.u32 2147483647, %v1151
    %vm1162 = vcmp.eq.f32.partialorder %v1161, 8.507059e+37
    %v1163 = vand.u32 %v1151, 2147483648
    %v1164 = vor.u32 1.1754944e-38, %v1163
    %v1165 = vsel %vm1162, %v1164, %v1160
    %v1166 = vmul.f32 1.0, %v1165
    %v1167 = vxor.u32 %v1119, 2147483648
    %v1168 = vmul.f32 %v1167, 1.442695
    %v1169 = vpow.pop %v1168
    %v1170 = vadd.f32 %v1169, 1.0
    %v1171 = vrcp.pop %v1170
    %v1172 = vmul.f32 %v1170, %v1171
    %v1173 = vsub.f32 1.0, %v1172
    %v1174 = vmul.f32 %v1171, %v1173
    %v1175 = vadd.f32 %v1171, %v1174
    %vm1176 = vweird.f32 %v1170
    %vm1177 = vweird.f32 %v1171
    %vm1178 = vmor %vm1176, %vm1177
    %v1179 = vsel %vm1178, %v1171, %v1175
    %v1180 = vand.u32 2147483647, %v1170
    %vm1181 = vcmp.eq.f32.partialorder %v1180, 8.507059e+37
    %v1182 = vand.u32 %v1170, 2147483648
    %v1183 = vor.u32 1.1754944e-38, %v1182
    %v1184 = vsel %vm1181, %v1183, %v1179
    %v1185 = vmul.f32 1.0, %v1184
    %v1186 = vtanh.pop %v1132
    %v1187 = vxor.u32 %v1145, 2147483648
    %v1188 = vmul.f32 %v1187, 1.442695
    %v1189 = vpow.pop %v1188
    %v1190 = vadd.f32 %v1189, 1.0
    %v1191 = vrcp.pop %v1190
    %v1192 = vmul.f32 %v1190, %v1191
    %v1193 = vsub.f32 1.0, %v1192
    %v1194 = vmul.f32 %v1191, %v1193
    %v1195 = vadd.f32 %v1191, %v1194
    %vm1196 = vweird.f32 %v1190
    %vm1197 = vweird.f32 %v1191
    %vm1198 = vmor %vm1196, %vm1197
    %v1199 = vsel %vm1198, %v1191, %v1195
    %v1200 = vand.u32 2147483647, %v1190
    %vm1201 = vcmp.eq.f32.partialorder %v1200, 8.507059e+37
    %v1202 = vand.u32 %v1190, 2147483648
    %v1203 = vor.u32 1.1754944e-38, %v1202
    %v1204 = vsel %vm1201, %v1203, %v1199
    %v1205 = vmul.f32 1.0, %v1204
    %v1206 = vmul.f32 %v1185, %v1056
    %v1207 = vmul.f32 %v1166, %v1186
    %v1208 = vadd.f32 %v1206, %v1207
    %v1209 = vtanh.pop %v1208
    %v1210 = vmul.f32 %v1205, %v1209
    %v1211 = vld [vmem:[#allocation2 + $0x40] sm:$0xf]
    %v1212 = vld [vmem:[#allocation2 + $0x48] sm:$0xf]
    %v1213 = vld [vmem:[#allocation2 + $0x50] sm:$0xf]
    %v1214 = vld [vmem:[#allocation2 + $0x58] sm:$0xf]
    %v1215 = vld [vmem:[#allocation3 + $0x60] sm:$0xf0]
    %v1216 = vld [vmem:[#allocation3 + $0x68] sm:$0xf0]
    %v1217 = vld [vmem:[#allocation3 + $0x70] sm:$0xf0]
    %v1218 = vld [vmem:[#allocation3 + $0x78] sm:$0xf0]
    %v1223 = vrot.slane %v1215, 4
    %v1224 = vrot.slane %v1216, 4
    %v1225 = vrot.slane %v1217, 4
    %v1226 = vrot.slane %v1218, 4
    %v1231 = vadd.f32 %v1211, %v1223
    %v1232 = vadd.f32 %v1212, %v1224
    %v1233 = vadd.f32 %v1213, %v1225
    %v1234 = vadd.f32 %v1214, %v1226
    %v1235 = vpack.c.bf16 %v1210, %v1210
    %1236 = vmatpush.bf16.msra.mxu0 %v616
    %1237 = vmatpush.bf16.msra.mxu0 %v612
    %1238 = vmatpush.bf16.msra.mxu0 %v608
    %1239 = vmatpush.bf16.msra.mxu0 %v604
    %1240 = vmatpush.bf16.msra.mxu0 %v600
    %1241 = vmatpush.bf16.msra.mxu0 %v596
    %1242 = vmatpush.bf16.msra.mxu0 %v592
    %1243 = vmatpush.bf16.msra.mxu0 %v588
    %1244 = vmatmul.bf16.gmra.mxu0 %v1235
    %v1245 = vpop.f32.mrf.mxu0
    %v1246 = vadd.f32 %v1231, %v1245
    %v1247 = vpop.f32.mrf.mxu0
    %1248 = vdwg.mxu0
    %1249 = vmatpush.bf16.msra.mxu0 %v617
    %1250 = vmatpush.bf16.msra.mxu0 %v613
    %1251 = vmatpush.bf16.msra.mxu0 %v609
    %1252 = vmatpush.bf16.msra.mxu0 %v605
    %1253 = vmatpush.bf16.msra.mxu0 %v601
    %1254 = vmatpush.bf16.msra.mxu0 %v597
    %1255 = vmatpush.bf16.msra.mxu0 %v593
    %1256 = vmatpush.bf16.msra.mxu0 %v589
    %1257 = vmatmul.bf16.gmra.mxu0 %v1235
    %v1258 = vpop.f32.mrf.mxu0
    %v1259 = vadd.f32 %v1232, %v1258
    %v1260 = vpop.f32.mrf.mxu0
    %1261 = vdwg.mxu0
    %1262 = vmatpush.bf16.msra.mxu0 %v618
    %1263 = vmatpush.bf16.msra.mxu0 %v614
    %1264 = vmatpush.bf16.msra.mxu0 %v610
    %1265 = vmatpush.bf16.msra.mxu0 %v606
    %1266 = vmatpush.bf16.msra.mxu0 %v602
    %1267 = vmatpush.bf16.msra.mxu0 %v598
    %1268 = vmatpush.bf16.msra.mxu0 %v594
    %1269 = vmatpush.bf16.msra.mxu0 %v590
    %1270 = vmatmul.bf16.gmra.mxu0 %v1235
    %v1271 = vpop.f32.mrf.mxu0
    %v1272 = vadd.f32 %v1233, %v1271
    %v1273 = vpop.f32.mrf.mxu0
    %1274 = vdwg.mxu0
    %1275 = vmatpush.bf16.msra.mxu0 %v619
    %1276 = vmatpush.bf16.msra.mxu0 %v615
    %1277 = vmatpush.bf16.msra.mxu0 %v611
    %1278 = vmatpush.bf16.msra.mxu0 %v607
    %1279 = vmatpush.bf16.msra.mxu0 %v603
    %1280 = vmatpush.bf16.msra.mxu0 %v599
    %1281 = vmatpush.bf16.msra.mxu0 %v595
    %1282 = vmatpush.bf16.msra.mxu0 %v591
    %1283 = vmatmul.bf16.gmra.mxu0 %v1235
    %v1284 = vpop.f32.mrf.mxu0
    %v1285 = vadd.f32 %v1234, %v1284
    %v1286 = vpop.f32.mrf.mxu0
    %1287 = vdwg.mxu0
    %v1288 = vxor.u32 %v1246, 2147483648
    %v1289 = vmul.f32 %v1288, 1.442695
    %v1290 = vpow.pop %v1289
    %v1291 = vadd.f32 %v1290, 1.0
    %v1292 = vrcp.pop %v1291
    %v1293 = vmul.f32 %v1291, %v1292
    %v1294 = vsub.f32 1.0, %v1293
    %v1295 = vmul.f32 %v1292, %v1294
    %v1296 = vadd.f32 %v1292, %v1295
    %vm1297 = vweird.f32 %v1291
    %vm1298 = vweird.f32 %v1292
    %vm1299 = vmor %vm1297, %vm1298
    %v1300 = vsel %vm1299, %v1292, %v1296
    %v1301 = vand.u32 2147483647, %v1291
    %vm1302 = vcmp.eq.f32.partialorder %v1301, 8.507059e+37
    %v1303 = vand.u32 %v1291, 2147483648
    %v1304 = vor.u32 1.1754944e-38, %v1303
    %v1305 = vsel %vm1302, %v1304, %v1300
    %v1306 = vmul.f32 1.0, %v1305
    %v1307 = vxor.u32 %v1259, 2147483648
    %v1308 = vmul.f32 %v1307, 1.442695
    %v1309 = vpow.pop %v1308
    %v1310 = vadd.f32 %v1309, 1.0
    %v1311 = vrcp.pop %v1310
    %v1312 = vmul.f32 %v1310, %v1311
    %v1313 = vsub.f32 1.0, %v1312
    %v1314 = vmul.f32 %v1311, %v1313
    %v1315 = vadd.f32 %v1311, %v1314
    %vm1316 = vweird.f32 %v1310
    %vm1317 = vweird.f32 %v1311
    %vm1318 = vmor %vm1316, %vm1317
    %v1319 = vsel %vm1318, %v1311, %v1315
    %v1320 = vand.u32 2147483647, %v1310
    %vm1321 = vcmp.eq.f32.partialorder %v1320, 8.507059e+37
    %v1322 = vand.u32 %v1310, 2147483648
    %v1323 = vor.u32 1.1754944e-38, %v1322
    %v1324 = vsel %vm1321, %v1323, %v1319
    %v1325 = vmul.f32 1.0, %v1324
    %v1326 = vtanh.pop %v1272
    %v1327 = vxor.u32 %v1285, 2147483648
    %v1328 = vmul.f32 %v1327, 1.442695
    %v1329 = vpow.pop %v1328
    %v1330 = vadd.f32 %v1329, 1.0
    %v1331 = vrcp.pop %v1330
    %v1332 = vmul.f32 %v1330, %v1331
    %v1333 = vsub.f32 1.0, %v1332
    %v1334 = vmul.f32 %v1331, %v1333
    %v1335 = vadd.f32 %v1331, %v1334
    %vm1336 = vweird.f32 %v1330
    %vm1337 = vweird.f32 %v1331
    %vm1338 = vmor %vm1336, %vm1337
    %v1339 = vsel %vm1338, %v1331, %v1335
    %v1340 = vand.u32 2147483647, %v1330
    %vm1341 = vcmp.eq.f32.partialorder %v1340, 8.507059e+37
    %v1342 = vand.u32 %v1330, 2147483648
    %v1343 = vor.u32 1.1754944e-38, %v1342
    %v1344 = vsel %vm1341, %v1343, %v1339
    %v1345 = vmul.f32 1.0, %v1344
    %v1346 = vmul.f32 %v1325, %v1208
    %v1347 = vmul.f32 %v1306, %v1326
    %v1348 = vadd.f32 %v1346, %v1347
    %v1349 = vtanh.pop %v1348
    %v1350 = vmul.f32 %v1345, %v1349
    %v1351 = vld [vmem:[#allocation2 + $0x40] sm:$0xf0]
    %v1352 = vld [vmem:[#allocation2 + $0x48] sm:$0xf0]
    %v1353 = vld [vmem:[#allocation2 + $0x50] sm:$0xf0]
    %v1354 = vld [vmem:[#allocation2 + $0x58] sm:$0xf0]
    %v1355 = vld [vmem:[#allocation3 + $0x60] sm:$0xf]
    %v1356 = vld [vmem:[#allocation3 + $0x68] sm:$0xf]
    %v1357 = vld [vmem:[#allocation3 + $0x70] sm:$0xf]
    %v1358 = vld [vmem:[#allocation3 + $0x78] sm:$0xf]
    %v1363 = vrot.slane %v1355, 4
    %v1364 = vrot.slane %v1356, 4
    %v1365 = vrot.slane %v1357, 4
    %v1366 = vrot.slane %v1358, 4
    %v1371 = vadd.f32 %v1351, %v1363
    %v1372 = vadd.f32 %v1352, %v1364
    %v1373 = vadd.f32 %v1353, %v1365
    %v1374 = vadd.f32 %v1354, %v1366
    %v1375 = vpack.c.bf16 %v1350, %v1350
    %v1380 = vrot.slane %v1371, 4
    %v1381 = vrot.slane %v1372, 4
    %v1382 = vrot.slane %v1373, 4
    %v1383 = vrot.slane %v1374, 4
    %1388 = vmatpush.bf16.msra.mxu0 %v616
    %1389 = vmatpush.bf16.msra.mxu0 %v612
    %1390 = vmatpush.bf16.msra.mxu0 %v608
    %1391 = vmatpush.bf16.msra.mxu0 %v604
    %1392 = vmatpush.bf16.msra.mxu0 %v600
    %1393 = vmatpush.bf16.msra.mxu0 %v596
    %1394 = vmatpush.bf16.msra.mxu0 %v592
    %1395 = vmatpush.bf16.msra.mxu0 %v588
    %1396 = vmatmul.bf16.gmra.mxu0 %v1375
    %v1397 = vpop.f32.mrf.mxu0
    %v1398 = vadd.f32 %v1380, %v1397
    %v1399 = vpop.f32.mrf.mxu0
    %1400 = vdwg.mxu0
    %1401 = vmatpush.bf16.msra.mxu0 %v617
    %1402 = vmatpush.bf16.msra.mxu0 %v613
    %1403 = vmatpush.bf16.msra.mxu0 %v609
    %1404 = vmatpush.bf16.msra.mxu0 %v605
    %1405 = vmatpush.bf16.msra.mxu0 %v601
    %1406 = vmatpush.bf16.msra.mxu0 %v597
    %1407 = vmatpush.bf16.msra.mxu0 %v593
    %1408 = vmatpush.bf16.msra.mxu0 %v589
    %1409 = vmatmul.bf16.gmra.mxu0 %v1375
    %v1410 = vpop.f32.mrf.mxu0
    %v1411 = vadd.f32 %v1381, %v1410
    %v1412 = vpop.f32.mrf.mxu0
    %1413 = vdwg.mxu0
    %1414 = vmatpush.bf16.msra.mxu0 %v618
    %1415 = vmatpush.bf16.msra.mxu0 %v614
    %1416 = vmatpush.bf16.msra.mxu0 %v610
    %1417 = vmatpush.bf16.msra.mxu0 %v606
    %1418 = vmatpush.bf16.msra.mxu0 %v602
    %1419 = vmatpush.bf16.msra.mxu0 %v598
    %1420 = vmatpush.bf16.msra.mxu0 %v594
    %1421 = vmatpush.bf16.msra.mxu0 %v590
    %1422 = vmatmul.bf16.gmra.mxu0 %v1375
    %v1423 = vpop.f32.mrf.mxu0
    %v1424 = vadd.f32 %v1382, %v1423
    %v1425 = vpop.f32.mrf.mxu0
    %1426 = vdwg.mxu0
    %1427 = vmatpush.bf16.msra.mxu0 %v619
    %1428 = vmatpush.bf16.msra.mxu0 %v615
    %1429 = vmatpush.bf16.msra.mxu0 %v611
    %1430 = vmatpush.bf16.msra.mxu0 %v607
    %1431 = vmatpush.bf16.msra.mxu0 %v603
    %1432 = vmatpush.bf16.msra.mxu0 %v599
    %1433 = vmatpush.bf16.msra.mxu0 %v595
    %1434 = vmatpush.bf16.msra.mxu0 %v591
    %1435 = vmatmul.bf16.gmra.mxu0 %v1375
    %v1436 = vpop.f32.mrf.mxu0
    %v1437 = vadd.f32 %v1383, %v1436
    %v1438 = vpop.f32.mrf.mxu0
    %1439 = vdwg.mxu0
    %v1440 = vxor.u32 %v1398, 2147483648
    %v1441 = vmul.f32 %v1440, 1.442695
    %v1442 = vpow.pop %v1441
    %v1443 = vadd.f32 %v1442, 1.0
    %v1444 = vrcp.pop %v1443
    %v1445 = vmul.f32 %v1443, %v1444
    %v1446 = vsub.f32 1.0, %v1445
    %v1447 = vmul.f32 %v1444, %v1446
    %v1448 = vadd.f32 %v1444, %v1447
    %vm1449 = vweird.f32 %v1443
    %vm1450 = vweird.f32 %v1444
    %vm1451 = vmor %vm1449, %vm1450
    %v1452 = vsel %vm1451, %v1444, %v1448
    %v1453 = vand.u32 2147483647, %v1443
    %vm1454 = vcmp.eq.f32.partialorder %v1453, 8.507059e+37
    %v1455 = vand.u32 %v1443, 2147483648
    %v1456 = vor.u32 1.1754944e-38, %v1455
    %v1457 = vsel %vm1454, %v1456, %v1452
    %v1458 = vmul.f32 1.0, %v1457
    %v1459 = vxor.u32 %v1411, 2147483648
    %v1460 = vmul.f32 %v1459, 1.442695
    %v1461 = vpow.pop %v1460
    %v1462 = vadd.f32 %v1461, 1.0
    %v1463 = vrcp.pop %v1462
    %v1464 = vmul.f32 %v1462, %v1463
    %v1465 = vsub.f32 1.0, %v1464
    %v1466 = vmul.f32 %v1463, %v1465
    %v1467 = vadd.f32 %v1463, %v1466
    %vm1468 = vweird.f32 %v1462
    %vm1469 = vweird.f32 %v1463
    %vm1470 = vmor %vm1468, %vm1469
    %v1471 = vsel %vm1470, %v1463, %v1467
    %v1472 = vand.u32 2147483647, %v1462
    %vm1473 = vcmp.eq.f32.partialorder %v1472, 8.507059e+37
    %v1474 = vand.u32 %v1462, 2147483648
    %v1475 = vor.u32 1.1754944e-38, %v1474
    %v1476 = vsel %vm1473, %v1475, %v1471
    %v1477 = vmul.f32 1.0, %v1476
    %v1478 = vtanh.pop %v1424
    %v1479 = vxor.u32 %v1437, 2147483648
    %v1480 = vmul.f32 %v1479, 1.442695
    %v1481 = vpow.pop %v1480
    %v1482 = vadd.f32 %v1481, 1.0
    %v1483 = vrcp.pop %v1482
    %v1484 = vmul.f32 %v1482, %v1483
    %v1485 = vsub.f32 1.0, %v1484
    %v1486 = vmul.f32 %v1483, %v1485
    %v1487 = vadd.f32 %v1483, %v1486
    %vm1488 = vweird.f32 %v1482
    %vm1489 = vweird.f32 %v1483
    %vm1490 = vmor %vm1488, %vm1489
    %v1491 = vsel %vm1490, %v1483, %v1487
    %v1492 = vand.u32 2147483647, %v1482
    %vm1493 = vcmp.eq.f32.partialorder %v1492, 8.507059e+37
    %v1494 = vand.u32 %v1482, 2147483648
    %v1495 = vor.u32 1.1754944e-38, %v1494
    %v1496 = vsel %vm1493, %v1495, %v1491
    %v1497 = vmul.f32 1.0, %v1496
    %v1498 = vmul.f32 %v1477, %v1348
    %v1499 = vmul.f32 %v1458, %v1478
    %v1500 = vadd.f32 %v1498, %v1499
    %v1501 = vtanh.pop %v1500
    %v1502 = vmul.f32 %v1497, %v1501
    %v1503 = vld [vmem:[#allocation2 + $0x60] sm:$0xf]
    %v1504 = vld [vmem:[#allocation2 + $0x68] sm:$0xf]
    %v1505 = vld [vmem:[#allocation2 + $0x70] sm:$0xf]
    %v1506 = vld [vmem:[#allocation2 + $0x78] sm:$0xf]
    %v1507 = vld [vmem:[#allocation3 + $0x40] sm:$0xf0]
    %v1508 = vld [vmem:[#allocation3 + $0x48] sm:$0xf0]
    %v1509 = vld [vmem:[#allocation3 + $0x50] sm:$0xf0]
    %v1510 = vld [vmem:[#allocation3 + $0x58] sm:$0xf0]
    %v1515 = vrot.slane %v1507, 4
    %v1516 = vrot.slane %v1508, 4
    %v1517 = vrot.slane %v1509, 4
    %v1518 = vrot.slane %v1510, 4
    %v1523 = vadd.f32 %v1503, %v1515
    %v1524 = vadd.f32 %v1504, %v1516
    %v1525 = vadd.f32 %v1505, %v1517
    %v1526 = vadd.f32 %v1506, %v1518
    %v1527 = vpack.c.bf16 %v1502, %v1502
    %1528 = vmatpush.bf16.msra.mxu0 %v616
    %1529 = vmatpush.bf16.msra.mxu0 %v612
    %1530 = vmatpush.bf16.msra.mxu0 %v608
    %1531 = vmatpush.bf16.msra.mxu0 %v604
    %1532 = vmatpush.bf16.msra.mxu0 %v600
    %1533 = vmatpush.bf16.msra.mxu0 %v596
    %1534 = vmatpush.bf16.msra.mxu0 %v592
    %1535 = vmatpush.bf16.msra.mxu0 %v588
    %1536 = vmatmul.bf16.gmra.mxu0 %v1527
    %v1537 = vpop.f32.mrf.mxu0
    %v1538 = vadd.f32 %v1523, %v1537
    %v1539 = vpop.f32.mrf.mxu0
    %1540 = vdwg.mxu0
    %1541 = vmatpush.bf16.msra.mxu0 %v617
    %1542 = vmatpush.bf16.msra.mxu0 %v613
    %1543 = vmatpush.bf16.msra.mxu0 %v609
    %1544 = vmatpush.bf16.msra.mxu0 %v605
    %1545 = vmatpush.bf16.msra.mxu0 %v601
    %1546 = vmatpush.bf16.msra.mxu0 %v597
    %1547 = vmatpush.bf16.msra.mxu0 %v593
    %1548 = vmatpush.bf16.msra.mxu0 %v589
    %1549 = vmatmul.bf16.gmra.mxu0 %v1527
    %v1550 = vpop.f32.mrf.mxu0
    %v1551 = vadd.f32 %v1524, %v1550
    %v1552 = vpop.f32.mrf.mxu0
    %1553 = vdwg.mxu0
    %1554 = vmatpush.bf16.msra.mxu0 %v618
    %1555 = vmatpush.bf16.msra.mxu0 %v614
    %1556 = vmatpush.bf16.msra.mxu0 %v610
    %1557 = vmatpush.bf16.msra.mxu0 %v606
    %1558 = vmatpush.bf16.msra.mxu0 %v602
    %1559 = vmatpush.bf16.msra.mxu0 %v598
    %1560 = vmatpush.bf16.msra.mxu0 %v594
    %1561 = vmatpush.bf16.msra.mxu0 %v590
    %1562 = vmatmul.bf16.gmra.mxu0 %v1527
    %v1563 = vpop.f32.mrf.mxu0
    %v1564 = vadd.f32 %v1525, %v1563
    %v1565 = vpop.f32.mrf.mxu0
    %1566 = vdwg.mxu0
    %1567 = vmatpush.bf16.msra.mxu0 %v619
    %1568 = vmatpush.bf16.msra.mxu0 %v615
    %1569 = vmatpush.bf16.msra.mxu0 %v611
    %1570 = vmatpush.bf16.msra.mxu0 %v607
    %1571 = vmatpush.bf16.msra.mxu0 %v603
    %1572 = vmatpush.bf16.msra.mxu0 %v599
    %1573 = vmatpush.bf16.msra.mxu0 %v595
    %1574 = vmatpush.bf16.msra.mxu0 %v591
    %1575 = vmatmul.bf16.gmra.mxu0 %v1527
    %v1576 = vpop.f32.mrf.mxu0
    %v1577 = vadd.f32 %v1526, %v1576
    %v1578 = vpop.f32.mrf.mxu0
    %1579 = vdwg.mxu0
    %v1580 = vxor.u32 %v1538, 2147483648
    %v1581 = vmul.f32 %v1580, 1.442695
    %v1582 = vpow.pop %v1581
    %v1583 = vadd.f32 %v1582, 1.0
    %v1584 = vrcp.pop %v1583
    %v1585 = vmul.f32 %v1583, %v1584
    %v1586 = vsub.f32 1.0, %v1585
    %v1587 = vmul.f32 %v1584, %v1586
    %v1588 = vadd.f32 %v1584, %v1587
    %vm1589 = vweird.f32 %v1583
    %vm1590 = vweird.f32 %v1584
    %vm1591 = vmor %vm1589, %vm1590
    %v1592 = vsel %vm1591, %v1584, %v1588
    %v1593 = vand.u32 2147483647, %v1583
    %vm1594 = vcmp.eq.f32.partialorder %v1593, 8.507059e+37
    %v1595 = vand.u32 %v1583, 2147483648
    %v1596 = vor.u32 1.1754944e-38, %v1595
    %v1597 = vsel %vm1594, %v1596, %v1592
    %v1598 = vmul.f32 1.0, %v1597
    %v1599 = vxor.u32 %v1551, 2147483648
    %v1600 = vmul.f32 %v1599, 1.442695
    %v1601 = vpow.pop %v1600
    %v1602 = vadd.f32 %v1601, 1.0
    %v1603 = vrcp.pop %v1602
    %v1604 = vmul.f32 %v1602, %v1603
    %v1605 = vsub.f32 1.0, %v1604
    %v1606 = vmul.f32 %v1603, %v1605
    %v1607 = vadd.f32 %v1603, %v1606
    %vm1608 = vweird.f32 %v1602
    %vm1609 = vweird.f32 %v1603
    %vm1610 = vmor %vm1608, %vm1609
    %v1611 = vsel %vm1610, %v1603, %v1607
    %v1612 = vand.u32 2147483647, %v1602
    %vm1613 = vcmp.eq.f32.partialorder %v1612, 8.507059e+37
    %v1614 = vand.u32 %v1602, 2147483648
    %v1615 = vor.u32 1.1754944e-38, %v1614
    %v1616 = vsel %vm1613, %v1615, %v1611
    %v1617 = vmul.f32 1.0, %v1616
    %v1618 = vtanh.pop %v1564
    %v1619 = vxor.u32 %v1577, 2147483648
    %v1620 = vmul.f32 %v1619, 1.442695
    %v1621 = vpow.pop %v1620
    %v1622 = vadd.f32 %v1621, 1.0
    %v1623 = vrcp.pop %v1622
    %v1624 = vmul.f32 %v1622, %v1623
    %v1625 = vsub.f32 1.0, %v1624
    %v1626 = vmul.f32 %v1623, %v1625
    %v1627 = vadd.f32 %v1623, %v1626
    %vm1628 = vweird.f32 %v1622
    %vm1629 = vweird.f32 %v1623
    %vm1630 = vmor %vm1628, %vm1629
    %v1631 = vsel %vm1630, %v1623, %v1627
    %v1632 = vand.u32 2147483647, %v1622
    %vm1633 = vcmp.eq.f32.partialorder %v1632, 8.507059e+37
    %v1634 = vand.u32 %v1622, 2147483648
    %v1635 = vor.u32 1.1754944e-38, %v1634
    %v1636 = vsel %vm1633, %v1635, %v1631
    %v1637 = vmul.f32 1.0, %v1636
    %v1638 = vmul.f32 %v1617, %v1500
    %v1639 = vmul.f32 %v1598, %v1618
    %v1640 = vadd.f32 %v1638, %v1639
    %v1641 = vtanh.pop %v1640
    %v1642 = vmul.f32 %v1637, %v1641
    %v1643 = vld [vmem:[#allocation2 + $0x60] sm:$0xf0]
    %v1644 = vld [vmem:[#allocation2 + $0x68] sm:$0xf0]
    %v1645 = vld [vmem:[#allocation2 + $0x70] sm:$0xf0]
    %v1646 = vld [vmem:[#allocation2 + $0x78] sm:$0xf0]
    %v1647 = vld [vmem:[#allocation3 + $0x40] sm:$0xf]
    %v1648 = vld [vmem:[#allocation3 + $0x48] sm:$0xf]
    %v1649 = vld [vmem:[#allocation3 + $0x50] sm:$0xf]
    %v1650 = vld [vmem:[#allocation3 + $0x58] sm:$0xf]
    %v1655 = vrot.slane %v1647, 4
    %v1656 = vrot.slane %v1648, 4
    %v1657 = vrot.slane %v1649, 4
    %v1658 = vrot.slane %v1650, 4
    %v1663 = vadd.f32 %v1643, %v1655
    %v1664 = vadd.f32 %v1644, %v1656
    %v1665 = vadd.f32 %v1645, %v1657
    %v1666 = vadd.f32 %v1646, %v1658
    %v1667 = vpack.c.bf16 %v1642, %v1642
    %v1672 = vrot.slane %v1663, 4
    %v1673 = vrot.slane %v1664, 4
    %v1674 = vrot.slane %v1665, 4
    %v1675 = vrot.slane %v1666, 4
    %1680 = vmatpush.bf16.msra.mxu0 %v616
    %1681 = vmatpush.bf16.msra.mxu0 %v612
    %1682 = vmatpush.bf16.msra.mxu0 %v608
    %1683 = vmatpush.bf16.msra.mxu0 %v604
    %1684 = vmatpush.bf16.msra.mxu0 %v600
    %1685 = vmatpush.bf16.msra.mxu0 %v596
    %1686 = vmatpush.bf16.msra.mxu0 %v592
    %1687 = vmatpush.bf16.msra.mxu0 %v588
    %1688 = vmatmul.bf16.gmra.mxu0 %v1667
    %v1689 = vpop.f32.mrf.mxu0
    %v1690 = vadd.f32 %v1672, %v1689
    %v1691 = vpop.f32.mrf.mxu0
    %1692 = vdwg.mxu0
    %1693 = vmatpush.bf16.msra.mxu0 %v617
    %1694 = vmatpush.bf16.msra.mxu0 %v613
    %1695 = vmatpush.bf16.msra.mxu0 %v609
    %1696 = vmatpush.bf16.msra.mxu0 %v605
    %1697 = vmatpush.bf16.msra.mxu0 %v601
    %1698 = vmatpush.bf16.msra.mxu0 %v597
    %1699 = vmatpush.bf16.msra.mxu0 %v593
    %1700 = vmatpush.bf16.msra.mxu0 %v589
    %1701 = vmatmul.bf16.gmra.mxu0 %v1667
    %v1702 = vpop.f32.mrf.mxu0
    %v1703 = vadd.f32 %v1673, %v1702
    %v1704 = vpop.f32.mrf.mxu0
    %1705 = vdwg.mxu0
    %1706 = vmatpush.bf16.msra.mxu0 %v618
    %1707 = vmatpush.bf16.msra.mxu0 %v614
    %1708 = vmatpush.bf16.msra.mxu0 %v610
    %1709 = vmatpush.bf16.msra.mxu0 %v606
    %1710 = vmatpush.bf16.msra.mxu0 %v602
    %1711 = vmatpush.bf16.msra.mxu0 %v598
    %1712 = vmatpush.bf16.msra.mxu0 %v594
    %1713 = vmatpush.bf16.msra.mxu0 %v590
    %1714 = vmatmul.bf16.gmra.mxu0 %v1667
    %v1715 = vpop.f32.mrf.mxu0
    %v1716 = vadd.f32 %v1674, %v1715
    %v1717 = vpop.f32.mrf.mxu0
    %1718 = vdwg.mxu0
    %1719 = vmatpush.bf16.msra.mxu0 %v619
    %1720 = vmatpush.bf16.msra.mxu0 %v615
    %1721 = vmatpush.bf16.msra.mxu0 %v611
    %1722 = vmatpush.bf16.msra.mxu0 %v607
    %1723 = vmatpush.bf16.msra.mxu0 %v603
    %1724 = vmatpush.bf16.msra.mxu0 %v599
    %1725 = vmatpush.bf16.msra.mxu0 %v595
    %1726 = vmatpush.bf16.msra.mxu0 %v591
    %1727 = vmatmul.bf16.gmra.mxu0 %v1667
    %v1728 = vpop.f32.mrf.mxu0
    %v1729 = vadd.f32 %v1675, %v1728
    %v1730 = vpop.f32.mrf.mxu0
    %1731 = vdwg.mxu0
    %v1732 = vxor.u32 %v1690, 2147483648
    %v1733 = vmul.f32 %v1732, 1.442695
    %v1734 = vpow.pop %v1733
    %v1735 = vadd.f32 %v1734, 1.0
    %v1736 = vrcp.pop %v1735
    %v1737 = vmul.f32 %v1735, %v1736
    %v1738 = vsub.f32 1.0, %v1737
    %v1739 = vmul.f32 %v1736, %v1738
    %v1740 = vadd.f32 %v1736, %v1739
    %vm1741 = vweird.f32 %v1735
    %vm1742 = vweird.f32 %v1736
    %vm1743 = vmor %vm1741, %vm1742
    %v1744 = vsel %vm1743, %v1736, %v1740
    %v1745 = vand.u32 2147483647, %v1735
    %vm1746 = vcmp.eq.f32.partialorder %v1745, 8.507059e+37
    %v1747 = vand.u32 %v1735, 2147483648
    %v1748 = vor.u32 1.1754944e-38, %v1747
    %v1749 = vsel %vm1746, %v1748, %v1744
    %v1750 = vmul.f32 1.0, %v1749
    %v1751 = vxor.u32 %v1703, 2147483648
    %v1752 = vmul.f32 %v1751, 1.442695
    %v1753 = vpow.pop %v1752
    %v1754 = vadd.f32 %v1753, 1.0
    %v1755 = vrcp.pop %v1754
    %v1756 = vmul.f32 %v1754, %v1755
    %v1757 = vsub.f32 1.0, %v1756
    %v1758 = vmul.f32 %v1755, %v1757
    %v1759 = vadd.f32 %v1755, %v1758
    %vm1760 = vweird.f32 %v1754
    %vm1761 = vweird.f32 %v1755
    %vm1762 = vmor %vm1760, %vm1761
    %v1763 = vsel %vm1762, %v1755, %v1759
    %v1764 = vand.u32 2147483647, %v1754
    %vm1765 = vcmp.eq.f32.partialorder %v1764, 8.507059e+37
    %v1766 = vand.u32 %v1754, 2147483648
    %v1767 = vor.u32 1.1754944e-38, %v1766
    %v1768 = vsel %vm1765, %v1767, %v1763
    %v1769 = vmul.f32 1.0, %v1768
    %v1770 = vtanh.pop %v1716
    %v1771 = vxor.u32 %v1729, 2147483648
    %v1772 = vmul.f32 %v1771, 1.442695
    %v1773 = vpow.pop %v1772
    %v1774 = vadd.f32 %v1773, 1.0
    %v1775 = vrcp.pop %v1774
    %v1776 = vmul.f32 %v1774, %v1775
    %v1777 = vsub.f32 1.0, %v1776
    %v1778 = vmul.f32 %v1775, %v1777
    %v1779 = vadd.f32 %v1775, %v1778
    %vm1780 = vweird.f32 %v1774
    %vm1781 = vweird.f32 %v1775
    %vm1782 = vmor %vm1780, %vm1781
    %v1783 = vsel %vm1782, %v1775, %v1779
    %v1784 = vand.u32 2147483647, %v1774
    %vm1785 = vcmp.eq.f32.partialorder %v1784, 8.507059e+37
    %v1786 = vand.u32 %v1774, 2147483648
    %v1787 = vor.u32 1.1754944e-38, %v1786
    %v1788 = vsel %vm1785, %v1787, %v1783
    %v1789 = vmul.f32 1.0, %v1788
    %v1790 = vmul.f32 %v1769, %v1640
    %v1791 = vmul.f32 %v1750, %v1770
    %v1792 = vadd.f32 %v1790, %v1791
    %v1793 = vtanh.pop %v1792
    %v1794 = vmul.f32 %v1789, %v1793
    %v1795 = vld [vmem:[#allocation2 + $0x80] sm:$0xf]
    %v1796 = vld [vmem:[#allocation2 + $0x88] sm:$0xf]
    %v1797 = vld [vmem:[#allocation2 + $0x90] sm:$0xf]
    %v1798 = vld [vmem:[#allocation2 + $0x98] sm:$0xf]
    %v1799 = vld [vmem:[#allocation3 + $0x20] sm:$0xf0]
    %v1800 = vld [vmem:[#allocation3 + $0x28] sm:$0xf0]
    %v1801 = vld [vmem:[#allocation3 + $0x30] sm:$0xf0]
    %v1802 = vld [vmem:[#allocation3 + $0x38] sm:$0xf0]
    %v1807 = vrot.slane %v1799, 4
    %v1808 = vrot.slane %v1800, 4
    %v1809 = vrot.slane %v1801, 4
    %v1810 = vrot.slane %v1802, 4
    %v1815 = vadd.f32 %v1795, %v1807
    %v1816 = vadd.f32 %v1796, %v1808
    %v1817 = vadd.f32 %v1797, %v1809
    %v1818 = vadd.f32 %v1798, %v1810
    %v1819 = vpack.c.bf16 %v1794, %v1794
    %1820 = vmatpush.bf16.msra.mxu0 %v616
    %1821 = vmatpush.bf16.msra.mxu0 %v612
    %1822 = vmatpush.bf16.msra.mxu0 %v608
    %1823 = vmatpush.bf16.msra.mxu0 %v604
    %1824 = vmatpush.bf16.msra.mxu0 %v600
    %1825 = vmatpush.bf16.msra.mxu0 %v596
    %1826 = vmatpush.bf16.msra.mxu0 %v592
    %1827 = vmatpush.bf16.msra.mxu0 %v588
    %1828 = vmatmul.bf16.gmra.mxu0 %v1819
    %v1829 = vpop.f32.mrf.mxu0
    %v1830 = vadd.f32 %v1815, %v1829
    %v1831 = vpop.f32.mrf.mxu0
    %1832 = vdwg.mxu0
    %1833 = vmatpush.bf16.msra.mxu0 %v617
    %1834 = vmatpush.bf16.msra.mxu0 %v613
    %1835 = vmatpush.bf16.msra.mxu0 %v609
    %1836 = vmatpush.bf16.msra.mxu0 %v605
    %1837 = vmatpush.bf16.msra.mxu0 %v601
    %1838 = vmatpush.bf16.msra.mxu0 %v597
    %1839 = vmatpush.bf16.msra.mxu0 %v593
    %1840 = vmatpush.bf16.msra.mxu0 %v589
    %1841 = vmatmul.bf16.gmra.mxu0 %v1819
    %v1842 = vpop.f32.mrf.mxu0
    %v1843 = vadd.f32 %v1816, %v1842
    %v1844 = vpop.f32.mrf.mxu0
    %1845 = vdwg.mxu0
    %1846 = vmatpush.bf16.msra.mxu0 %v618
    %1847 = vmatpush.bf16.msra.mxu0 %v614
    %1848 = vmatpush.bf16.msra.mxu0 %v610
    %1849 = vmatpush.bf16.msra.mxu0 %v606
    %1850 = vmatpush.bf16.msra.mxu0 %v602
    %1851 = vmatpush.bf16.msra.mxu0 %v598
    %1852 = vmatpush.bf16.msra.mxu0 %v594
    %1853 = vmatpush.bf16.msra.mxu0 %v590
    %1854 = vmatmul.bf16.gmra.mxu0 %v1819
    %v1855 = vpop.f32.mrf.mxu0
    %v1856 = vadd.f32 %v1817, %v1855
    %v1857 = vpop.f32.mrf.mxu0
    %1858 = vdwg.mxu0
    %1859 = vmatpush.bf16.msra.mxu0 %v619
    %1860 = vmatpush.bf16.msra.mxu0 %v615
    %1861 = vmatpush.bf16.msra.mxu0 %v611
    %1862 = vmatpush.bf16.msra.mxu0 %v607
    %1863 = vmatpush.bf16.msra.mxu0 %v603
    %1864 = vmatpush.bf16.msra.mxu0 %v599
    %1865 = vmatpush.bf16.msra.mxu0 %v595
    %1866 = vmatpush.bf16.msra.mxu0 %v591
    %1867 = vmatmul.bf16.gmra.mxu0 %v1819
    %v1868 = vpop.f32.mrf.mxu0
    %v1869 = vadd.f32 %v1818, %v1868
    %v1870 = vpop.f32.mrf.mxu0
    %1871 = vdwg.mxu0
    %v1872 = vxor.u32 %v1830, 2147483648
    %v1873 = vmul.f32 %v1872, 1.442695
    %v1874 = vpow.pop %v1873
    %v1875 = vadd.f32 %v1874, 1.0
    %v1876 = vrcp.pop %v1875
    %v1877 = vmul.f32 %v1875, %v1876
    %v1878 = vsub.f32 1.0, %v1877
    %v1879 = vmul.f32 %v1876, %v1878
    %v1880 = vadd.f32 %v1876, %v1879
    %vm1881 = vweird.f32 %v1875
    %vm1882 = vweird.f32 %v1876
    %vm1883 = vmor %vm1881, %vm1882
    %v1884 = vsel %vm1883, %v1876, %v1880
    %v1885 = vand.u32 2147483647, %v1875
    %vm1886 = vcmp.eq.f32.partialorder %v1885, 8.507059e+37
    %v1887 = vand.u32 %v1875, 2147483648
    %v1888 = vor.u32 1.1754944e-38, %v1887
    %v1889 = vsel %vm1886, %v1888, %v1884
    %v1890 = vmul.f32 1.0, %v1889
    %v1891 = vxor.u32 %v1843, 2147483648
    %v1892 = vmul.f32 %v1891, 1.442695
    %v1893 = vpow.pop %v1892
    %v1894 = vadd.f32 %v1893, 1.0
    %v1895 = vrcp.pop %v1894
    %v1896 = vmul.f32 %v1894, %v1895
    %v1897 = vsub.f32 1.0, %v1896
    %v1898 = vmul.f32 %v1895, %v1897
    %v1899 = vadd.f32 %v1895, %v1898
    %vm1900 = vweird.f32 %v1894
    %vm1901 = vweird.f32 %v1895
    %vm1902 = vmor %vm1900, %vm1901
    %v1903 = vsel %vm1902, %v1895, %v1899
    %v1904 = vand.u32 2147483647, %v1894
    %vm1905 = vcmp.eq.f32.partialorder %v1904, 8.507059e+37
    %v1906 = vand.u32 %v1894, 2147483648
    %v1907 = vor.u32 1.1754944e-38, %v1906
    %v1908 = vsel %vm1905, %v1907, %v1903
    %v1909 = vmul.f32 1.0, %v1908
    %v1910 = vtanh.pop %v1856
    %v1911 = vxor.u32 %v1869, 2147483648
    %v1912 = vmul.f32 %v1911, 1.442695
    %v1913 = vpow.pop %v1912
    %v1914 = vadd.f32 %v1913, 1.0
    %v1915 = vrcp.pop %v1914
    %v1916 = vmul.f32 %v1914, %v1915
    %v1917 = vsub.f32 1.0, %v1916
    %v1918 = vmul.f32 %v1915, %v1917
    %v1919 = vadd.f32 %v1915, %v1918
    %vm1920 = vweird.f32 %v1914
    %vm1921 = vweird.f32 %v1915
    %vm1922 = vmor %vm1920, %vm1921
    %v1923 = vsel %vm1922, %v1915, %v1919
    %v1924 = vand.u32 2147483647, %v1914
    %vm1925 = vcmp.eq.f32.partialorder %v1924, 8.507059e+37
    %v1926 = vand.u32 %v1914, 2147483648
    %v1927 = vor.u32 1.1754944e-38, %v1926
    %v1928 = vsel %vm1925, %v1927, %v1923
    %v1929 = vmul.f32 1.0, %v1928
    %v1930 = vmul.f32 %v1909, %v1792
    %v1931 = vmul.f32 %v1890, %v1910
    %v1932 = vadd.f32 %v1930, %v1931
    %v1933 = vtanh.pop %v1932
    %v1934 = vmul.f32 %v1929, %v1933
    %v1935 = vld [vmem:[#allocation2 + $0x80] sm:$0xf0]
    %v1936 = vld [vmem:[#allocation2 + $0x88] sm:$0xf0]
    %v1937 = vld [vmem:[#allocation2 + $0x90] sm:$0xf0]
    %v1938 = vld [vmem:[#allocation2 + $0x98] sm:$0xf0]
    %v1939 = vld [vmem:[#allocation3 + $0x20] sm:$0xf]
    %v1940 = vld [vmem:[#allocation3 + $0x28] sm:$0xf]
    %v1941 = vld [vmem:[#allocation3 + $0x30] sm:$0xf]
    %v1942 = vld [vmem:[#allocation3 + $0x38] sm:$0xf]
    %v1947 = vrot.slane %v1939, 4
    %v1948 = vrot.slane %v1940, 4
    %v1949 = vrot.slane %v1941, 4
    %v1950 = vrot.slane %v1942, 4
    %v1955 = vadd.f32 %v1935, %v1947
    %v1956 = vadd.f32 %v1936, %v1948
    %v1957 = vadd.f32 %v1937, %v1949
    %v1958 = vadd.f32 %v1938, %v1950
    %v1959 = vpack.c.bf16 %v1934, %v1934
    %v1964 = vrot.slane %v1955, 4
    %v1965 = vrot.slane %v1956, 4
    %v1966 = vrot.slane %v1957, 4
    %v1967 = vrot.slane %v1958, 4
    %1972 = vmatpush.bf16.msra.mxu0 %v616
    %1973 = vmatpush.bf16.msra.mxu0 %v612
    %1974 = vmatpush.bf16.msra.mxu0 %v608
    %1975 = vmatpush.bf16.msra.mxu0 %v604
    %1976 = vmatpush.bf16.msra.mxu0 %v600
    %1977 = vmatpush.bf16.msra.mxu0 %v596
    %1978 = vmatpush.bf16.msra.mxu0 %v592
    %1979 = vmatpush.bf16.msra.mxu0 %v588
    %1980 = vmatmul.bf16.gmra.mxu0 %v1959
    %v1981 = vpop.f32.mrf.mxu0
    %v1982 = vadd.f32 %v1964, %v1981
    %v1983 = vpop.f32.mrf.mxu0
    %1984 = vdwg.mxu0
    %1985 = vmatpush.bf16.msra.mxu0 %v617
    %1986 = vmatpush.bf16.msra.mxu0 %v613
    %1987 = vmatpush.bf16.msra.mxu0 %v609
    %1988 = vmatpush.bf16.msra.mxu0 %v605
    %1989 = vmatpush.bf16.msra.mxu0 %v601
    %1990 = vmatpush.bf16.msra.mxu0 %v597
    %1991 = vmatpush.bf16.msra.mxu0 %v593
    %1992 = vmatpush.bf16.msra.mxu0 %v589
    %1993 = vmatmul.bf16.gmra.mxu0 %v1959
    %v1994 = vpop.f32.mrf.mxu0
    %v1995 = vadd.f32 %v1965, %v1994
    %v1996 = vpop.f32.mrf.mxu0
    %1997 = vdwg.mxu0
    %1998 = vmatpush.bf16.msra.mxu0 %v618
    %1999 = vmatpush.bf16.msra.mxu0 %v614
    %2000 = vmatpush.bf16.msra.mxu0 %v610
    %2001 = vmatpush.bf16.msra.mxu0 %v606
    %2002 = vmatpush.bf16.msra.mxu0 %v602
    %2003 = vmatpush.bf16.msra.mxu0 %v598
    %2004 = vmatpush.bf16.msra.mxu0 %v594
    %2005 = vmatpush.bf16.msra.mxu0 %v590
    %2006 = vmatmul.bf16.gmra.mxu0 %v1959
    %v2007 = vpop.f32.mrf.mxu0
    %v2008 = vadd.f32 %v1966, %v2007
    %v2009 = vpop.f32.mrf.mxu0
    %2010 = vdwg.mxu0
    %2011 = vmatpush.bf16.msra.mxu0 %v619
    %2012 = vmatpush.bf16.msra.mxu0 %v615
    %2013 = vmatpush.bf16.msra.mxu0 %v611
    %2014 = vmatpush.bf16.msra.mxu0 %v607
    %2015 = vmatpush.bf16.msra.mxu0 %v603
    %2016 = vmatpush.bf16.msra.mxu0 %v599
    %2017 = vmatpush.bf16.msra.mxu0 %v595
    %2018 = vmatpush.bf16.msra.mxu0 %v591
    %2019 = vmatmul.bf16.gmra.mxu0 %v1959
    %v2020 = vpop.f32.mrf.mxu0
    %v2021 = vadd.f32 %v1967, %v2020
    %v2022 = vpop.f32.mrf.mxu0
    %2023 = vdwg.mxu0
    %v2024 = vxor.u32 %v1982, 2147483648
    %v2025 = vmul.f32 %v2024, 1.442695
    %v2026 = vpow.pop %v2025
    %v2027 = vadd.f32 %v2026, 1.0
    %v2028 = vrcp.pop %v2027
    %v2029 = vmul.f32 %v2027, %v2028
    %v2030 = vsub.f32 1.0, %v2029
    %v2031 = vmul.f32 %v2028, %v2030
    %v2032 = vadd.f32 %v2028, %v2031
    %vm2033 = vweird.f32 %v2027
    %vm2034 = vweird.f32 %v2028
    %vm2035 = vmor %vm2033, %vm2034
    %v2036 = vsel %vm2035, %v2028, %v2032
    %v2037 = vand.u32 2147483647, %v2027
    %vm2038 = vcmp.eq.f32.partialorder %v2037, 8.507059e+37
    %v2039 = vand.u32 %v2027, 2147483648
    %v2040 = vor.u32 1.1754944e-38, %v2039
    %v2041 = vsel %vm2038, %v2040, %v2036
    %v2042 = vmul.f32 1.0, %v2041
    %v2043 = vxor.u32 %v1995, 2147483648
    %v2044 = vmul.f32 %v2043, 1.442695
    %v2045 = vpow.pop %v2044
    %v2046 = vadd.f32 %v2045, 1.0
    %v2047 = vrcp.pop %v2046
    %v2048 = vmul.f32 %v2046, %v2047
    %v2049 = vsub.f32 1.0, %v2048
    %v2050 = vmul.f32 %v2047, %v2049
    %v2051 = vadd.f32 %v2047, %v2050
    %vm2052 = vweird.f32 %v2046
    %vm2053 = vweird.f32 %v2047
    %vm2054 = vmor %vm2052, %vm2053
    %v2055 = vsel %vm2054, %v2047, %v2051
    %v2056 = vand.u32 2147483647, %v2046
    %vm2057 = vcmp.eq.f32.partialorder %v2056, 8.507059e+37
    %v2058 = vand.u32 %v2046, 2147483648
    %v2059 = vor.u32 1.1754944e-38, %v2058
    %v2060 = vsel %vm2057, %v2059, %v2055
    %v2061 = vmul.f32 1.0, %v2060
    %v2062 = vtanh.pop %v2008
    %v2063 = vxor.u32 %v2021, 2147483648
    %v2064 = vmul.f32 %v2063, 1.442695
    %v2065 = vpow.pop %v2064
    %v2066 = vadd.f32 %v2065, 1.0
    %v2067 = vrcp.pop %v2066
    %v2068 = vmul.f32 %v2066, %v2067
    %v2069 = vsub.f32 1.0, %v2068
    %v2070 = vmul.f32 %v2067, %v2069
    %v2071 = vadd.f32 %v2067, %v2070
    %vm2072 = vweird.f32 %v2066
    %vm2073 = vweird.f32 %v2067
    %vm2074 = vmor %vm2072, %vm2073
    %v2075 = vsel %vm2074, %v2067, %v2071
    %v2076 = vand.u32 2147483647, %v2066
    %vm2077 = vcmp.eq.f32.partialorder %v2076, 8.507059e+37
    %v2078 = vand.u32 %v2066, 2147483648
    %v2079 = vor.u32 1.1754944e-38, %v2078
    %v2080 = vsel %vm2077, %v2079, %v2075
    %v2081 = vmul.f32 1.0, %v2080
    %v2082 = vmul.f32 %v2061, %v1932
    %v2083 = vmul.f32 %v2042, %v2062
    %v2084 = vadd.f32 %v2082, %v2083
    %v2085 = vtanh.pop %v2084
    %v2086 = vmul.f32 %v2081, %v2085
    %v2087 = vld [vmem:[#allocation2 + $0xa0] sm:$0xf]
    %v2088 = vld [vmem:[#allocation2 + $0xa8] sm:$0xf]
    %v2089 = vld [vmem:[#allocation2 + $0xb0] sm:$0xf]
    %v2090 = vld [vmem:[#allocation2 + $0xb8] sm:$0xf]
    %v2091 = vld [vmem:[#allocation3] sm:$0xf0]
    %v2092 = vld [vmem:[#allocation3 + $0x8] sm:$0xf0]
    %v2093 = vld [vmem:[#allocation3 + $0x10] sm:$0xf0]
    %v2094 = vld [vmem:[#allocation3 + $0x18] sm:$0xf0]
    %v2099 = vrot.slane %v2091, 4
    %v2100 = vrot.slane %v2092, 4
    %v2101 = vrot.slane %v2093, 4
    %v2102 = vrot.slane %v2094, 4
    %v2107 = vadd.f32 %v2087, %v2099
    %v2108 = vadd.f32 %v2088, %v2100
    %v2109 = vadd.f32 %v2089, %v2101
    %v2110 = vadd.f32 %v2090, %v2102
    %v2111 = vpack.c.bf16 %v2086, %v2086
    %2112 = vmatpush.bf16.msra.mxu0 %v616
    %2113 = vmatpush.bf16.msra.mxu0 %v612
    %2114 = vmatpush.bf16.msra.mxu0 %v608
    %2115 = vmatpush.bf16.msra.mxu0 %v604
    %2116 = vmatpush.bf16.msra.mxu0 %v600
    %2117 = vmatpush.bf16.msra.mxu0 %v596
    %2118 = vmatpush.bf16.msra.mxu0 %v592
    %2119 = vmatpush.bf16.msra.mxu0 %v588
    %2120 = vmatmul.bf16.gmra.mxu0 %v2111
    %v2121 = vpop.f32.mrf.mxu0
    %v2122 = vadd.f32 %v2107, %v2121
    %v2123 = vpop.f32.mrf.mxu0
    %2124 = vdwg.mxu0
    %2125 = vmatpush.bf16.msra.mxu0 %v617
    %2126 = vmatpush.bf16.msra.mxu0 %v613
    %2127 = vmatpush.bf16.msra.mxu0 %v609
    %2128 = vmatpush.bf16.msra.mxu0 %v605
    %2129 = vmatpush.bf16.msra.mxu0 %v601
    %2130 = vmatpush.bf16.msra.mxu0 %v597
    %2131 = vmatpush.bf16.msra.mxu0 %v593
    %2132 = vmatpush.bf16.msra.mxu0 %v589
    %2133 = vmatmul.bf16.gmra.mxu0 %v2111
    %v2134 = vpop.f32.mrf.mxu0
    %v2135 = vadd.f32 %v2108, %v2134
    %v2136 = vpop.f32.mrf.mxu0
    %2137 = vdwg.mxu0
    %2138 = vmatpush.bf16.msra.mxu0 %v618
    %2139 = vmatpush.bf16.msra.mxu0 %v614
    %2140 = vmatpush.bf16.msra.mxu0 %v610
    %2141 = vmatpush.bf16.msra.mxu0 %v606
    %2142 = vmatpush.bf16.msra.mxu0 %v602
    %2143 = vmatpush.bf16.msra.mxu0 %v598
    %2144 = vmatpush.bf16.msra.mxu0 %v594
    %2145 = vmatpush.bf16.msra.mxu0 %v590
    %2146 = vmatmul.bf16.gmra.mxu0 %v2111
    %v2147 = vpop.f32.mrf.mxu0
    %v2148 = vadd.f32 %v2109, %v2147
    %v2149 = vpop.f32.mrf.mxu0
    %2150 = vdwg.mxu0
    %2151 = vmatpush.bf16.msra.mxu0 %v619
    %2152 = vmatpush.bf16.msra.mxu0 %v615
    %2153 = vmatpush.bf16.msra.mxu0 %v611
    %2154 = vmatpush.bf16.msra.mxu0 %v607
    %2155 = vmatpush.bf16.msra.mxu0 %v603
    %2156 = vmatpush.bf16.msra.mxu0 %v599
    %2157 = vmatpush.bf16.msra.mxu0 %v595
    %2158 = vmatpush.bf16.msra.mxu0 %v591
    %2159 = vmatmul.bf16.gmra.mxu0 %v2111
    %v2160 = vpop.f32.mrf.mxu0
    %v2161 = vadd.f32 %v2110, %v2160
    %v2162 = vpop.f32.mrf.mxu0
    %2163 = vdwg.mxu0
    %v2164 = vxor.u32 %v2122, 2147483648
    %v2165 = vmul.f32 %v2164, 1.442695
    %v2166 = vpow.pop %v2165
    %v2167 = vadd.f32 %v2166, 1.0
    %v2168 = vrcp.pop %v2167
    %v2169 = vmul.f32 %v2167, %v2168
    %v2170 = vsub.f32 1.0, %v2169
    %v2171 = vmul.f32 %v2168, %v2170
    %v2172 = vadd.f32 %v2168, %v2171
    %vm2173 = vweird.f32 %v2167
    %vm2174 = vweird.f32 %v2168
    %vm2175 = vmor %vm2173, %vm2174
    %v2176 = vsel %vm2175, %v2168, %v2172
    %v2177 = vand.u32 2147483647, %v2167
    %vm2178 = vcmp.eq.f32.partialorder %v2177, 8.507059e+37
    %v2179 = vand.u32 %v2167, 2147483648
    %v2180 = vor.u32 1.1754944e-38, %v2179
    %v2181 = vsel %vm2178, %v2180, %v2176
    %v2182 = vmul.f32 1.0, %v2181
    %v2183 = vxor.u32 %v2135, 2147483648
    %v2184 = vmul.f32 %v2183, 1.442695
    %v2185 = vpow.pop %v2184
    %v2186 = vadd.f32 %v2185, 1.0
    %v2187 = vrcp.pop %v2186
    %v2188 = vmul.f32 %v2186, %v2187
    %v2189 = vsub.f32 1.0, %v2188
    %v2190 = vmul.f32 %v2187, %v2189
    %v2191 = vadd.f32 %v2187, %v2190
    %vm2192 = vweird.f32 %v2186
    %vm2193 = vweird.f32 %v2187
    %vm2194 = vmor %vm2192, %vm2193
    %v2195 = vsel %vm2194, %v2187, %v2191
    %v2196 = vand.u32 2147483647, %v2186
    %vm2197 = vcmp.eq.f32.partialorder %v2196, 8.507059e+37
    %v2198 = vand.u32 %v2186, 2147483648
    %v2199 = vor.u32 1.1754944e-38, %v2198
    %v2200 = vsel %vm2197, %v2199, %v2195
    %v2201 = vmul.f32 1.0, %v2200
    %v2202 = vtanh.pop %v2148
    %v2203 = vxor.u32 %v2161, 2147483648
    %v2204 = vmul.f32 %v2203, 1.442695
    %v2205 = vpow.pop %v2204
    %v2206 = vadd.f32 %v2205, 1.0
    %v2207 = vrcp.pop %v2206
    %v2208 = vmul.f32 %v2206, %v2207
    %v2209 = vsub.f32 1.0, %v2208
    %v2210 = vmul.f32 %v2207, %v2209
    %v2211 = vadd.f32 %v2207, %v2210
    %vm2212 = vweird.f32 %v2206
    %vm2213 = vweird.f32 %v2207
    %vm2214 = vmor %vm2212, %vm2213
    %v2215 = vsel %vm2214, %v2207, %v2211
    %v2216 = vand.u32 2147483647, %v2206
    %vm2217 = vcmp.eq.f32.partialorder %v2216, 8.507059e+37
    %v2218 = vand.u32 %v2206, 2147483648
    %v2219 = vor.u32 1.1754944e-38, %v2218
    %v2220 = vsel %vm2217, %v2219, %v2215
    %v2221 = vmul.f32 1.0, %v2220
    %v2222 = vmul.f32 %v2201, %v2084
    %v2223 = vmul.f32 %v2182, %v2202
    %v2224 = vadd.f32 %v2222, %v2223
    %v2225 = vtanh.pop %v2224
    %v2226 = vmul.f32 %v2221, %v2225
    %v2227 = vld [vmem:[#allocation2 + $0xa0] sm:$0xf0]
    %v2228 = vld [vmem:[#allocation2 + $0xa8] sm:$0xf0]
    %v2229 = vld [vmem:[#allocation2 + $0xb0] sm:$0xf0]
    %v2230 = vld [vmem:[#allocation2 + $0xb8] sm:$0xf0]
    %v2231 = vld [vmem:[#allocation3] sm:$0xf]
    %v2232 = vld [vmem:[#allocation3 + $0x8] sm:$0xf]
    %v2233 = vld [vmem:[#allocation3 + $0x10] sm:$0xf]
    %v2234 = vld [vmem:[#allocation3 + $0x18] sm:$0xf]
    %v2239 = vrot.slane %v2231, 4
    %v2240 = vrot.slane %v2232, 4
    %v2241 = vrot.slane %v2233, 4
    %v2242 = vrot.slane %v2234, 4
    %v2247 = vadd.f32 %v2227, %v2239
    %v2248 = vadd.f32 %v2228, %v2240
    %v2249 = vadd.f32 %v2229, %v2241
    %v2250 = vadd.f32 %v2230, %v2242
    %v2251 = vpack.c.bf16 %v2226, %v2226
    %v2256 = vrot.slane %v2247, 4
    %v2257 = vrot.slane %v2248, 4
    %v2258 = vrot.slane %v2249, 4
    %v2259 = vrot.slane %v2250, 4
    %2264 = vmatpush.bf16.msra.mxu0 %v616
    %2265 = vmatpush.bf16.msra.mxu0 %v612
    %2266 = vmatpush.bf16.msra.mxu0 %v608
    %2267 = vmatpush.bf16.msra.mxu0 %v604
    %2268 = vmatpush.bf16.msra.mxu0 %v600
    %2269 = vmatpush.bf16.msra.mxu0 %v596
    %2270 = vmatpush.bf16.msra.mxu0 %v592
    %2271 = vmatpush.bf16.msra.mxu0 %v588
    %2272 = vmatmul.bf16.gmra.mxu0 %v2251
    %v2273 = vpop.f32.mrf.mxu0
    %v2274 = vadd.f32 %v2256, %v2273
    %v2275 = vpop.f32.mrf.mxu0
    %2276 = vdwg.mxu0
    %2277 = vmatpush.bf16.msra.mxu0 %v617
    %2278 = vmatpush.bf16.msra.mxu0 %v613
    %2279 = vmatpush.bf16.msra.mxu0 %v609
    %2280 = vmatpush.bf16.msra.mxu0 %v605
    %2281 = vmatpush.bf16.msra.mxu0 %v601
    %2282 = vmatpush.bf16.msra.mxu0 %v597
    %2283 = vmatpush.bf16.msra.mxu0 %v593
    %2284 = vmatpush.bf16.msra.mxu0 %v589
    %2285 = vmatmul.bf16.gmra.mxu0 %v2251
    %v2286 = vpop.f32.mrf.mxu0
    %v2287 = vadd.f32 %v2257, %v2286
    %v2288 = vpop.f32.mrf.mxu0
    %2289 = vdwg.mxu0
    %2290 = vmatpush.bf16.msra.mxu0 %v618
    %2291 = vmatpush.bf16.msra.mxu0 %v614
    %2292 = vmatpush.bf16.msra.mxu0 %v610
    %2293 = vmatpush.bf16.msra.mxu0 %v606
    %2294 = vmatpush.bf16.msra.mxu0 %v602
    %2295 = vmatpush.bf16.msra.mxu0 %v598
    %2296 = vmatpush.bf16.msra.mxu0 %v594
    %2297 = vmatpush.bf16.msra.mxu0 %v590
    %2298 = vmatmul.bf16.gmra.mxu0 %v2251
    %v2299 = vpop.f32.mrf.mxu0
    %v2300 = vadd.f32 %v2258, %v2299
    %v2301 = vpop.f32.mrf.mxu0
    %2302 = vdwg.mxu0
    %2303 = vmatpush.bf16.msra.mxu0 %v619
    %2304 = vmatpush.bf16.msra.mxu0 %v615
    %2305 = vmatpush.bf16.msra.mxu0 %v611
    %2306 = vmatpush.bf16.msra.mxu0 %v607
    %2307 = vmatpush.bf16.msra.mxu0 %v603
    %2308 = vmatpush.bf16.msra.mxu0 %v599
    %2309 = vmatpush.bf16.msra.mxu0 %v595
    %2310 = vmatpush.bf16.msra.mxu0 %v591
    %2311 = vmatmul.bf16.gmra.mxu0 %v2251
    %v2312 = vpop.f32.mrf.mxu0
    %v2313 = vadd.f32 %v2259, %v2312
    %v2314 = vpop.f32.mrf.mxu0
    %2315 = vdwg.mxu0
    %v2316 = vxor.u32 %v2274, 2147483648
    %v2317 = vmul.f32 %v2316, 1.442695
    %v2318 = vpow.pop %v2317
    %v2319 = vadd.f32 %v2318, 1.0
    %v2320 = vrcp.pop %v2319
    %v2321 = vmul.f32 %v2319, %v2320
    %v2322 = vsub.f32 1.0, %v2321
    %v2323 = vmul.f32 %v2320, %v2322
    %v2324 = vadd.f32 %v2320, %v2323
    %vm2325 = vweird.f32 %v2319
    %vm2326 = vweird.f32 %v2320
    %vm2327 = vmor %vm2325, %vm2326
    %v2328 = vsel %vm2327, %v2320, %v2324
    %v2329 = vand.u32 2147483647, %v2319
    %vm2330 = vcmp.eq.f32.partialorder %v2329, 8.507059e+37
    %v2331 = vand.u32 %v2319, 2147483648
    %v2332 = vor.u32 1.1754944e-38, %v2331
    %v2333 = vsel %vm2330, %v2332, %v2328
    %v2334 = vmul.f32 1.0, %v2333
    %v2335 = vxor.u32 %v2287, 2147483648
    %v2336 = vmul.f32 %v2335, 1.442695
    %v2337 = vpow.pop %v2336
    %v2338 = vadd.f32 %v2337, 1.0
    %v2339 = vrcp.pop %v2338
    %v2340 = vmul.f32 %v2338, %v2339
    %v2341 = vsub.f32 1.0, %v2340
    %v2342 = vmul.f32 %v2339, %v2341
    %v2343 = vadd.f32 %v2339, %v2342
    %vm2344 = vweird.f32 %v2338
    %vm2345 = vweird.f32 %v2339
    %vm2346 = vmor %vm2344, %vm2345
    %v2347 = vsel %vm2346, %v2339, %v2343
    %v2348 = vand.u32 2147483647, %v2338
    %vm2349 = vcmp.eq.f32.partialorder %v2348, 8.507059e+37
    %v2350 = vand.u32 %v2338, 2147483648
    %v2351 = vor.u32 1.1754944e-38, %v2350
    %v2352 = vsel %vm2349, %v2351, %v2347
    %v2353 = vmul.f32 1.0, %v2352
    %v2354 = vtanh.pop %v2300
    %v2355 = vxor.u32 %v2313, 2147483648
    %v2356 = vmul.f32 %v2355, 1.442695
    %v2357 = vpow.pop %v2356
    %v2358 = vadd.f32 %v2357, 1.0
    %v2359 = vrcp.pop %v2358
    %v2360 = vmul.f32 %v2358, %v2359
    %v2361 = vsub.f32 1.0, %v2360
    %v2362 = vmul.f32 %v2359, %v2361
    %v2363 = vadd.f32 %v2359, %v2362
    %vm2364 = vweird.f32 %v2358
    %vm2365 = vweird.f32 %v2359
    %vm2366 = vmor %vm2364, %vm2365
    %v2367 = vsel %vm2366, %v2359, %v2363
    %v2368 = vand.u32 2147483647, %v2358
    %vm2369 = vcmp.eq.f32.partialorder %v2368, 8.507059e+37
    %v2370 = vand.u32 %v2358, 2147483648
    %v2371 = vor.u32 1.1754944e-38, %v2370
    %v2372 = vsel %vm2369, %v2371, %v2367
    %v2373 = vmul.f32 1.0, %v2372
    %v2374 = vmul.f32 %v2353, %v2224
    %v2375 = vmul.f32 %v2334, %v2354
    %v2376 = vadd.f32 %v2374, %v2375
    %v2377 = vtanh.pop %v2376
    %v2378 = vmul.f32 %v2373, %v2377
    %v2380 = vrot.slane %v918, 4
    %v2383 = vrot.slane %v1210, 4
    %v2386 = vrot.slane %v1502, 4
    %v2389 = vrot.slane %v1794, 4
    %v2392 = vrot.slane %v2086, 4
    %v2395 = vrot.slane %v2378, 4
    %vm2397 = vcmask 1043456
    %v2398 = vsel %vm2397, %v766, %v2380
    %v2399 = vsel %vm2397, %v1058, %v2383
    %v2400 = vsel %vm2397, %v1350, %v2386
    %v2401 = vsel %vm2397, %v1642, %v2389
    %v2402 = vsel %vm2397, %v1934, %v2392
    %v2403 = vsel %vm2397, %v2226, %v2395
    %v2405 = vrot.slane %v2226, 4
    %v2408 = vrot.slane %v1934, 4
    %v2411 = vrot.slane %v1642, 4
    %v2414 = vrot.slane %v1350, 4
    %v2417 = vrot.slane %v1058, 4
    %v2420 = vrot.slane %v766, 4
    %v2422 = vsel %vm2397, %v2378, %v2405
    %v2423 = vsel %vm2397, %v2086, %v2408
    %v2424 = vsel %vm2397, %v1794, %v2411
    %v2425 = vsel %vm2397, %v1502, %v2414
    %v2426 = vsel %vm2397, %v1210, %v2417
    %v2427 = vsel %vm2397, %v918, %v2420
    %vm2428 = vcmask 523264
    %v2429 = vsel %vm2428, %v2398, %v2422
    %v2430 = vsel %vm2428, %v2399, %v2423
    %v2431 = vsel %vm2428, %v2400, %v2424
    %v2432 = vsel %vm2428, %v2401, %v2425
    %v2433 = vsel %vm2428, %v2402, %v2426
    %v2434 = vsel %vm2428, %v2403, %v2427
    %v2435 = vpack.c.bf16 %v2430, %v2429
    %v2436 = vpack.c.bf16 %v2432, %v2431
    %v2437 = vpack.c.bf16 %v2434, %v2433
    %v2438 = vld [vmem:[#allocation6] sm:$0xff]
    %v2439 = vld [vmem:[#allocation6 + $0x8] sm:$0xff]
    %v2440 = vld [vmem:[#allocation6 + $0x10] sm:$0xff]
    %v2441 = vld [vmem:[#allocation6 + $0x18] sm:$0xff]
    %v2442 = vld [vmem:[#allocation6 + $0x20] sm:$0xff]
    %v2443 = vld [vmem:[#allocation6 + $0x28] sm:$0xff]
    %v2444 = vld [vmem:[#allocation6 + $0x30] sm:$0xff]
    %v2445 = vld [vmem:[#allocation6 + $0x38] sm:$0xff]
    %v2446 = vld [vmem:[#allocation6 + $0x40] sm:$0xff]
    %v2447 = vld [vmem:[#allocation6 + $0x48] sm:$0xff]
    %v2448 = vld [vmem:[#allocation6 + $0x50] sm:$0xff]
    %v2449 = vld [vmem:[#allocation6 + $0x58] sm:$0xff]
    %v2450 = vld [vmem:[#allocation6 + $0x60] sm:$0xff]
    %v2451 = vld [vmem:[#allocation6 + $0x68] sm:$0xff]
    %v2452 = vld [vmem:[#allocation6 + $0x70] sm:$0xff]
    %v2453 = vld [vmem:[#allocation6 + $0x78] sm:$0xff]
    %v2454 = vld [vmem:[#allocation6 + $0x80] sm:$0xff]
    %v2455 = vld [vmem:[#allocation6 + $0x88] sm:$0xff]
    %v2456 = vld [vmem:[#allocation6 + $0x90] sm:$0xff]
    %v2457 = vld [vmem:[#allocation6 + $0x98] sm:$0xff]
    %v2458 = vld [vmem:[#allocation6 + $0xa0] sm:$0xff]
    %v2459 = vld [vmem:[#allocation6 + $0xa8] sm:$0xff]
    %v2460 = vld [vmem:[#allocation6 + $0xb0] sm:$0xff]
    %v2461 = vld [vmem:[#allocation6 + $0xb8] sm:$0xff]
    %v2462 = vld [vmem:[#allocation6 + $0xc0] sm:$0xff]
    %v2463 = vld [vmem:[#allocation6 + $0xc8] sm:$0xff]
    %v2464 = vld [vmem:[#allocation6 + $0xd0] sm:$0xff]
    %v2465 = vld [vmem:[#allocation6 + $0xd8] sm:$0xff]
    %v2466 = vld [vmem:[#allocation6 + $0xe0] sm:$0xff]
    %v2467 = vld [vmem:[#allocation6 + $0xe8] sm:$0xff]
    %v2468 = vld [vmem:[#allocation6 + $0xf0] sm:$0xff]
    %v2469 = vld [vmem:[#allocation6 + $0xf8] sm:$0xff]
    %v2470 = vld [vmem:[#allocation8] sm:$0xff]
    %v2471 = vld [vmem:[#allocation8 + $0x8] sm:$0xff]
    %v2472 = vld [vmem:[#allocation8 + $0x10] sm:$0xff]
    %v2473 = vld [vmem:[#allocation8 + $0x18] sm:$0xff]
    %v2474 = vld [vmem:[#allocation8 + $0x20] sm:$0xff]
    %v2475 = vld [vmem:[#allocation8 + $0x28] sm:$0xff]
    %v2476 = vld [vmem:[#allocation8 + $0x30] sm:$0xff]
    %v2477 = vld [vmem:[#allocation8 + $0x38] sm:$0xff]
    %v2478 = vld [vmem:[#allocation8 + $0x40] sm:$0xff]
    %v2479 = vld [vmem:[#allocation8 + $0x48] sm:$0xff]
    %v2480 = vld [vmem:[#allocation8 + $0x50] sm:$0xff]
    %v2481 = vld [vmem:[#allocation8 + $0x58] sm:$0xff]
    %v2482 = vld [vmem:[#allocation8 + $0x60] sm:$0xff]
    %v2483 = vld [vmem:[#allocation8 + $0x68] sm:$0xff]
    %v2484 = vld [vmem:[#allocation8 + $0x70] sm:$0xff]
    %v2485 = vld [vmem:[#allocation8 + $0x78] sm:$0xff]
    %v2486 = vld [vmem:[#allocation8 + $0x80] sm:$0xff]
    %v2487 = vld [vmem:[#allocation8 + $0x88] sm:$0xff]
    %v2488 = vld [vmem:[#allocation8 + $0x90] sm:$0xff]
    %v2489 = vld [vmem:[#allocation8 + $0x98] sm:$0xff]
    %v2490 = vld [vmem:[#allocation8 + $0xa0] sm:$0xff]
    %v2491 = vld [vmem:[#allocation8 + $0xa8] sm:$0xff]
    %v2492 = vld [vmem:[#allocation8 + $0xb0] sm:$0xff]
    %v2493 = vld [vmem:[#allocation8 + $0xb8] sm:$0xff]
    %v2494 = vld [vmem:[#allocation8 + $0xc0] sm:$0xff]
    %v2495 = vld [vmem:[#allocation8 + $0xc8] sm:$0xff]
    %v2496 = vld [vmem:[#allocation8 + $0xd0] sm:$0xff]
    %v2497 = vld [vmem:[#allocation8 + $0xd8] sm:$0xff]
    %v2498 = vld [vmem:[#allocation8 + $0xe0] sm:$0xff]
    %v2499 = vld [vmem:[#allocation8 + $0xe8] sm:$0xff]
    %v2500 = vld [vmem:[#allocation8 + $0xf0] sm:$0xff]
    %v2501 = vld [vmem:[#allocation8 + $0xf8] sm:$0xff]
    %v2502 = vld [vmem:[#allocation9] sm:$0xff]
    %v2503 = vld [vmem:[#allocation9 + $0x8] sm:$0xff]
    %v2504 = vld [vmem:[#allocation9 + $0x10] sm:$0xff]
    %v2505 = vld [vmem:[#allocation9 + $0x18] sm:$0xff]
    %v2506 = vld [vmem:[#allocation9 + $0x20] sm:$0xff]
    %v2507 = vld [vmem:[#allocation9 + $0x28] sm:$0xff]
    %v2508 = vld [vmem:[#allocation9 + $0x30] sm:$0xff]
    %v2509 = vld [vmem:[#allocation9 + $0x38] sm:$0xff]
    %v2510 = vld [vmem:[#allocation9 + $0x40] sm:$0xff]
    %v2511 = vld [vmem:[#allocation9 + $0x48] sm:$0xff]
    %v2512 = vld [vmem:[#allocation9 + $0x50] sm:$0xff]
    %v2513 = vld [vmem:[#allocation9 + $0x58] sm:$0xff]
    %v2514 = vld [vmem:[#allocation9 + $0x60] sm:$0xff]
    %v2515 = vld [vmem:[#allocation9 + $0x68] sm:$0xff]
    %v2516 = vld [vmem:[#allocation9 + $0x70] sm:$0xff]
    %v2517 = vld [vmem:[#allocation9 + $0x78] sm:$0xff]
    %v2518 = vld [vmem:[#allocation9 + $0x80] sm:$0xff]
    %v2519 = vld [vmem:[#allocation9 + $0x88] sm:$0xff]
    %v2520 = vld [vmem:[#allocation9 + $0x90] sm:$0xff]
    %v2521 = vld [vmem:[#allocation9 + $0x98] sm:$0xff]
    %v2522 = vld [vmem:[#allocation9 + $0xa0] sm:$0xff]
    %v2523 = vld [vmem:[#allocation9 + $0xa8] sm:$0xff]
    %v2524 = vld [vmem:[#allocation9 + $0xb0] sm:$0xff]
    %v2525 = vld [vmem:[#allocation9 + $0xb8] sm:$0xff]
    %v2526 = vld [vmem:[#allocation9 + $0xc0] sm:$0xff]
    %v2527 = vld [vmem:[#allocation9 + $0xc8] sm:$0xff]
    %v2528 = vld [vmem:[#allocation9 + $0xd0] sm:$0xff]
    %v2529 = vld [vmem:[#allocation9 + $0xd8] sm:$0xff]
    %v2530 = vld [vmem:[#allocation9 + $0xe0] sm:$0xff]
    %v2531 = vld [vmem:[#allocation9 + $0xe8] sm:$0xff]
    %v2532 = vld [vmem:[#allocation9 + $0xf0] sm:$0xff]
    %v2533 = vld [vmem:[#allocation9 + $0xf8] sm:$0xff]
    %v2534 = vld [vmem:[%s8] sm:$0xf]
    %v2536 = vperm.slane %v2534, 0
    %v2537 = vperm.slane %v2534, 1
    %v2538 = vperm.slane %v2534, 2
    %v2539 = vperm.slane %v2534, 3
    %v2576 = vunpack.c.l.b16 %v2438
    %v2577 = vunpack.c.h.b16 %v2438
    %v2578 = vunpack.c.l.b16 %v2439
    %v2579 = vunpack.c.h.b16 %v2439
    %v2580 = vunpack.c.l.b16 %v2440
    %v2581 = vunpack.c.h.b16 %v2440
    %v2582 = vunpack.c.l.b16 %v2441
    %v2583 = vunpack.c.h.b16 %v2441
    %v2584 = vunpack.c.l.b16 %v2442
    %v2585 = vunpack.c.h.b16 %v2442
    %v2586 = vunpack.c.l.b16 %v2443
    %v2587 = vunpack.c.h.b16 %v2443
    %v2588 = vunpack.c.l.b16 %v2444
    %v2589 = vunpack.c.h.b16 %v2444
    %v2590 = vunpack.c.l.b16 %v2445
    %v2591 = vunpack.c.h.b16 %v2445
    %v2592 = vunpack.c.l.b16 %v2446
    %v2593 = vunpack.c.h.b16 %v2446
    %v2594 = vunpack.c.l.b16 %v2447
    %v2595 = vunpack.c.h.b16 %v2447
    %v2596 = vunpack.c.l.b16 %v2448
    %v2597 = vunpack.c.h.b16 %v2448
    %v2598 = vunpack.c.l.b16 %v2449
    %v2599 = vunpack.c.h.b16 %v2449
    %v2600 = vunpack.c.l.b16 %v2450
    %v2601 = vunpack.c.h.b16 %v2450
    %v2602 = vunpack.c.l.b16 %v2451
    %v2603 = vunpack.c.h.b16 %v2451
    %v2604 = vunpack.c.l.b16 %v2452
    %v2605 = vunpack.c.h.b16 %v2452
    %v2606 = vunpack.c.l.b16 %v2453
    %v2607 = vunpack.c.h.b16 %v2453
    %v2608 = vunpack.c.l.b16 %v2454
    %v2609 = vunpack.c.h.b16 %v2454
    %v2610 = vunpack.c.l.b16 %v2455
    %v2611 = vunpack.c.h.b16 %v2455
    %v2612 = vunpack.c.l.b16 %v2456
    %v2613 = vunpack.c.h.b16 %v2456
    %v2614 = vunpack.c.l.b16 %v2457
    %v2615 = vunpack.c.h.b16 %v2457
    %v2616 = vunpack.c.l.b16 %v2458
    %v2617 = vunpack.c.h.b16 %v2458
    %v2618 = vunpack.c.l.b16 %v2459
    %v2619 = vunpack.c.h.b16 %v2459
    %v2620 = vunpack.c.l.b16 %v2460
    %v2621 = vunpack.c.h.b16 %v2460
    %v2622 = vunpack.c.l.b16 %v2461
    %v2623 = vunpack.c.h.b16 %v2461
    %v2624 = vunpack.c.l.b16 %v2462
    %v2625 = vunpack.c.h.b16 %v2462
    %v2626 = vunpack.c.l.b16 %v2463
    %v2627 = vunpack.c.h.b16 %v2463
    %v2628 = vunpack.c.l.b16 %v2464
    %v2629 = vunpack.c.h.b16 %v2464
    %v2630 = vunpack.c.l.b16 %v2465
    %v2631 = vunpack.c.h.b16 %v2465
    %v2632 = vunpack.c.l.b16 %v2466
    %v2633 = vunpack.c.h.b16 %v2466
    %v2634 = vunpack.c.l.b16 %v2467
    %v2635 = vunpack.c.h.b16 %v2467
    %v2636 = vunpack.c.l.b16 %v2468
    %v2637 = vunpack.c.h.b16 %v2468
    %v2638 = vunpack.c.l.b16 %v2469
    %v2639 = vunpack.c.h.b16 %v2469
    %v2640 = vpack.c.b16 %v2580, %v2576
    %v2641 = vpack.c.b16 %v2581, %v2577
    %v2642 = vpack.c.b16 %v2582, %v2578
    %v2643 = vpack.c.b16 %v2583, %v2579
    %v2644 = vpack.c.b16 %v2588, %v2584
    %v2645 = vpack.c.b16 %v2589, %v2585
    %v2646 = vpack.c.b16 %v2590, %v2586
    %v2647 = vpack.c.b16 %v2591, %v2587
    %v2648 = vpack.c.b16 %v2596, %v2592
    %v2649 = vpack.c.b16 %v2597, %v2593
    %v2650 = vpack.c.b16 %v2598, %v2594
    %v2651 = vpack.c.b16 %v2599, %v2595
    %v2652 = vpack.c.b16 %v2604, %v2600
    %v2653 = vpack.c.b16 %v2605, %v2601
    %v2654 = vpack.c.b16 %v2606, %v2602
    %v2655 = vpack.c.b16 %v2607, %v2603
    %v2656 = vpack.c.b16 %v2612, %v2608
    %v2657 = vpack.c.b16 %v2613, %v2609
    %v2658 = vpack.c.b16 %v2614, %v2610
    %v2659 = vpack.c.b16 %v2615, %v2611
    %v2660 = vpack.c.b16 %v2620, %v2616
    %v2661 = vpack.c.b16 %v2621, %v2617
    %v2662 = vpack.c.b16 %v2622, %v2618
    %v2663 = vpack.c.b16 %v2623, %v2619
    %v2664 = vpack.c.b16 %v2628, %v2624
    %v2665 = vpack.c.b16 %v2629, %v2625
    %v2666 = vpack.c.b16 %v2630, %v2626
    %v2667 = vpack.c.b16 %v2631, %v2627
    %v2668 = vpack.c.b16 %v2636, %v2632
    %v2669 = vpack.c.b16 %v2637, %v2633
    %v2670 = vpack.c.b16 %v2638, %v2634
    %v2671 = vpack.c.b16 %v2639, %v2635
    %2704 = vmatpush.bf16.msra.mxu0 %v2668
    %2705 = vmatpush.bf16.msra.mxu0 %v2664
    %2706 = vmatpush.bf16.msra.mxu0 %v2660
    %2707 = vmatpush.bf16.msra.mxu0 %v2656
    %2708 = vmatpush.bf16.msra.mxu0 %v2652
    %2709 = vmatpush.bf16.msra.mxu0 %v2648
    %2710 = vmatpush.bf16.msra.mxu0 %v2644
    %2711 = vmatpush.bf16.msra.mxu0 %v2640
    %2712 = vmatmul.bf16.gmra.mxu0 %v2435
    %v2713 = vpop.f32.mrf.mxu0
    %v2714 = vadd.f32 %v2536, %v2713
    %v2715 = vpop.f32.mrf.mxu0
    %v2716 = vadd.f32 %v2536, %v2715
    %2717 = vmatmul.bf16.gmra.mxu0 %v2436
    %v2718 = vpop.f32.mrf.mxu0
    %v2719 = vadd.f32 %v2536, %v2718
    %v2720 = vpop.f32.mrf.mxu0
    %v2721 = vadd.f32 %v2536, %v2720
    %2722 = vmatmul.bf16.gmra.mxu0 %v2437
    %v2723 = vpop.f32.mrf.mxu0
    %v2724 = vadd.f32 %v2536, %v2723
    %v2725 = vpop.f32.mrf.mxu0
    %v2726 = vadd.f32 %v2536, %v2725
    %2727 = vdwg.mxu0
    %2728 = vmatpush.bf16.msra.mxu0 %v2669
    %2729 = vmatpush.bf16.msra.mxu0 %v2665
    %2730 = vmatpush.bf16.msra.mxu0 %v2661
    %2731 = vmatpush.bf16.msra.mxu0 %v2657
    %2732 = vmatpush.bf16.msra.mxu0 %v2653
    %2733 = vmatpush.bf16.msra.mxu0 %v2649
    %2734 = vmatpush.bf16.msra.mxu0 %v2645
    %2735 = vmatpush.bf16.msra.mxu0 %v2641
    %2736 = vmatmul.bf16.gmra.mxu0 %v2435
    %v2737 = vpop.f32.mrf.mxu0
    %v2738 = vadd.f32 %v2537, %v2737
    %v2739 = vpop.f32.mrf.mxu0
    %v2740 = vadd.f32 %v2537, %v2739
    %2741 = vmatmul.bf16.gmra.mxu0 %v2436
    %v2742 = vpop.f32.mrf.mxu0
    %v2743 = vadd.f32 %v2537, %v2742
    %v2744 = vpop.f32.mrf.mxu0
    %v2745 = vadd.f32 %v2537, %v2744
    %2746 = vmatmul.bf16.gmra.mxu0 %v2437
    %v2747 = vpop.f32.mrf.mxu0
    %v2748 = vadd.f32 %v2537, %v2747
    %v2749 = vpop.f32.mrf.mxu0
    %v2750 = vadd.f32 %v2537, %v2749
    %2751 = vdwg.mxu0
    %2752 = vmatpush.bf16.msra.mxu0 %v2670
    %2753 = vmatpush.bf16.msra.mxu0 %v2666
    %2754 = vmatpush.bf16.msra.mxu0 %v2662
    %2755 = vmatpush.bf16.msra.mxu0 %v2658
    %2756 = vmatpush.bf16.msra.mxu0 %v2654
    %2757 = vmatpush.bf16.msra.mxu0 %v2650
    %2758 = vmatpush.bf16.msra.mxu0 %v2646
    %2759 = vmatpush.bf16.msra.mxu0 %v2642
    %2760 = vmatmul.bf16.gmra.mxu0 %v2435
    %v2761 = vpop.f32.mrf.mxu0
    %v2762 = vadd.f32 %v2538, %v2761
    %v2763 = vpop.f32.mrf.mxu0
    %v2764 = vadd.f32 %v2538, %v2763
    %2765 = vmatmul.bf16.gmra.mxu0 %v2436
    %v2766 = vpop.f32.mrf.mxu0
    %v2767 = vadd.f32 %v2538, %v2766
    %v2768 = vpop.f32.mrf.mxu0
    %v2769 = vadd.f32 %v2538, %v2768
    %2770 = vmatmul.bf16.gmra.mxu0 %v2437
    %v2771 = vpop.f32.mrf.mxu0
    %v2772 = vadd.f32 %v2538, %v2771
    %v2773 = vpop.f32.mrf.mxu0
    %v2774 = vadd.f32 %v2538, %v2773
    %2775 = vdwg.mxu0
    %2776 = vmatpush.bf16.msra.mxu0 %v2671
    %2777 = vmatpush.bf16.msra.mxu0 %v2667
    %2778 = vmatpush.bf16.msra.mxu0 %v2663
    %2779 = vmatpush.bf16.msra.mxu0 %v2659
    %2780 = vmatpush.bf16.msra.mxu0 %v2655
    %2781 = vmatpush.bf16.msra.mxu0 %v2651
    %2782 = vmatpush.bf16.msra.mxu0 %v2647
    %2783 = vmatpush.bf16.msra.mxu0 %v2643
    %2784 = vmatmul.bf16.gmra.mxu0 %v2435
    %v2785 = vpop.f32.mrf.mxu0
    %v2786 = vadd.f32 %v2539, %v2785
    %v2787 = vpop.f32.mrf.mxu0
    %v2788 = vadd.f32 %v2539, %v2787
    %2789 = vmatmul.bf16.gmra.mxu0 %v2436
    %v2790 = vpop.f32.mrf.mxu0
    %v2791 = vadd.f32 %v2539, %v2790
    %v2792 = vpop.f32.mrf.mxu0
    %v2793 = vadd.f32 %v2539, %v2792
    %2794 = vmatmul.bf16.gmra.mxu0 %v2437
    %v2795 = vpop.f32.mrf.mxu0
    %v2796 = vadd.f32 %v2539, %v2795
    %v2797 = vpop.f32.mrf.mxu0
    %v2798 = vadd.f32 %v2539, %v2797
    %2799 = vdwg.mxu0
    %2800 = vst [vmem:[#allocation2] sm:$0xff] %v2714
    %2801 = vst [vmem:[#allocation2 + $0x8] sm:$0xff] %v2738
    %2802 = vst [vmem:[#allocation2 + $0x10] sm:$0xff] %v2762
    %2803 = vst [vmem:[#allocation2 + $0x18] sm:$0xff] %v2786
    %2804 = vst [vmem:[#allocation2 + $0x20] sm:$0xff] %v2716
    %2805 = vst [vmem:[#allocation2 + $0x28] sm:$0xff] %v2740
    %2806 = vst [vmem:[#allocation2 + $0x30] sm:$0xff] %v2764
    %2807 = vst [vmem:[#allocation2 + $0x38] sm:$0xff] %v2788
    %2808 = vst [vmem:[#allocation2 + $0x40] sm:$0xff] %v2719
    %2809 = vst [vmem:[#allocation2 + $0x48] sm:$0xff] %v2743
    %2810 = vst [vmem:[#allocation2 + $0x50] sm:$0xff] %v2767
    %2811 = vst [vmem:[#allocation2 + $0x58] sm:$0xff] %v2791
    %2812 = vst [vmem:[#allocation2 + $0x60] sm:$0xff] %v2721
    %2813 = vst [vmem:[#allocation2 + $0x68] sm:$0xff] %v2745
    %2814 = vst [vmem:[#allocation2 + $0x70] sm:$0xff] %v2769
    %2815 = vst [vmem:[#allocation2 + $0x78] sm:$0xff] %v2793
    %2816 = vst [vmem:[#allocation2 + $0x80] sm:$0xff] %v2724
    %2817 = vst [vmem:[#allocation2 + $0x88] sm:$0xff] %v2748
    %2818 = vst [vmem:[#allocation2 + $0x90] sm:$0xff] %v2772
    %2819 = vst [vmem:[#allocation2 + $0x98] sm:$0xff] %v2796
    %2820 = vst [vmem:[#allocation2 + $0xa0] sm:$0xff] %v2726
    %2821 = vst [vmem:[#allocation2 + $0xa8] sm:$0xff] %v2750
    %2822 = vst [vmem:[#allocation2 + $0xb0] sm:$0xff] %v2774
    %2823 = vst [vmem:[#allocation2 + $0xb8] sm:$0xff] %v2798
    %v2856 = vunpack.c.l.b16 %v2470
    %v2857 = vunpack.c.h.b16 %v2470
    %v2858 = vunpack.c.l.b16 %v2471
    %v2859 = vunpack.c.h.b16 %v2471
    %v2860 = vunpack.c.l.b16 %v2472
    %v2861 = vunpack.c.h.b16 %v2472
    %v2862 = vunpack.c.l.b16 %v2473
    %v2863 = vunpack.c.h.b16 %v2473
    %v2864 = vunpack.c.l.b16 %v2474
    %v2865 = vunpack.c.h.b16 %v2474
    %v2866 = vunpack.c.l.b16 %v2475
    %v2867 = vunpack.c.h.b16 %v2475
    %v2868 = vunpack.c.l.b16 %v2476
    %v2869 = vunpack.c.h.b16 %v2476
    %v2870 = vunpack.c.l.b16 %v2477
    %v2871 = vunpack.c.h.b16 %v2477
    %v2872 = vunpack.c.l.b16 %v2478
    %v2873 = vunpack.c.h.b16 %v2478
    %v2874 = vunpack.c.l.b16 %v2479
    %v2875 = vunpack.c.h.b16 %v2479
    %v2876 = vunpack.c.l.b16 %v2480
    %v2877 = vunpack.c.h.b16 %v2480
    %v2878 = vunpack.c.l.b16 %v2481
    %v2879 = vunpack.c.h.b16 %v2481
    %v2880 = vunpack.c.l.b16 %v2482
    %v2881 = vunpack.c.h.b16 %v2482
    %v2882 = vunpack.c.l.b16 %v2483
    %v2883 = vunpack.c.h.b16 %v2483
    %v2884 = vunpack.c.l.b16 %v2484
    %v2885 = vunpack.c.h.b16 %v2484
    %v2886 = vunpack.c.l.b16 %v2485
    %v2887 = vunpack.c.h.b16 %v2485
    %v2888 = vunpack.c.l.b16 %v2486
    %v2889 = vunpack.c.h.b16 %v2486
    %v2890 = vunpack.c.l.b16 %v2487
    %v2891 = vunpack.c.h.b16 %v2487
    %v2892 = vunpack.c.l.b16 %v2488
    %v2893 = vunpack.c.h.b16 %v2488
    %v2894 = vunpack.c.l.b16 %v2489
    %v2895 = vunpack.c.h.b16 %v2489
    %v2896 = vunpack.c.l.b16 %v2490
    %v2897 = vunpack.c.h.b16 %v2490
    %v2898 = vunpack.c.l.b16 %v2491
    %v2899 = vunpack.c.h.b16 %v2491
    %v2900 = vunpack.c.l.b16 %v2492
    %v2901 = vunpack.c.h.b16 %v2492
    %v2902 = vunpack.c.l.b16 %v2493
    %v2903 = vunpack.c.h.b16 %v2493
    %v2904 = vunpack.c.l.b16 %v2494
    %v2905 = vunpack.c.h.b16 %v2494
    %v2906 = vunpack.c.l.b16 %v2495
    %v2907 = vunpack.c.h.b16 %v2495
    %v2908 = vunpack.c.l.b16 %v2496
    %v2909 = vunpack.c.h.b16 %v2496
    %v2910 = vunpack.c.l.b16 %v2497
    %v2911 = vunpack.c.h.b16 %v2497
    %v2912 = vunpack.c.l.b16 %v2498
    %v2913 = vunpack.c.h.b16 %v2498
    %v2914 = vunpack.c.l.b16 %v2499
    %v2915 = vunpack.c.h.b16 %v2499
    %v2916 = vunpack.c.l.b16 %v2500
    %v2917 = vunpack.c.h.b16 %v2500
    %v2918 = vunpack.c.l.b16 %v2501
    %v2919 = vunpack.c.h.b16 %v2501
    %v2920 = vpack.c.b16 %v2860, %v2856
    %v2921 = vpack.c.b16 %v2861, %v2857
    %v2922 = vpack.c.b16 %v2862, %v2858
    %v2923 = vpack.c.b16 %v2863, %v2859
    %v2924 = vpack.c.b16 %v2868, %v2864
    %v2925 = vpack.c.b16 %v2869, %v2865
    %v2926 = vpack.c.b16 %v2870, %v2866
    %v2927 = vpack.c.b16 %v2871, %v2867
    %v2928 = vpack.c.b16 %v2876, %v2872
    %v2929 = vpack.c.b16 %v2877, %v2873
    %v2930 = vpack.c.b16 %v2878, %v2874
    %v2931 = vpack.c.b16 %v2879, %v2875
    %v2932 = vpack.c.b16 %v2884, %v2880
    %v2933 = vpack.c.b16 %v2885, %v2881
    %v2934 = vpack.c.b16 %v2886, %v2882
    %v2935 = vpack.c.b16 %v2887, %v2883
    %v2936 = vpack.c.b16 %v2892, %v2888
    %v2937 = vpack.c.b16 %v2893, %v2889
    %v2938 = vpack.c.b16 %v2894, %v2890
    %v2939 = vpack.c.b16 %v2895, %v2891
    %v2940 = vpack.c.b16 %v2900, %v2896
    %v2941 = vpack.c.b16 %v2901, %v2897
    %v2942 = vpack.c.b16 %v2902, %v2898
    %v2943 = vpack.c.b16 %v2903, %v2899
    %v2944 = vpack.c.b16 %v2908, %v2904
    %v2945 = vpack.c.b16 %v2909, %v2905
    %v2946 = vpack.c.b16 %v2910, %v2906
    %v2947 = vpack.c.b16 %v2911, %v2907
    %v2948 = vpack.c.b16 %v2916, %v2912
    %v2949 = vpack.c.b16 %v2917, %v2913
    %v2950 = vpack.c.b16 %v2918, %v2914
    %v2951 = vpack.c.b16 %v2919, %v2915
    %2984 = vmatpush.bf16.msra.mxu0 %v2948
    %2985 = vmatpush.bf16.msra.mxu0 %v2944
    %2986 = vmatpush.bf16.msra.mxu0 %v2940
    %2987 = vmatpush.bf16.msra.mxu0 %v2936
    %2988 = vmatpush.bf16.msra.mxu0 %v2932
    %2989 = vmatpush.bf16.msra.mxu0 %v2928
    %2990 = vmatpush.bf16.msra.mxu0 %v2924
    %2991 = vmatpush.bf16.msra.mxu0 %v2920
    %2992 = vmatmul.bf16.gmra.mxu0 %v2435
    %v2993 = vpop.f32.mrf.mxu0
    %v2994 = vadd.f32 0.0, %v2993
    %v2995 = vpop.f32.mrf.mxu0
    %v2996 = vadd.f32 0.0, %v2995
    %2997 = vmatmul.bf16.gmra.mxu0 %v2436
    %v2998 = vpop.f32.mrf.mxu0
    %v2999 = vadd.f32 0.0, %v2998
    %v3000 = vpop.f32.mrf.mxu0
    %v3001 = vadd.f32 0.0, %v3000
    %3002 = vmatmul.bf16.gmra.mxu0 %v2437
    %v3003 = vpop.f32.mrf.mxu0
    %v3004 = vadd.f32 0.0, %v3003
    %v3005 = vpop.f32.mrf.mxu0
    %v3006 = vadd.f32 0.0, %v3005
    %3007 = vdwg.mxu0
    %3008 = vmatpush.bf16.msra.mxu0 %v2949
    %3009 = vmatpush.bf16.msra.mxu0 %v2945
    %3010 = vmatpush.bf16.msra.mxu0 %v2941
    %3011 = vmatpush.bf16.msra.mxu0 %v2937
    %3012 = vmatpush.bf16.msra.mxu0 %v2933
    %3013 = vmatpush.bf16.msra.mxu0 %v2929
    %3014 = vmatpush.bf16.msra.mxu0 %v2925
    %3015 = vmatpush.bf16.msra.mxu0 %v2921
    %3016 = vmatmul.bf16.gmra.mxu0 %v2435
    %v3017 = vpop.f32.mrf.mxu0
    %v3018 = vadd.f32 0.0, %v3017
    %v3019 = vpop.f32.mrf.mxu0
    %v3020 = vadd.f32 0.0, %v3019
    %3021 = vmatmul.bf16.gmra.mxu0 %v2436
    %v3022 = vpop.f32.mrf.mxu0
    %v3023 = vadd.f32 0.0, %v3022
    %v3024 = vpop.f32.mrf.mxu0
    %v3025 = vadd.f32 0.0, %v3024
    %3026 = vmatmul.bf16.gmra.mxu0 %v2437
    %v3027 = vpop.f32.mrf.mxu0
    %v3028 = vadd.f32 0.0, %v3027
    %v3029 = vpop.f32.mrf.mxu0
    %v3030 = vadd.f32 0.0, %v3029
    %3031 = vdwg.mxu0
    %3032 = vmatpush.bf16.msra.mxu0 %v2950
    %3033 = vmatpush.bf16.msra.mxu0 %v2946
    %3034 = vmatpush.bf16.msra.mxu0 %v2942
    %3035 = vmatpush.bf16.msra.mxu0 %v2938
    %3036 = vmatpush.bf16.msra.mxu0 %v2934
    %3037 = vmatpush.bf16.msra.mxu0 %v2930
    %3038 = vmatpush.bf16.msra.mxu0 %v2926
    %3039 = vmatpush.bf16.msra.mxu0 %v2922
    %3040 = vmatmul.bf16.gmra.mxu0 %v2435
    %v3041 = vpop.f32.mrf.mxu0
    %v3042 = vadd.f32 0.0, %v3041
    %v3043 = vpop.f32.mrf.mxu0
    %v3044 = vadd.f32 0.0, %v3043
    %3045 = vmatmul.bf16.gmra.mxu0 %v2436
    %v3046 = vpop.f32.mrf.mxu0
    %v3047 = vadd.f32 0.0, %v3046
    %v3048 = vpop.f32.mrf.mxu0
    %v3049 = vadd.f32 0.0, %v3048
    %3050 = vmatmul.bf16.gmra.mxu0 %v2437
    %v3051 = vpop.f32.mrf.mxu0
    %v3052 = vadd.f32 0.0, %v3051
    %v3053 = vpop.f32.mrf.mxu0
    %v3054 = vadd.f32 0.0, %v3053
    %3055 = vdwg.mxu0
    %3056 = vmatpush.bf16.msra.mxu0 %v2951
    %3057 = vmatpush.bf16.msra.mxu0 %v2947
    %3058 = vmatpush.bf16.msra.mxu0 %v2943
    %3059 = vmatpush.bf16.msra.mxu0 %v2939
    %3060 = vmatpush.bf16.msra.mxu0 %v2935
    %3061 = vmatpush.bf16.msra.mxu0 %v2931
    %3062 = vmatpush.bf16.msra.mxu0 %v2927
    %3063 = vmatpush.bf16.msra.mxu0 %v2923
    %3064 = vmatmul.bf16.gmra.mxu0 %v2435
    %v3065 = vpop.f32.mrf.mxu0
    %v3066 = vadd.f32 0.0, %v3065
    %v3067 = vpop.f32.mrf.mxu0
    %v3068 = vadd.f32 0.0, %v3067
    %3069 = vmatmul.bf16.gmra.mxu0 %v2436
    %v3070 = vpop.f32.mrf.mxu0
    %v3071 = vadd.f32 0.0, %v3070
    %v3072 = vpop.f32.mrf.mxu0
    %v3073 = vadd.f32 0.0, %v3072
    %3074 = vmatmul.bf16.gmra.mxu0 %v2437
    %v3075 = vpop.f32.mrf.mxu0
    %v3076 = vadd.f32 0.0, %v3075
    %v3077 = vpop.f32.mrf.mxu0
    %v3078 = vadd.f32 0.0, %v3077
    %3079 = vdwg.mxu0
    %3080 = vst [vmem:[#allocation3] sm:$0xff] %v2994
    %3081 = vst [vmem:[#allocation3 + $0x8] sm:$0xff] %v3018
    %3082 = vst [vmem:[#allocation3 + $0x10] sm:$0xff] %v3042
    %3083 = vst [vmem:[#allocation3 + $0x18] sm:$0xff] %v3066
    %3084 = vst [vmem:[#allocation3 + $0x20] sm:$0xff] %v2996
    %3085 = vst [vmem:[#allocation3 + $0x28] sm:$0xff] %v3020
    %3086 = vst [vmem:[#allocation3 + $0x30] sm:$0xff] %v3044
    %3087 = vst [vmem:[#allocation3 + $0x38] sm:$0xff] %v3068
    %3088 = vst [vmem:[#allocation3 + $0x40] sm:$0xff] %v2999
    %3089 = vst [vmem:[#allocation3 + $0x48] sm:$0xff] %v3023
    %3090 = vst [vmem:[#allocation3 + $0x50] sm:$0xff] %v3047
    %3091 = vst [vmem:[#allocation3 + $0x58] sm:$0xff] %v3071
    %3092 = vst [vmem:[#allocation3 + $0x60] sm:$0xff] %v3001
    %3093 = vst [vmem:[#allocation3 + $0x68] sm:$0xff] %v3025
    %3094 = vst [vmem:[#allocation3 + $0x70] sm:$0xff] %v3049
    %3095 = vst [vmem:[#allocation3 + $0x78] sm:$0xff] %v3073
    %3096 = vst [vmem:[#allocation3 + $0x80] sm:$0xff] %v3004
    %3097 = vst [vmem:[#allocation3 + $0x88] sm:$0xff] %v3028
    %3098 = vst [vmem:[#allocation3 + $0x90] sm:$0xff] %v3052
    %3099 = vst [vmem:[#allocation3 + $0x98] sm:$0xff] %v3076
    %3100 = vst [vmem:[#allocation3 + $0xa0] sm:$0xff] %v3006
    %3101 = vst [vmem:[#allocation3 + $0xa8] sm:$0xff] %v3030
    %3102 = vst [vmem:[#allocation3 + $0xb0] sm:$0xff] %v3054
    %3103 = vst [vmem:[#allocation3 + $0xb8] sm:$0xff] %v3078
    %v3104 = vld [vmem:[#allocation2] sm:$0xf]
    %v3105 = vld [vmem:[#allocation2 + $0x8] sm:$0xf]
    %v3106 = vld [vmem:[#allocation2 + $0x10] sm:$0xf]
    %v3107 = vld [vmem:[#allocation2 + $0x18] sm:$0xf]
    %v3108 = vld [vmem:[#allocation3 + $0xa0] sm:$0xf0]
    %v3109 = vld [vmem:[#allocation3 + $0xa8] sm:$0xf0]
    %v3110 = vld [vmem:[#allocation3 + $0xb0] sm:$0xf0]
    %v3111 = vld [vmem:[#allocation3 + $0xb8] sm:$0xf0]
    %v3116 = vrot.slane %v3108, 4
    %v3117 = vrot.slane %v3109, 4
    %v3118 = vrot.slane %v3110, 4
    %v3119 = vrot.slane %v3111, 4
    %v3124 = vadd.f32 %v3104, %v3116
    %v3125 = vadd.f32 %v3105, %v3117
    %v3126 = vadd.f32 %v3106, %v3118
    %v3127 = vadd.f32 %v3107, %v3119
    %v3160 = vunpack.c.l.b16 %v2502
    %v3161 = vunpack.c.h.b16 %v2502
    %v3162 = vunpack.c.l.b16 %v2503
    %v3163 = vunpack.c.h.b16 %v2503
    %v3164 = vunpack.c.l.b16 %v2504
    %v3165 = vunpack.c.h.b16 %v2504
    %v3166 = vunpack.c.l.b16 %v2505
    %v3167 = vunpack.c.h.b16 %v2505
    %v3168 = vunpack.c.l.b16 %v2506
    %v3169 = vunpack.c.h.b16 %v2506
    %v3170 = vunpack.c.l.b16 %v2507
    %v3171 = vunpack.c.h.b16 %v2507
    %v3172 = vunpack.c.l.b16 %v2508
    %v3173 = vunpack.c.h.b16 %v2508
    %v3174 = vunpack.c.l.b16 %v2509
    %v3175 = vunpack.c.h.b16 %v2509
    %v3176 = vunpack.c.l.b16 %v2510
    %v3177 = vunpack.c.h.b16 %v2510
    %v3178 = vunpack.c.l.b16 %v2511
    %v3179 = vunpack.c.h.b16 %v2511
    %v3180 = vunpack.c.l.b16 %v2512
    %v3181 = vunpack.c.h.b16 %v2512
    %v3182 = vunpack.c.l.b16 %v2513
    %v3183 = vunpack.c.h.b16 %v2513
    %v3184 = vunpack.c.l.b16 %v2514
    %v3185 = vunpack.c.h.b16 %v2514
    %v3186 = vunpack.c.l.b16 %v2515
    %v3187 = vunpack.c.h.b16 %v2515
    %v3188 = vunpack.c.l.b16 %v2516
    %v3189 = vunpack.c.h.b16 %v2516
    %v3190 = vunpack.c.l.b16 %v2517
    %v3191 = vunpack.c.h.b16 %v2517
    %v3192 = vunpack.c.l.b16 %v2518
    %v3193 = vunpack.c.h.b16 %v2518
    %v3194 = vunpack.c.l.b16 %v2519
    %v3195 = vunpack.c.h.b16 %v2519
    %v3196 = vunpack.c.l.b16 %v2520
    %v3197 = vunpack.c.h.b16 %v2520
    %v3198 = vunpack.c.l.b16 %v2521
    %v3199 = vunpack.c.h.b16 %v2521
    %v3200 = vunpack.c.l.b16 %v2522
    %v3201 = vunpack.c.h.b16 %v2522
    %v3202 = vunpack.c.l.b16 %v2523
    %v3203 = vunpack.c.h.b16 %v2523
    %v3204 = vunpack.c.l.b16 %v2524
    %v3205 = vunpack.c.h.b16 %v2524
    %v3206 = vunpack.c.l.b16 %v2525
    %v3207 = vunpack.c.h.b16 %v2525
    %v3208 = vunpack.c.l.b16 %v2526
    %v3209 = vunpack.c.h.b16 %v2526
    %v3210 = vunpack.c.l.b16 %v2527
    %v3211 = vunpack.c.h.b16 %v2527
    %v3212 = vunpack.c.l.b16 %v2528
    %v3213 = vunpack.c.h.b16 %v2528
    %v3214 = vunpack.c.l.b16 %v2529
    %v3215 = vunpack.c.h.b16 %v2529
    %v3216 = vunpack.c.l.b16 %v2530
    %v3217 = vunpack.c.h.b16 %v2530
    %v3218 = vunpack.c.l.b16 %v2531
    %v3219 = vunpack.c.h.b16 %v2531
    %v3220 = vunpack.c.l.b16 %v2532
    %v3221 = vunpack.c.h.b16 %v2532
    %v3222 = vunpack.c.l.b16 %v2533
    %v3223 = vunpack.c.h.b16 %v2533
    %v3224 = vpack.c.b16 %v3164, %v3160
    %v3225 = vpack.c.b16 %v3165, %v3161
    %v3226 = vpack.c.b16 %v3166, %v3162
    %v3227 = vpack.c.b16 %v3167, %v3163
    %v3228 = vpack.c.b16 %v3172, %v3168
    %v3229 = vpack.c.b16 %v3173, %v3169
    %v3230 = vpack.c.b16 %v3174, %v3170
    %v3231 = vpack.c.b16 %v3175, %v3171
    %v3232 = vpack.c.b16 %v3180, %v3176
    %v3233 = vpack.c.b16 %v3181, %v3177
    %v3234 = vpack.c.b16 %v3182, %v3178
    %v3235 = vpack.c.b16 %v3183, %v3179
    %v3236 = vpack.c.b16 %v3188, %v3184
    %v3237 = vpack.c.b16 %v3189, %v3185
    %v3238 = vpack.c.b16 %v3190, %v3186
    %v3239 = vpack.c.b16 %v3191, %v3187
    %v3240 = vpack.c.b16 %v3196, %v3192
    %v3241 = vpack.c.b16 %v3197, %v3193
    %v3242 = vpack.c.b16 %v3198, %v3194
    %v3243 = vpack.c.b16 %v3199, %v3195
    %v3244 = vpack.c.b16 %v3204, %v3200
    %v3245 = vpack.c.b16 %v3205, %v3201
    %v3246 = vpack.c.b16 %v3206, %v3202
    %v3247 = vpack.c.b16 %v3207, %v3203
    %v3248 = vpack.c.b16 %v3212, %v3208
    %v3249 = vpack.c.b16 %v3213, %v3209
    %v3250 = vpack.c.b16 %v3214, %v3210
    %v3251 = vpack.c.b16 %v3215, %v3211
    %v3252 = vpack.c.b16 %v3220, %v3216
    %v3253 = vpack.c.b16 %v3221, %v3217
    %v3254 = vpack.c.b16 %v3222, %v3218
    %v3255 = vpack.c.b16 %v3223, %v3219
    %3288 = vmatpush.bf16.msra.mxu0 %v3252
    %3289 = vmatpush.bf16.msra.mxu0 %v3248
    %3290 = vmatpush.bf16.msra.mxu0 %v3244
    %3291 = vmatpush.bf16.msra.mxu0 %v3240
    %3292 = vmatpush.bf16.msra.mxu0 %v3236
    %3293 = vmatpush.bf16.msra.mxu0 %v3232
    %3294 = vmatpush.bf16.msra.mxu0 %v3228
    %3295 = vmatpush.bf16.msra.mxu0 %v3224
    %3296 = vmatmul.bf16.gmra.mxu0 0
    %v3297 = vpop.f32.mrf.mxu0
    %v3298 = vadd.f32 %v3124, %v3297
    %v3299 = vpop.f32.mrf.mxu0
    %3300 = vdwg.mxu0
    %3301 = vmatpush.bf16.msra.mxu0 %v3253
    %3302 = vmatpush.bf16.msra.mxu0 %v3249
    %3303 = vmatpush.bf16.msra.mxu0 %v3245
    %3304 = vmatpush.bf16.msra.mxu0 %v3241
    %3305 = vmatpush.bf16.msra.mxu0 %v3237
    %3306 = vmatpush.bf16.msra.mxu0 %v3233
    %3307 = vmatpush.bf16.msra.mxu0 %v3229
    %3308 = vmatpush.bf16.msra.mxu0 %v3225
    %3309 = vmatmul.bf16.gmra.mxu0 0
    %v3310 = vpop.f32.mrf.mxu0
    %v3311 = vadd.f32 %v3125, %v3310
    %v3312 = vpop.f32.mrf.mxu0
    %3313 = vdwg.mxu0
    %3314 = vmatpush.bf16.msra.mxu0 %v3254
    %3315 = vmatpush.bf16.msra.mxu0 %v3250
    %3316 = vmatpush.bf16.msra.mxu0 %v3246
    %3317 = vmatpush.bf16.msra.mxu0 %v3242
    %3318 = vmatpush.bf16.msra.mxu0 %v3238
    %3319 = vmatpush.bf16.msra.mxu0 %v3234
    %3320 = vmatpush.bf16.msra.mxu0 %v3230
    %3321 = vmatpush.bf16.msra.mxu0 %v3226
    %3322 = vmatmul.bf16.gmra.mxu0 0
    %v3323 = vpop.f32.mrf.mxu0
    %v3324 = vadd.f32 %v3126, %v3323
    %v3325 = vpop.f32.mrf.mxu0
    %3326 = vdwg.mxu0
    %3327 = vmatpush.bf16.msra.mxu0 %v3255
    %3328 = vmatpush.bf16.msra.mxu0 %v3251
    %3329 = vmatpush.bf16.msra.mxu0 %v3247
    %3330 = vmatpush.bf16.msra.mxu0 %v3243
    %3331 = vmatpush.bf16.msra.mxu0 %v3239
    %3332 = vmatpush.bf16.msra.mxu0 %v3235
    %3333 = vmatpush.bf16.msra.mxu0 %v3231
    %3334 = vmatpush.bf16.msra.mxu0 %v3227
    %3335 = vmatmul.bf16.gmra.mxu0 0
    %v3336 = vpop.f32.mrf.mxu0
    %v3337 = vadd.f32 %v3127, %v3336
    %v3338 = vpop.f32.mrf.mxu0
    %3339 = vdwg.mxu0
    %v3340 = vxor.u32 %v3298, 2147483648
    %v3341 = vmul.f32 %v3340, 1.442695
    %v3342 = vpow.pop %v3341
    %v3343 = vadd.f32 %v3342, 1.0
    %v3344 = vrcp.pop %v3343
    %v3345 = vmul.f32 %v3343, %v3344
    %v3346 = vsub.f32 1.0, %v3345
    %v3347 = vmul.f32 %v3344, %v3346
    %v3348 = vadd.f32 %v3344, %v3347
    %vm3349 = vweird.f32 %v3343
    %vm3350 = vweird.f32 %v3344
    %vm3351 = vmor %vm3349, %vm3350
    %v3352 = vsel %vm3351, %v3344, %v3348
    %v3353 = vand.u32 2147483647, %v3343
    %vm3354 = vcmp.eq.f32.partialorder %v3353, 8.507059e+37
    %v3355 = vand.u32 %v3343, 2147483648
    %v3356 = vor.u32 1.1754944e-38, %v3355
    %v3357 = vsel %vm3354, %v3356, %v3352
    %v3358 = vmul.f32 1.0, %v3357
    %v3359 = vxor.u32 %v3311, 2147483648
    %v3360 = vmul.f32 %v3359, 1.442695
    %v3361 = vpow.pop %v3360
    %v3362 = vadd.f32 %v3361, 1.0
    %v3363 = vrcp.pop %v3362
    %v3364 = vmul.f32 %v3362, %v3363
    %v3365 = vsub.f32 1.0, %v3364
    %v3366 = vmul.f32 %v3363, %v3365
    %v3367 = vadd.f32 %v3363, %v3366
    %vm3368 = vweird.f32 %v3362
    %vm3369 = vweird.f32 %v3363
    %vm3370 = vmor %vm3368, %vm3369
    %v3371 = vsel %vm3370, %v3363, %v3367
    %v3372 = vand.u32 2147483647, %v3362
    %vm3373 = vcmp.eq.f32.partialorder %v3372, 8.507059e+37
    %v3374 = vand.u32 %v3362, 2147483648
    %v3375 = vor.u32 1.1754944e-38, %v3374
    %v3376 = vsel %vm3373, %v3375, %v3371
    %v3377 = vmul.f32 1.0, %v3376
    %v3378 = vtanh.pop %v3324
    %v3379 = vxor.u32 %v3337, 2147483648
    %v3380 = vmul.f32 %v3379, 1.442695
    %v3381 = vpow.pop %v3380
    %v3382 = vadd.f32 %v3381, 1.0
    %v3383 = vrcp.pop %v3382
    %v3384 = vmul.f32 %v3382, %v3383
    %v3385 = vsub.f32 1.0, %v3384
    %v3386 = vmul.f32 %v3383, %v3385
    %v3387 = vadd.f32 %v3383, %v3386
    %vm3388 = vweird.f32 %v3382
    %vm3389 = vweird.f32 %v3383
    %vm3390 = vmor %vm3388, %vm3389
    %v3391 = vsel %vm3390, %v3383, %v3387
    %v3392 = vand.u32 2147483647, %v3382
    %vm3393 = vcmp.eq.f32.partialorder %v3392, 8.507059e+37
    %v3394 = vand.u32 %v3382, 2147483648
    %v3395 = vor.u32 1.1754944e-38, %v3394
    %v3396 = vsel %vm3393, %v3395, %v3391
    %v3397 = vmul.f32 1.0, %v3396
    %v3398 = vmul.f32 %v3377, 0.0
    %v3399 = vmul.f32 %v3358, %v3378
    %v3400 = vadd.f32 %v3398, %v3399
    %v3401 = vtanh.pop %v3400
    %v3402 = vmul.f32 %v3397, %v3401
    %v3403 = vld [vmem:[#allocation2] sm:$0xf0]
    %v3404 = vld [vmem:[#allocation2 + $0x8] sm:$0xf0]
    %v3405 = vld [vmem:[#allocation2 + $0x10] sm:$0xf0]
    %v3406 = vld [vmem:[#allocation2 + $0x18] sm:$0xf0]
    %v3407 = vld [vmem:[#allocation3 + $0xa0] sm:$0xf]
    %v3408 = vld [vmem:[#allocation3 + $0xa8] sm:$0xf]
    %v3409 = vld [vmem:[#allocation3 + $0xb0] sm:$0xf]
    %v3410 = vld [vmem:[#allocation3 + $0xb8] sm:$0xf]
    %v3415 = vrot.slane %v3407, 4
    %v3416 = vrot.slane %v3408, 4
    %v3417 = vrot.slane %v3409, 4
    %v3418 = vrot.slane %v3410, 4
    %v3423 = vadd.f32 %v3403, %v3415
    %v3424 = vadd.f32 %v3404, %v3416
    %v3425 = vadd.f32 %v3405, %v3417
    %v3426 = vadd.f32 %v3406, %v3418
    %v3427 = vpack.c.bf16 %v3402, %v3402
    %v3432 = vrot.slane %v3423, 4
    %v3433 = vrot.slane %v3424, 4
    %v3434 = vrot.slane %v3425, 4
    %v3435 = vrot.slane %v3426, 4
    %3440 = vmatpush.bf16.msra.mxu0 %v3252
    %3441 = vmatpush.bf16.msra.mxu0 %v3248
    %3442 = vmatpush.bf16.msra.mxu0 %v3244
    %3443 = vmatpush.bf16.msra.mxu0 %v3240
    %3444 = vmatpush.bf16.msra.mxu0 %v3236
    %3445 = vmatpush.bf16.msra.mxu0 %v3232
    %3446 = vmatpush.bf16.msra.mxu0 %v3228
    %3447 = vmatpush.bf16.msra.mxu0 %v3224
    %3448 = vmatmul.bf16.gmra.mxu0 %v3427
    %v3449 = vpop.f32.mrf.mxu0
    %v3450 = vadd.f32 %v3432, %v3449
    %v3451 = vpop.f32.mrf.mxu0
    %3452 = vdwg.mxu0
    %3453 = vmatpush.bf16.msra.mxu0 %v3253
    %3454 = vmatpush.bf16.msra.mxu0 %v3249
    %3455 = vmatpush.bf16.msra.mxu0 %v3245
    %3456 = vmatpush.bf16.msra.mxu0 %v3241
    %3457 = vmatpush.bf16.msra.mxu0 %v3237
    %3458 = vmatpush.bf16.msra.mxu0 %v3233
    %3459 = vmatpush.bf16.msra.mxu0 %v3229
    %3460 = vmatpush.bf16.msra.mxu0 %v3225
    %3461 = vmatmul.bf16.gmra.mxu0 %v3427
    %v3462 = vpop.f32.mrf.mxu0
    %v3463 = vadd.f32 %v3433, %v3462
    %v3464 = vpop.f32.mrf.mxu0
    %3465 = vdwg.mxu0
    %3466 = vmatpush.bf16.msra.mxu0 %v3254
    %3467 = vmatpush.bf16.msra.mxu0 %v3250
    %3468 = vmatpush.bf16.msra.mxu0 %v3246
    %3469 = vmatpush.bf16.msra.mxu0 %v3242
    %3470 = vmatpush.bf16.msra.mxu0 %v3238
    %3471 = vmatpush.bf16.msra.mxu0 %v3234
    %3472 = vmatpush.bf16.msra.mxu0 %v3230
    %3473 = vmatpush.bf16.msra.mxu0 %v3226
    %3474 = vmatmul.bf16.gmra.mxu0 %v3427
    %v3475 = vpop.f32.mrf.mxu0
    %v3476 = vadd.f32 %v3434, %v3475
    %v3477 = vpop.f32.mrf.mxu0
    %3478 = vdwg.mxu0
    %3479 = vmatpush.bf16.msra.mxu0 %v3255
    %3480 = vmatpush.bf16.msra.mxu0 %v3251
    %3481 = vmatpush.bf16.msra.mxu0 %v3247
    %3482 = vmatpush.bf16.msra.mxu0 %v3243
    %3483 = vmatpush.bf16.msra.mxu0 %v3239
    %3484 = vmatpush.bf16.msra.mxu0 %v3235
    %3485 = vmatpush.bf16.msra.mxu0 %v3231
    %3486 = vmatpush.bf16.msra.mxu0 %v3227
    %3487 = vmatmul.bf16.gmra.mxu0 %v3427
    %v3488 = vpop.f32.mrf.mxu0
    %v3489 = vadd.f32 %v3435, %v3488
    %v3490 = vpop.f32.mrf.mxu0
    %3491 = vdwg.mxu0
    %v3492 = vxor.u32 %v3450, 2147483648
    %v3493 = vmul.f32 %v3492, 1.442695
    %v3494 = vpow.pop %v3493
    %v3495 = vadd.f32 %v3494, 1.0
    %v3496 = vrcp.pop %v3495
    %v3497 = vmul.f32 %v3495, %v3496
    %v3498 = vsub.f32 1.0, %v3497
    %v3499 = vmul.f32 %v3496, %v3498
    %v3500 = vadd.f32 %v3496, %v3499
    %vm3501 = vweird.f32 %v3495
    %vm3502 = vweird.f32 %v3496
    %vm3503 = vmor %vm3501, %vm3502
    %v3504 = vsel %vm3503, %v3496, %v3500
    %v3505 = vand.u32 2147483647, %v3495
    %vm3506 = vcmp.eq.f32.partialorder %v3505, 8.507059e+37
    %v3507 = vand.u32 %v3495, 2147483648
    %v3508 = vor.u32 1.1754944e-38, %v3507
    %v3509 = vsel %vm3506, %v3508, %v3504
    %v3510 = vmul.f32 1.0, %v3509
    %v3511 = vxor.u32 %v3463, 2147483648
    %v3512 = vmul.f32 %v3511, 1.442695
    %v3513 = vpow.pop %v3512
    %v3514 = vadd.f32 %v3513, 1.0
    %v3515 = vrcp.pop %v3514
    %v3516 = vmul.f32 %v3514, %v3515
    %v3517 = vsub.f32 1.0, %v3516
    %v3518 = vmul.f32 %v3515, %v3517
    %v3519 = vadd.f32 %v3515, %v3518
    %vm3520 = vweird.f32 %v3514
    %vm3521 = vweird.f32 %v3515
    %vm3522 = vmor %vm3520, %vm3521
    %v3523 = vsel %vm3522, %v3515, %v3519
    %v3524 = vand.u32 2147483647, %v3514
    %vm3525 = vcmp.eq.f32.partialorder %v3524, 8.507059e+37
    %v3526 = vand.u32 %v3514, 2147483648
    %v3527 = vor.u32 1.1754944e-38, %v3526
    %v3528 = vsel %vm3525, %v3527, %v3523
    %v3529 = vmul.f32 1.0, %v3528
    %v3530 = vtanh.pop %v3476
    %v3531 = vxor.u32 %v3489, 2147483648
    %v3532 = vmul.f32 %v3531, 1.442695
    %v3533 = vpow.pop %v3532
    %v3534 = vadd.f32 %v3533, 1.0
    %v3535 = vrcp.pop %v3534
    %v3536 = vmul.f32 %v3534, %v3535
    %v3537 = vsub.f32 1.0, %v3536
    %v3538 = vmul.f32 %v3535, %v3537
    %v3539 = vadd.f32 %v3535, %v3538
    %vm3540 = vweird.f32 %v3534
    %vm3541 = vweird.f32 %v3535
    %vm3542 = vmor %vm3540, %vm3541
    %v3543 = vsel %vm3542, %v3535, %v3539
    %v3544 = vand.u32 2147483647, %v3534
    %vm3545 = vcmp.eq.f32.partialorder %v3544, 8.507059e+37
    %v3546 = vand.u32 %v3534, 2147483648
    %v3547 = vor.u32 1.1754944e-38, %v3546
    %v3548 = vsel %vm3545, %v3547, %v3543
    %v3549 = vmul.f32 1.0, %v3548
    %v3550 = vmul.f32 %v3529, %v3400
    %v3551 = vmul.f32 %v3510, %v3530
    %v3552 = vadd.f32 %v3550, %v3551
    %v3553 = vtanh.pop %v3552
    %v3554 = vmul.f32 %v3549, %v3553
    %v3555 = vld [vmem:[#allocation2 + $0x20] sm:$0xf]
    %v3556 = vld [vmem:[#allocation2 + $0x28] sm:$0xf]
    %v3557 = vld [vmem:[#allocation2 + $0x30] sm:$0xf]
    %v3558 = vld [vmem:[#allocation2 + $0x38] sm:$0xf]
    %v3559 = vld [vmem:[#allocation3 + $0x80] sm:$0xf0]
    %v3560 = vld [vmem:[#allocation3 + $0x88] sm:$0xf0]
    %v3561 = vld [vmem:[#allocation3 + $0x90] sm:$0xf0]
    %v3562 = vld [vmem:[#allocation3 + $0x98] sm:$0xf0]
    %v3567 = vrot.slane %v3559, 4
    %v3568 = vrot.slane %v3560, 4
    %v3569 = vrot.slane %v3561, 4
    %v3570 = vrot.slane %v3562, 4
    %v3575 = vadd.f32 %v3555, %v3567
    %v3576 = vadd.f32 %v3556, %v3568
    %v3577 = vadd.f32 %v3557, %v3569
    %v3578 = vadd.f32 %v3558, %v3570
    %v3579 = vpack.c.bf16 %v3554, %v3554
    %3580 = vmatpush.bf16.msra.mxu0 %v3252
    %3581 = vmatpush.bf16.msra.mxu0 %v3248
    %3582 = vmatpush.bf16.msra.mxu0 %v3244
    %3583 = vmatpush.bf16.msra.mxu0 %v3240
    %3584 = vmatpush.bf16.msra.mxu0 %v3236
    %3585 = vmatpush.bf16.msra.mxu0 %v3232
    %3586 = vmatpush.bf16.msra.mxu0 %v3228
    %3587 = vmatpush.bf16.msra.mxu0 %v3224
    %3588 = vmatmul.bf16.gmra.mxu0 %v3579
    %v3589 = vpop.f32.mrf.mxu0
    %v3590 = vadd.f32 %v3575, %v3589
    %v3591 = vpop.f32.mrf.mxu0
    %3592 = vdwg.mxu0
    %3593 = vmatpush.bf16.msra.mxu0 %v3253
    %3594 = vmatpush.bf16.msra.mxu0 %v3249
    %3595 = vmatpush.bf16.msra.mxu0 %v3245
    %3596 = vmatpush.bf16.msra.mxu0 %v3241
    %3597 = vmatpush.bf16.msra.mxu0 %v3237
    %3598 = vmatpush.bf16.msra.mxu0 %v3233
    %3599 = vmatpush.bf16.msra.mxu0 %v3229
    %3600 = vmatpush.bf16.msra.mxu0 %v3225
    %3601 = vmatmul.bf16.gmra.mxu0 %v3579
    %v3602 = vpop.f32.mrf.mxu0
    %v3603 = vadd.f32 %v3576, %v3602
    %v3604 = vpop.f32.mrf.mxu0
    %3605 = vdwg.mxu0
    %3606 = vmatpush.bf16.msra.mxu0 %v3254
    %3607 = vmatpush.bf16.msra.mxu0 %v3250
    %3608 = vmatpush.bf16.msra.mxu0 %v3246
    %3609 = vmatpush.bf16.msra.mxu0 %v3242
    %3610 = vmatpush.bf16.msra.mxu0 %v3238
    %3611 = vmatpush.bf16.msra.mxu0 %v3234
    %3612 = vmatpush.bf16.msra.mxu0 %v3230
    %3613 = vmatpush.bf16.msra.mxu0 %v3226
    %3614 = vmatmul.bf16.gmra.mxu0 %v3579
    %v3615 = vpop.f32.mrf.mxu0
    %v3616 = vadd.f32 %v3577, %v3615
    %v3617 = vpop.f32.mrf.mxu0
    %3618 = vdwg.mxu0
    %3619 = vmatpush.bf16.msra.mxu0 %v3255
    %3620 = vmatpush.bf16.msra.mxu0 %v3251
    %3621 = vmatpush.bf16.msra.mxu0 %v3247
    %3622 = vmatpush.bf16.msra.mxu0 %v3243
    %3623 = vmatpush.bf16.msra.mxu0 %v3239
    %3624 = vmatpush.bf16.msra.mxu0 %v3235
    %3625 = vmatpush.bf16.msra.mxu0 %v3231
    %3626 = vmatpush.bf16.msra.mxu0 %v3227
    %3627 = vmatmul.bf16.gmra.mxu0 %v3579
    %v3628 = vpop.f32.mrf.mxu0
    %v3629 = vadd.f32 %v3578, %v3628
    %v3630 = vpop.f32.mrf.mxu0
    %3631 = vdwg.mxu0
    %v3632 = vxor.u32 %v3590, 2147483648
    %v3633 = vmul.f32 %v3632, 1.442695
    %v3634 = vpow.pop %v3633
    %v3635 = vadd.f32 %v3634, 1.0
    %v3636 = vrcp.pop %v3635
    %v3637 = vmul.f32 %v3635, %v3636
    %v3638 = vsub.f32 1.0, %v3637
    %v3639 = vmul.f32 %v3636, %v3638
    %v3640 = vadd.f32 %v3636, %v3639
    %vm3641 = vweird.f32 %v3635
    %vm3642 = vweird.f32 %v3636
    %vm3643 = vmor %vm3641, %vm3642
    %v3644 = vsel %vm3643, %v3636, %v3640
    %v3645 = vand.u32 2147483647, %v3635
    %vm3646 = vcmp.eq.f32.partialorder %v3645, 8.507059e+37
    %v3647 = vand.u32 %v3635, 2147483648
    %v3648 = vor.u32 1.1754944e-38, %v3647
    %v3649 = vsel %vm3646, %v3648, %v3644
    %v3650 = vmul.f32 1.0, %v3649
    %v3651 = vxor.u32 %v3603, 2147483648
    %v3652 = vmul.f32 %v3651, 1.442695
    %v3653 = vpow.pop %v3652
    %v3654 = vadd.f32 %v3653, 1.0
    %v3655 = vrcp.pop %v3654
    %v3656 = vmul.f32 %v3654, %v3655
    %v3657 = vsub.f32 1.0, %v3656
    %v3658 = vmul.f32 %v3655, %v3657
    %v3659 = vadd.f32 %v3655, %v3658
    %vm3660 = vweird.f32 %v3654
    %vm3661 = vweird.f32 %v3655
    %vm3662 = vmor %vm3660, %vm3661
    %v3663 = vsel %vm3662, %v3655, %v3659
    %v3664 = vand.u32 2147483647, %v3654
    %vm3665 = vcmp.eq.f32.partialorder %v3664, 8.507059e+37
    %v3666 = vand.u32 %v3654, 2147483648
    %v3667 = vor.u32 1.1754944e-38, %v3666
    %v3668 = vsel %vm3665, %v3667, %v3663
    %v3669 = vmul.f32 1.0, %v3668
    %v3670 = vtanh.pop %v3616
    %v3671 = vxor.u32 %v3629, 2147483648
    %v3672 = vmul.f32 %v3671, 1.442695
    %v3673 = vpow.pop %v3672
    %v3674 = vadd.f32 %v3673, 1.0
    %v3675 = vrcp.pop %v3674
    %v3676 = vmul.f32 %v3674, %v3675
    %v3677 = vsub.f32 1.0, %v3676
    %v3678 = vmul.f32 %v3675, %v3677
    %v3679 = vadd.f32 %v3675, %v3678
    %vm3680 = vweird.f32 %v3674
    %vm3681 = vweird.f32 %v3675
    %vm3682 = vmor %vm3680, %vm3681
    %v3683 = vsel %vm3682, %v3675, %v3679
    %v3684 = vand.u32 2147483647, %v3674
    %vm3685 = vcmp.eq.f32.partialorder %v3684, 8.507059e+37
    %v3686 = vand.u32 %v3674, 2147483648
    %v3687 = vor.u32 1.1754944e-38, %v3686
    %v3688 = vsel %vm3685, %v3687, %v3683
    %v3689 = vmul.f32 1.0, %v3688
    %v3690 = vmul.f32 %v3669, %v3552
    %v3691 = vmul.f32 %v3650, %v3670
    %v3692 = vadd.f32 %v3690, %v3691
    %v3693 = vtanh.pop %v3692
    %v3694 = vmul.f32 %v3689, %v3693
    %v3695 = vld [vmem:[#allocation2 + $0x20] sm:$0xf0]
    %v3696 = vld [vmem:[#allocation2 + $0x28] sm:$0xf0]
    %v3697 = vld [vmem:[#allocation2 + $0x30] sm:$0xf0]
    %v3698 = vld [vmem:[#allocation2 + $0x38] sm:$0xf0]
    %v3699 = vld [vmem:[#allocation3 + $0x80] sm:$0xf]
    %v3700 = vld [vmem:[#allocation3 + $0x88] sm:$0xf]
    %v3701 = vld [vmem:[#allocation3 + $0x90] sm:$0xf]
    %v3702 = vld [vmem:[#allocation3 + $0x98] sm:$0xf]
    %v3707 = vrot.slane %v3699, 4
    %v3708 = vrot.slane %v3700, 4
    %v3709 = vrot.slane %v3701, 4
    %v3710 = vrot.slane %v3702, 4
    %v3715 = vadd.f32 %v3695, %v3707
    %v3716 = vadd.f32 %v3696, %v3708
    %v3717 = vadd.f32 %v3697, %v3709
    %v3718 = vadd.f32 %v3698, %v3710
    %v3719 = vpack.c.bf16 %v3694, %v3694
    %v3724 = vrot.slane %v3715, 4
    %v3725 = vrot.slane %v3716, 4
    %v3726 = vrot.slane %v3717, 4
    %v3727 = vrot.slane %v3718, 4
    %3732 = vmatpush.bf16.msra.mxu0 %v3252
    %3733 = vmatpush.bf16.msra.mxu0 %v3248
    %3734 = vmatpush.bf16.msra.mxu0 %v3244
    %3735 = vmatpush.bf16.msra.mxu0 %v3240
    %3736 = vmatpush.bf16.msra.mxu0 %v3236
    %3737 = vmatpush.bf16.msra.mxu0 %v3232
    %3738 = vmatpush.bf16.msra.mxu0 %v3228
    %3739 = vmatpush.bf16.msra.mxu0 %v3224
    %3740 = vmatmul.bf16.gmra.mxu0 %v3719
    %v3741 = vpop.f32.mrf.mxu0
    %v3742 = vadd.f32 %v3724, %v3741
    %v3743 = vpop.f32.mrf.mxu0
    %3744 = vdwg.mxu0
    %3745 = vmatpush.bf16.msra.mxu0 %v3253
    %3746 = vmatpush.bf16.msra.mxu0 %v3249
    %3747 = vmatpush.bf16.msra.mxu0 %v3245
    %3748 = vmatpush.bf16.msra.mxu0 %v3241
    %3749 = vmatpush.bf16.msra.mxu0 %v3237
    %3750 = vmatpush.bf16.msra.mxu0 %v3233
    %3751 = vmatpush.bf16.msra.mxu0 %v3229
    %3752 = vmatpush.bf16.msra.mxu0 %v3225
    %3753 = vmatmul.bf16.gmra.mxu0 %v3719
    %v3754 = vpop.f32.mrf.mxu0
    %v3755 = vadd.f32 %v3725, %v3754
    %v3756 = vpop.f32.mrf.mxu0
    %3757 = vdwg.mxu0
    %3758 = vmatpush.bf16.msra.mxu0 %v3254
    %3759 = vmatpush.bf16.msra.mxu0 %v3250
    %3760 = vmatpush.bf16.msra.mxu0 %v3246
    %3761 = vmatpush.bf16.msra.mxu0 %v3242
    %3762 = vmatpush.bf16.msra.mxu0 %v3238
    %3763 = vmatpush.bf16.msra.mxu0 %v3234
    %3764 = vmatpush.bf16.msra.mxu0 %v3230
    %3765 = vmatpush.bf16.msra.mxu0 %v3226
    %3766 = vmatmul.bf16.gmra.mxu0 %v3719
    %v3767 = vpop.f32.mrf.mxu0
    %v3768 = vadd.f32 %v3726, %v3767
    %v3769 = vpop.f32.mrf.mxu0
    %3770 = vdwg.mxu0
    %3771 = vmatpush.bf16.msra.mxu0 %v3255
    %3772 = vmatpush.bf16.msra.mxu0 %v3251
    %3773 = vmatpush.bf16.msra.mxu0 %v3247
    %3774 = vmatpush.bf16.msra.mxu0 %v3243
    %3775 = vmatpush.bf16.msra.mxu0 %v3239
    %3776 = vmatpush.bf16.msra.mxu0 %v3235
    %3777 = vmatpush.bf16.msra.mxu0 %v3231
    %3778 = vmatpush.bf16.msra.mxu0 %v3227
    %3779 = vmatmul.bf16.gmra.mxu0 %v3719
    %v3780 = vpop.f32.mrf.mxu0
    %v3781 = vadd.f32 %v3727, %v3780
    %v3782 = vpop.f32.mrf.mxu0
    %3783 = vdwg.mxu0
    %v3784 = vxor.u32 %v3742, 2147483648
    %v3785 = vmul.f32 %v3784, 1.442695
    %v3786 = vpow.pop %v3785
    %v3787 = vadd.f32 %v3786, 1.0
    %v3788 = vrcp.pop %v3787
    %v3789 = vmul.f32 %v3787, %v3788
    %v3790 = vsub.f32 1.0, %v3789
    %v3791 = vmul.f32 %v3788, %v3790
    %v3792 = vadd.f32 %v3788, %v3791
    %vm3793 = vweird.f32 %v3787
    %vm3794 = vweird.f32 %v3788
    %vm3795 = vmor %vm3793, %vm3794
    %v3796 = vsel %vm3795, %v3788, %v3792
    %v3797 = vand.u32 2147483647, %v3787
    %vm3798 = vcmp.eq.f32.partialorder %v3797, 8.507059e+37
    %v3799 = vand.u32 %v3787, 2147483648
    %v3800 = vor.u32 1.1754944e-38, %v3799
    %v3801 = vsel %vm3798, %v3800, %v3796
    %v3802 = vmul.f32 1.0, %v3801
    %v3803 = vxor.u32 %v3755, 2147483648
    %v3804 = vmul.f32 %v3803, 1.442695
    %v3805 = vpow.pop %v3804
    %v3806 = vadd.f32 %v3805, 1.0
    %v3807 = vrcp.pop %v3806
    %v3808 = vmul.f32 %v3806, %v3807
    %v3809 = vsub.f32 1.0, %v3808
    %v3810 = vmul.f32 %v3807, %v3809
    %v3811 = vadd.f32 %v3807, %v3810
    %vm3812 = vweird.f32 %v3806
    %vm3813 = vweird.f32 %v3807
    %vm3814 = vmor %vm3812, %vm3813
    %v3815 = vsel %vm3814, %v3807, %v3811
    %v3816 = vand.u32 2147483647, %v3806
    %vm3817 = vcmp.eq.f32.partialorder %v3816, 8.507059e+37
    %v3818 = vand.u32 %v3806, 2147483648
    %v3819 = vor.u32 1.1754944e-38, %v3818
    %v3820 = vsel %vm3817, %v3819, %v3815
    %v3821 = vmul.f32 1.0, %v3820
    %v3822 = vtanh.pop %v3768
    %v3823 = vxor.u32 %v3781, 2147483648
    %v3824 = vmul.f32 %v3823, 1.442695
    %v3825 = vpow.pop %v3824
    %v3826 = vadd.f32 %v3825, 1.0
    %v3827 = vrcp.pop %v3826
    %v3828 = vmul.f32 %v3826, %v3827
    %v3829 = vsub.f32 1.0, %v3828
    %v3830 = vmul.f32 %v3827, %v3829
    %v3831 = vadd.f32 %v3827, %v3830
    %vm3832 = vweird.f32 %v3826
    %vm3833 = vweird.f32 %v3827
    %vm3834 = vmor %vm3832, %vm3833
    %v3835 = vsel %vm3834, %v3827, %v3831
    %v3836 = vand.u32 2147483647, %v3826
    %vm3837 = vcmp.eq.f32.partialorder %v3836, 8.507059e+37
    %v3838 = vand.u32 %v3826, 2147483648
    %v3839 = vor.u32 1.1754944e-38, %v3838
    %v3840 = vsel %vm3837, %v3839, %v3835
    %v3841 = vmul.f32 1.0, %v3840
    %v3842 = vmul.f32 %v3821, %v3692
    %v3843 = vmul.f32 %v3802, %v3822
    %v3844 = vadd.f32 %v3842, %v3843
    %v3845 = vtanh.pop %v3844
    %v3846 = vmul.f32 %v3841, %v3845
    %v3847 = vld [vmem:[#allocation2 + $0x40] sm:$0xf]
    %v3848 = vld [vmem:[#allocation2 + $0x48] sm:$0xf]
    %v3849 = vld [vmem:[#allocation2 + $0x50] sm:$0xf]
    %v3850 = vld [vmem:[#allocation2 + $0x58] sm:$0xf]
    %v3851 = vld [vmem:[#allocation3 + $0x60] sm:$0xf0]
    %v3852 = vld [vmem:[#allocation3 + $0x68] sm:$0xf0]
    %v3853 = vld [vmem:[#allocation3 + $0x70] sm:$0xf0]
    %v3854 = vld [vmem:[#allocation3 + $0x78] sm:$0xf0]
    %v3859 = vrot.slane %v3851, 4
    %v3860 = vrot.slane %v3852, 4
    %v3861 = vrot.slane %v3853, 4
    %v3862 = vrot.slane %v3854, 4
    %v3867 = vadd.f32 %v3847, %v3859
    %v3868 = vadd.f32 %v3848, %v3860
    %v3869 = vadd.f32 %v3849, %v3861
    %v3870 = vadd.f32 %v3850, %v3862
    %v3871 = vpack.c.bf16 %v3846, %v3846
    %3872 = vmatpush.bf16.msra.mxu0 %v3252
    %3873 = vmatpush.bf16.msra.mxu0 %v3248
    %3874 = vmatpush.bf16.msra.mxu0 %v3244
    %3875 = vmatpush.bf16.msra.mxu0 %v3240
    %3876 = vmatpush.bf16.msra.mxu0 %v3236
    %3877 = vmatpush.bf16.msra.mxu0 %v3232
    %3878 = vmatpush.bf16.msra.mxu0 %v3228
    %3879 = vmatpush.bf16.msra.mxu0 %v3224
    %3880 = vmatmul.bf16.gmra.mxu0 %v3871
    %v3881 = vpop.f32.mrf.mxu0
    %v3882 = vadd.f32 %v3867, %v3881
    %v3883 = vpop.f32.mrf.mxu0
    %3884 = vdwg.mxu0
    %3885 = vmatpush.bf16.msra.mxu0 %v3253
    %3886 = vmatpush.bf16.msra.mxu0 %v3249
    %3887 = vmatpush.bf16.msra.mxu0 %v3245
    %3888 = vmatpush.bf16.msra.mxu0 %v3241
    %3889 = vmatpush.bf16.msra.mxu0 %v3237
    %3890 = vmatpush.bf16.msra.mxu0 %v3233
    %3891 = vmatpush.bf16.msra.mxu0 %v3229
    %3892 = vmatpush.bf16.msra.mxu0 %v3225
    %3893 = vmatmul.bf16.gmra.mxu0 %v3871
    %v3894 = vpop.f32.mrf.mxu0
    %v3895 = vadd.f32 %v3868, %v3894
    %v3896 = vpop.f32.mrf.mxu0
    %3897 = vdwg.mxu0
    %3898 = vmatpush.bf16.msra.mxu0 %v3254
    %3899 = vmatpush.bf16.msra.mxu0 %v3250
    %3900 = vmatpush.bf16.msra.mxu0 %v3246
    %3901 = vmatpush.bf16.msra.mxu0 %v3242
    %3902 = vmatpush.bf16.msra.mxu0 %v3238
    %3903 = vmatpush.bf16.msra.mxu0 %v3234
    %3904 = vmatpush.bf16.msra.mxu0 %v3230
    %3905 = vmatpush.bf16.msra.mxu0 %v3226
    %3906 = vmatmul.bf16.gmra.mxu0 %v3871
    %v3907 = vpop.f32.mrf.mxu0
    %v3908 = vadd.f32 %v3869, %v3907
    %v3909 = vpop.f32.mrf.mxu0
    %3910 = vdwg.mxu0
    %3911 = vmatpush.bf16.msra.mxu0 %v3255
    %3912 = vmatpush.bf16.msra.mxu0 %v3251
    %3913 = vmatpush.bf16.msra.mxu0 %v3247
    %3914 = vmatpush.bf16.msra.mxu0 %v3243
    %3915 = vmatpush.bf16.msra.mxu0 %v3239
    %3916 = vmatpush.bf16.msra.mxu0 %v3235
    %3917 = vmatpush.bf16.msra.mxu0 %v3231
    %3918 = vmatpush.bf16.msra.mxu0 %v3227
    %3919 = vmatmul.bf16.gmra.mxu0 %v3871
    %v3920 = vpop.f32.mrf.mxu0
    %v3921 = vadd.f32 %v3870, %v3920
    %v3922 = vpop.f32.mrf.mxu0
    %3923 = vdwg.mxu0
    %v3924 = vxor.u32 %v3882, 2147483648
    %v3925 = vmul.f32 %v3924, 1.442695
    %v3926 = vpow.pop %v3925
    %v3927 = vadd.f32 %v3926, 1.0
    %v3928 = vrcp.pop %v3927
    %v3929 = vmul.f32 %v3927, %v3928
    %v3930 = vsub.f32 1.0, %v3929
    %v3931 = vmul.f32 %v3928, %v3930
    %v3932 = vadd.f32 %v3928, %v3931
    %vm3933 = vweird.f32 %v3927
    %vm3934 = vweird.f32 %v3928
    %vm3935 = vmor %vm3933, %vm3934
    %v3936 = vsel %vm3935, %v3928, %v3932
    %v3937 = vand.u32 2147483647, %v3927
    %vm3938 = vcmp.eq.f32.partialorder %v3937, 8.507059e+37
    %v3939 = vand.u32 %v3927, 2147483648
    %v3940 = vor.u32 1.1754944e-38, %v3939
    %v3941 = vsel %vm3938, %v3940, %v3936
    %v3942 = vmul.f32 1.0, %v3941
    %v3943 = vxor.u32 %v3895, 2147483648
    %v3944 = vmul.f32 %v3943, 1.442695
    %v3945 = vpow.pop %v3944
    %v3946 = vadd.f32 %v3945, 1.0
    %v3947 = vrcp.pop %v3946
    %v3948 = vmul.f32 %v3946, %v3947
    %v3949 = vsub.f32 1.0, %v3948
    %v3950 = vmul.f32 %v3947, %v3949
    %v3951 = vadd.f32 %v3947, %v3950
    %vm3952 = vweird.f32 %v3946
    %vm3953 = vweird.f32 %v3947
    %vm3954 = vmor %vm3952, %vm3953
    %v3955 = vsel %vm3954, %v3947, %v3951
    %v3956 = vand.u32 2147483647, %v3946
    %vm3957 = vcmp.eq.f32.partialorder %v3956, 8.507059e+37
    %v3958 = vand.u32 %v3946, 2147483648
    %v3959 = vor.u32 1.1754944e-38, %v3958
    %v3960 = vsel %vm3957, %v3959, %v3955
    %v3961 = vmul.f32 1.0, %v3960
    %v3962 = vtanh.pop %v3908
    %v3963 = vxor.u32 %v3921, 2147483648
    %v3964 = vmul.f32 %v3963, 1.442695
    %v3965 = vpow.pop %v3964
    %v3966 = vadd.f32 %v3965, 1.0
    %v3967 = vrcp.pop %v3966
    %v3968 = vmul.f32 %v3966, %v3967
    %v3969 = vsub.f32 1.0, %v3968
    %v3970 = vmul.f32 %v3967, %v3969
    %v3971 = vadd.f32 %v3967, %v3970
    %vm3972 = vweird.f32 %v3966
    %vm3973 = vweird.f32 %v3967
    %vm3974 = vmor %vm3972, %vm3973
    %v3975 = vsel %vm3974, %v3967, %v3971
    %v3976 = vand.u32 2147483647, %v3966
    %vm3977 = vcmp.eq.f32.partialorder %v3976, 8.507059e+37
    %v3978 = vand.u32 %v3966, 2147483648
    %v3979 = vor.u32 1.1754944e-38, %v3978
    %v3980 = vsel %vm3977, %v3979, %v3975
    %v3981 = vmul.f32 1.0, %v3980
    %v3982 = vmul.f32 %v3961, %v3844
    %v3983 = vmul.f32 %v3942, %v3962
    %v3984 = vadd.f32 %v3982, %v3983
    %v3985 = vtanh.pop %v3984
    %v3986 = vmul.f32 %v3981, %v3985
    %v3987 = vld [vmem:[#allocation2 + $0x40] sm:$0xf0]
    %v3988 = vld [vmem:[#allocation2 + $0x48] sm:$0xf0]
    %v3989 = vld [vmem:[#allocation2 + $0x50] sm:$0xf0]
    %v3990 = vld [vmem:[#allocation2 + $0x58] sm:$0xf0]
    %v3991 = vld [vmem:[#allocation3 + $0x60] sm:$0xf]
    %v3992 = vld [vmem:[#allocation3 + $0x68] sm:$0xf]
    %v3993 = vld [vmem:[#allocation3 + $0x70] sm:$0xf]
    %v3994 = vld [vmem:[#allocation3 + $0x78] sm:$0xf]
    %v3999 = vrot.slane %v3991, 4
    %v4000 = vrot.slane %v3992, 4
    %v4001 = vrot.slane %v3993, 4
    %v4002 = vrot.slane %v3994, 4
    %v4007 = vadd.f32 %v3987, %v3999
    %v4008 = vadd.f32 %v3988, %v4000
    %v4009 = vadd.f32 %v3989, %v4001
    %v4010 = vadd.f32 %v3990, %v4002
    %v4011 = vpack.c.bf16 %v3986, %v3986
    %v4016 = vrot.slane %v4007, 4
    %v4017 = vrot.slane %v4008, 4
    %v4018 = vrot.slane %v4009, 4
    %v4019 = vrot.slane %v4010, 4
    %4024 = vmatpush.bf16.msra.mxu0 %v3252
    %4025 = vmatpush.bf16.msra.mxu0 %v3248
    %4026 = vmatpush.bf16.msra.mxu0 %v3244
    %4027 = vmatpush.bf16.msra.mxu0 %v3240
    %4028 = vmatpush.bf16.msra.mxu0 %v3236
    %4029 = vmatpush.bf16.msra.mxu0 %v3232
    %4030 = vmatpush.bf16.msra.mxu0 %v3228
    %4031 = vmatpush.bf16.msra.mxu0 %v3224
    %4032 = vmatmul.bf16.gmra.mxu0 %v4011
    %v4033 = vpop.f32.mrf.mxu0
    %v4034 = vadd.f32 %v4016, %v4033
    %v4035 = vpop.f32.mrf.mxu0
    %4036 = vdwg.mxu0
    %4037 = vmatpush.bf16.msra.mxu0 %v3253
    %4038 = vmatpush.bf16.msra.mxu0 %v3249
    %4039 = vmatpush.bf16.msra.mxu0 %v3245
    %4040 = vmatpush.bf16.msra.mxu0 %v3241
    %4041 = vmatpush.bf16.msra.mxu0 %v3237
    %4042 = vmatpush.bf16.msra.mxu0 %v3233
    %4043 = vmatpush.bf16.msra.mxu0 %v3229
    %4044 = vmatpush.bf16.msra.mxu0 %v3225
    %4045 = vmatmul.bf16.gmra.mxu0 %v4011
    %v4046 = vpop.f32.mrf.mxu0
    %v4047 = vadd.f32 %v4017, %v4046
    %v4048 = vpop.f32.mrf.mxu0
    %4049 = vdwg.mxu0
    %4050 = vmatpush.bf16.msra.mxu0 %v3254
    %4051 = vmatpush.bf16.msra.mxu0 %v3250
    %4052 = vmatpush.bf16.msra.mxu0 %v3246
    %4053 = vmatpush.bf16.msra.mxu0 %v3242
    %4054 = vmatpush.bf16.msra.mxu0 %v3238
    %4055 = vmatpush.bf16.msra.mxu0 %v3234
    %4056 = vmatpush.bf16.msra.mxu0 %v3230
    %4057 = vmatpush.bf16.msra.mxu0 %v3226
    %4058 = vmatmul.bf16.gmra.mxu0 %v4011
    %v4059 = vpop.f32.mrf.mxu0
    %v4060 = vadd.f32 %v4018, %v4059
    %v4061 = vpop.f32.mrf.mxu0
    %4062 = vdwg.mxu0
    %4063 = vmatpush.bf16.msra.mxu0 %v3255
    %4064 = vmatpush.bf16.msra.mxu0 %v3251
    %4065 = vmatpush.bf16.msra.mxu0 %v3247
    %4066 = vmatpush.bf16.msra.mxu0 %v3243
    %4067 = vmatpush.bf16.msra.mxu0 %v3239
    %4068 = vmatpush.bf16.msra.mxu0 %v3235
    %4069 = vmatpush.bf16.msra.mxu0 %v3231
    %4070 = vmatpush.bf16.msra.mxu0 %v3227
    %4071 = vmatmul.bf16.gmra.mxu0 %v4011
    %v4072 = vpop.f32.mrf.mxu0
    %v4073 = vadd.f32 %v4019, %v4072
    %v4074 = vpop.f32.mrf.mxu0
    %4075 = vdwg.mxu0
    %v4076 = vxor.u32 %v4034, 2147483648
    %v4077 = vmul.f32 %v4076, 1.442695
    %v4078 = vpow.pop %v4077
    %v4079 = vadd.f32 %v4078, 1.0
    %v4080 = vrcp.pop %v4079
    %v4081 = vmul.f32 %v4079, %v4080
    %v4082 = vsub.f32 1.0, %v4081
    %v4083 = vmul.f32 %v4080, %v4082
    %v4084 = vadd.f32 %v4080, %v4083
    %vm4085 = vweird.f32 %v4079
    %vm4086 = vweird.f32 %v4080
    %vm4087 = vmor %vm4085, %vm4086
    %v4088 = vsel %vm4087, %v4080, %v4084
    %v4089 = vand.u32 2147483647, %v4079
    %vm4090 = vcmp.eq.f32.partialorder %v4089, 8.507059e+37
    %v4091 = vand.u32 %v4079, 2147483648
    %v4092 = vor.u32 1.1754944e-38, %v4091
    %v4093 = vsel %vm4090, %v4092, %v4088
    %v4094 = vmul.f32 1.0, %v4093
    %v4095 = vxor.u32 %v4047, 2147483648
    %v4096 = vmul.f32 %v4095, 1.442695
    %v4097 = vpow.pop %v4096
    %v4098 = vadd.f32 %v4097, 1.0
    %v4099 = vrcp.pop %v4098
    %v4100 = vmul.f32 %v4098, %v4099
    %v4101 = vsub.f32 1.0, %v4100
    %v4102 = vmul.f32 %v4099, %v4101
    %v4103 = vadd.f32 %v4099, %v4102
    %vm4104 = vweird.f32 %v4098
    %vm4105 = vweird.f32 %v4099
    %vm4106 = vmor %vm4104, %vm4105
    %v4107 = vsel %vm4106, %v4099, %v4103
    %v4108 = vand.u32 2147483647, %v4098
    %vm4109 = vcmp.eq.f32.partialorder %v4108, 8.507059e+37
    %v4110 = vand.u32 %v4098, 2147483648
    %v4111 = vor.u32 1.1754944e-38, %v4110
    %v4112 = vsel %vm4109, %v4111, %v4107
    %v4113 = vmul.f32 1.0, %v4112
    %v4114 = vtanh.pop %v4060
    %v4115 = vxor.u32 %v4073, 2147483648
    %v4116 = vmul.f32 %v4115, 1.442695
    %v4117 = vpow.pop %v4116
    %v4118 = vadd.f32 %v4117, 1.0
    %v4119 = vrcp.pop %v4118
    %v4120 = vmul.f32 %v4118, %v4119
    %v4121 = vsub.f32 1.0, %v4120
    %v4122 = vmul.f32 %v4119, %v4121
    %v4123 = vadd.f32 %v4119, %v4122
    %vm4124 = vweird.f32 %v4118
    %vm4125 = vweird.f32 %v4119
    %vm4126 = vmor %vm4124, %vm4125
    %v4127 = vsel %vm4126, %v4119, %v4123
    %v4128 = vand.u32 2147483647, %v4118
    %vm4129 = vcmp.eq.f32.partialorder %v4128, 8.507059e+37
    %v4130 = vand.u32 %v4118, 2147483648
    %v4131 = vor.u32 1.1754944e-38, %v4130
    %v4132 = vsel %vm4129, %v4131, %v4127
    %v4133 = vmul.f32 1.0, %v4132
    %v4134 = vmul.f32 %v4113, %v3984
    %v4135 = vmul.f32 %v4094, %v4114
    %v4136 = vadd.f32 %v4134, %v4135
    %v4137 = vtanh.pop %v4136
    %v4138 = vmul.f32 %v4133, %v4137
    %v4139 = vld [vmem:[#allocation2 + $0x60] sm:$0xf]
    %v4140 = vld [vmem:[#allocation2 + $0x68] sm:$0xf]
    %v4141 = vld [vmem:[#allocation2 + $0x70] sm:$0xf]
    %v4142 = vld [vmem:[#allocation2 + $0x78] sm:$0xf]
    %v4143 = vld [vmem:[#allocation3 + $0x40] sm:$0xf0]
    %v4144 = vld [vmem:[#allocation3 + $0x48] sm:$0xf0]
    %v4145 = vld [vmem:[#allocation3 + $0x50] sm:$0xf0]
    %v4146 = vld [vmem:[#allocation3 + $0x58] sm:$0xf0]
    %v4151 = vrot.slane %v4143, 4
    %v4152 = vrot.slane %v4144, 4
    %v4153 = vrot.slane %v4145, 4
    %v4154 = vrot.slane %v4146, 4
    %v4159 = vadd.f32 %v4139, %v4151
    %v4160 = vadd.f32 %v4140, %v4152
    %v4161 = vadd.f32 %v4141, %v4153
    %v4162 = vadd.f32 %v4142, %v4154
    %v4163 = vpack.c.bf16 %v4138, %v4138
    %4164 = vmatpush.bf16.msra.mxu0 %v3252
    %4165 = vmatpush.bf16.msra.mxu0 %v3248
    %4166 = vmatpush.bf16.msra.mxu0 %v3244
    %4167 = vmatpush.bf16.msra.mxu0 %v3240
    %4168 = vmatpush.bf16.msra.mxu0 %v3236
    %4169 = vmatpush.bf16.msra.mxu0 %v3232
    %4170 = vmatpush.bf16.msra.mxu0 %v3228
    %4171 = vmatpush.bf16.msra.mxu0 %v3224
    %4172 = vmatmul.bf16.gmra.mxu0 %v4163
    %v4173 = vpop.f32.mrf.mxu0
    %v4174 = vadd.f32 %v4159, %v4173
    %v4175 = vpop.f32.mrf.mxu0
    %4176 = vdwg.mxu0
    %4177 = vmatpush.bf16.msra.mxu0 %v3253
    %4178 = vmatpush.bf16.msra.mxu0 %v3249
    %4179 = vmatpush.bf16.msra.mxu0 %v3245
    %4180 = vmatpush.bf16.msra.mxu0 %v3241
    %4181 = vmatpush.bf16.msra.mxu0 %v3237
    %4182 = vmatpush.bf16.msra.mxu0 %v3233
    %4183 = vmatpush.bf16.msra.mxu0 %v3229
    %4184 = vmatpush.bf16.msra.mxu0 %v3225
    %4185 = vmatmul.bf16.gmra.mxu0 %v4163
    %v4186 = vpop.f32.mrf.mxu0
    %v4187 = vadd.f32 %v4160, %v4186
    %v4188 = vpop.f32.mrf.mxu0
    %4189 = vdwg.mxu0
    %4190 = vmatpush.bf16.msra.mxu0 %v3254
    %4191 = vmatpush.bf16.msra.mxu0 %v3250
    %4192 = vmatpush.bf16.msra.mxu0 %v3246
    %4193 = vmatpush.bf16.msra.mxu0 %v3242
    %4194 = vmatpush.bf16.msra.mxu0 %v3238
    %4195 = vmatpush.bf16.msra.mxu0 %v3234
    %4196 = vmatpush.bf16.msra.mxu0 %v3230
    %4197 = vmatpush.bf16.msra.mxu0 %v3226
    %4198 = vmatmul.bf16.gmra.mxu0 %v4163
    %v4199 = vpop.f32.mrf.mxu0
    %v4200 = vadd.f32 %v4161, %v4199
    %v4201 = vpop.f32.mrf.mxu0
    %4202 = vdwg.mxu0
    %4203 = vmatpush.bf16.msra.mxu0 %v3255
    %4204 = vmatpush.bf16.msra.mxu0 %v3251
    %4205 = vmatpush.bf16.msra.mxu0 %v3247
    %4206 = vmatpush.bf16.msra.mxu0 %v3243
    %4207 = vmatpush.bf16.msra.mxu0 %v3239
    %4208 = vmatpush.bf16.msra.mxu0 %v3235
    %4209 = vmatpush.bf16.msra.mxu0 %v3231
    %4210 = vmatpush.bf16.msra.mxu0 %v3227
    %4211 = vmatmul.bf16.gmra.mxu0 %v4163
    %v4212 = vpop.f32.mrf.mxu0
    %v4213 = vadd.f32 %v4162, %v4212
    %v4214 = vpop.f32.mrf.mxu0
    %4215 = vdwg.mxu0
    %v4216 = vxor.u32 %v4174, 2147483648
    %v4217 = vmul.f32 %v4216, 1.442695
    %v4218 = vpow.pop %v4217
    %v4219 = vadd.f32 %v4218, 1.0
    %v4220 = vrcp.pop %v4219
    %v4221 = vmul.f32 %v4219, %v4220
    %v4222 = vsub.f32 1.0, %v4221
    %v4223 = vmul.f32 %v4220, %v4222
    %v4224 = vadd.f32 %v4220, %v4223
    %vm4225 = vweird.f32 %v4219
    %vm4226 = vweird.f32 %v4220
    %vm4227 = vmor %vm4225, %vm4226
    %v4228 = vsel %vm4227, %v4220, %v4224
    %v4229 = vand.u32 2147483647, %v4219
    %vm4230 = vcmp.eq.f32.partialorder %v4229, 8.507059e+37
    %v4231 = vand.u32 %v4219, 2147483648
    %v4232 = vor.u32 1.1754944e-38, %v4231
    %v4233 = vsel %vm4230, %v4232, %v4228
    %v4234 = vmul.f32 1.0, %v4233
    %v4235 = vxor.u32 %v4187, 2147483648
    %v4236 = vmul.f32 %v4235, 1.442695
    %v4237 = vpow.pop %v4236
    %v4238 = vadd.f32 %v4237, 1.0
    %v4239 = vrcp.pop %v4238
    %v4240 = vmul.f32 %v4238, %v4239
    %v4241 = vsub.f32 1.0, %v4240
    %v4242 = vmul.f32 %v4239, %v4241
    %v4243 = vadd.f32 %v4239, %v4242
    %vm4244 = vweird.f32 %v4238
    %vm4245 = vweird.f32 %v4239
    %vm4246 = vmor %vm4244, %vm4245
    %v4247 = vsel %vm4246, %v4239, %v4243
    %v4248 = vand.u32 2147483647, %v4238
    %vm4249 = vcmp.eq.f32.partialorder %v4248, 8.507059e+37
    %v4250 = vand.u32 %v4238, 2147483648
    %v4251 = vor.u32 1.1754944e-38, %v4250
    %v4252 = vsel %vm4249, %v4251, %v4247
    %v4253 = vmul.f32 1.0, %v4252
    %v4254 = vtanh.pop %v4200
    %v4255 = vxor.u32 %v4213, 2147483648
    %v4256 = vmul.f32 %v4255, 1.442695
    %v4257 = vpow.pop %v4256
    %v4258 = vadd.f32 %v4257, 1.0
    %v4259 = vrcp.pop %v4258
    %v4260 = vmul.f32 %v4258, %v4259
    %v4261 = vsub.f32 1.0, %v4260
    %v4262 = vmul.f32 %v4259, %v4261
    %v4263 = vadd.f32 %v4259, %v4262
    %vm4264 = vweird.f32 %v4258
    %vm4265 = vweird.f32 %v4259
    %vm4266 = vmor %vm4264, %vm4265
    %v4267 = vsel %vm4266, %v4259, %v4263
    %v4268 = vand.u32 2147483647, %v4258
    %vm4269 = vcmp.eq.f32.partialorder %v4268, 8.507059e+37
    %v4270 = vand.u32 %v4258, 2147483648
    %v4271 = vor.u32 1.1754944e-38, %v4270
    %v4272 = vsel %vm4269, %v4271, %v4267
    %v4273 = vmul.f32 1.0, %v4272
    %v4274 = vmul.f32 %v4253, %v4136
    %v4275 = vmul.f32 %v4234, %v4254
    %v4276 = vadd.f32 %v4274, %v4275
    %v4277 = vtanh.pop %v4276
    %v4278 = vmul.f32 %v4273, %v4277
    %v4279 = vld [vmem:[#allocation2 + $0x60] sm:$0xf0]
    %v4280 = vld [vmem:[#allocation2 + $0x68] sm:$0xf0]
    %v4281 = vld [vmem:[#allocation2 + $0x70] sm:$0xf0]
    %v4282 = vld [vmem:[#allocation2 + $0x78] sm:$0xf0]
    %v4283 = vld [vmem:[#allocation3 + $0x40] sm:$0xf]
    %v4284 = vld [vmem:[#allocation3 + $0x48] sm:$0xf]
    %v4285 = vld [vmem:[#allocation3 + $0x50] sm:$0xf]
    %v4286 = vld [vmem:[#allocation3 + $0x58] sm:$0xf]
    %v4291 = vrot.slane %v4283, 4
    %v4292 = vrot.slane %v4284, 4
    %v4293 = vrot.slane %v4285, 4
    %v4294 = vrot.slane %v4286, 4
    %v4299 = vadd.f32 %v4279, %v4291
    %v4300 = vadd.f32 %v4280, %v4292
    %v4301 = vadd.f32 %v4281, %v4293
    %v4302 = vadd.f32 %v4282, %v4294
    %v4303 = vpack.c.bf16 %v4278, %v4278
    %v4308 = vrot.slane %v4299, 4
    %v4309 = vrot.slane %v4300, 4
    %v4310 = vrot.slane %v4301, 4
    %v4311 = vrot.slane %v4302, 4
    %4316 = vmatpush.bf16.msra.mxu0 %v3252
    %4317 = vmatpush.bf16.msra.mxu0 %v3248
    %4318 = vmatpush.bf16.msra.mxu0 %v3244
    %4319 = vmatpush.bf16.msra.mxu0 %v3240
    %4320 = vmatpush.bf16.msra.mxu0 %v3236
    %4321 = vmatpush.bf16.msra.mxu0 %v3232
    %4322 = vmatpush.bf16.msra.mxu0 %v3228
    %4323 = vmatpush.bf16.msra.mxu0 %v3224
    %4324 = vmatmul.bf16.gmra.mxu0 %v4303
    %v4325 = vpop.f32.mrf.mxu0
    %v4326 = vadd.f32 %v4308, %v4325
    %v4327 = vpop.f32.mrf.mxu0
    %4328 = vdwg.mxu0
    %4329 = vmatpush.bf16.msra.mxu0 %v3253
    %4330 = vmatpush.bf16.msra.mxu0 %v3249
    %4331 = vmatpush.bf16.msra.mxu0 %v3245
    %4332 = vmatpush.bf16.msra.mxu0 %v3241
    %4333 = vmatpush.bf16.msra.mxu0 %v3237
    %4334 = vmatpush.bf16.msra.mxu0 %v3233
    %4335 = vmatpush.bf16.msra.mxu0 %v3229
    %4336 = vmatpush.bf16.msra.mxu0 %v3225
    %4337 = vmatmul.bf16.gmra.mxu0 %v4303
    %v4338 = vpop.f32.mrf.mxu0
    %v4339 = vadd.f32 %v4309, %v4338
    %v4340 = vpop.f32.mrf.mxu0
    %4341 = vdwg.mxu0
    %4342 = vmatpush.bf16.msra.mxu0 %v3254
    %4343 = vmatpush.bf16.msra.mxu0 %v3250
    %4344 = vmatpush.bf16.msra.mxu0 %v3246
    %4345 = vmatpush.bf16.msra.mxu0 %v3242
    %4346 = vmatpush.bf16.msra.mxu0 %v3238
    %4347 = vmatpush.bf16.msra.mxu0 %v3234
    %4348 = vmatpush.bf16.msra.mxu0 %v3230
    %4349 = vmatpush.bf16.msra.mxu0 %v3226
    %4350 = vmatmul.bf16.gmra.mxu0 %v4303
    %v4351 = vpop.f32.mrf.mxu0
    %v4352 = vadd.f32 %v4310, %v4351
    %v4353 = vpop.f32.mrf.mxu0
    %4354 = vdwg.mxu0
    %4355 = vmatpush.bf16.msra.mxu0 %v3255
    %4356 = vmatpush.bf16.msra.mxu0 %v3251
    %4357 = vmatpush.bf16.msra.mxu0 %v3247
    %4358 = vmatpush.bf16.msra.mxu0 %v3243
    %4359 = vmatpush.bf16.msra.mxu0 %v3239
    %4360 = vmatpush.bf16.msra.mxu0 %v3235
    %4361 = vmatpush.bf16.msra.mxu0 %v3231
    %4362 = vmatpush.bf16.msra.mxu0 %v3227
    %4363 = vmatmul.bf16.gmra.mxu0 %v4303
    %v4364 = vpop.f32.mrf.mxu0
    %v4365 = vadd.f32 %v4311, %v4364
    %v4366 = vpop.f32.mrf.mxu0
    %4367 = vdwg.mxu0
    %v4368 = vxor.u32 %v4326, 2147483648
    %v4369 = vmul.f32 %v4368, 1.442695
    %v4370 = vpow.pop %v4369
    %v4371 = vadd.f32 %v4370, 1.0
    %v4372 = vrcp.pop %v4371
    %v4373 = vmul.f32 %v4371, %v4372
    %v4374 = vsub.f32 1.0, %v4373
    %v4375 = vmul.f32 %v4372, %v4374
    %v4376 = vadd.f32 %v4372, %v4375
    %vm4377 = vweird.f32 %v4371
    %vm4378 = vweird.f32 %v4372
    %vm4379 = vmor %vm4377, %vm4378
    %v4380 = vsel %vm4379, %v4372, %v4376
    %v4381 = vand.u32 2147483647, %v4371
    %vm4382 = vcmp.eq.f32.partialorder %v4381, 8.507059e+37
    %v4383 = vand.u32 %v4371, 2147483648
    %v4384 = vor.u32 1.1754944e-38, %v4383
    %v4385 = vsel %vm4382, %v4384, %v4380
    %v4386 = vmul.f32 1.0, %v4385
    %v4387 = vxor.u32 %v4339, 2147483648
    %v4388 = vmul.f32 %v4387, 1.442695
    %v4389 = vpow.pop %v4388
    %v4390 = vadd.f32 %v4389, 1.0
    %v4391 = vrcp.pop %v4390
    %v4392 = vmul.f32 %v4390, %v4391
    %v4393 = vsub.f32 1.0, %v4392
    %v4394 = vmul.f32 %v4391, %v4393
    %v4395 = vadd.f32 %v4391, %v4394
    %vm4396 = vweird.f32 %v4390
    %vm4397 = vweird.f32 %v4391
    %vm4398 = vmor %vm4396, %vm4397
    %v4399 = vsel %vm4398, %v4391, %v4395
    %v4400 = vand.u32 2147483647, %v4390
    %vm4401 = vcmp.eq.f32.partialorder %v4400, 8.507059e+37
    %v4402 = vand.u32 %v4390, 2147483648
    %v4403 = vor.u32 1.1754944e-38, %v4402
    %v4404 = vsel %vm4401, %v4403, %v4399
    %v4405 = vmul.f32 1.0, %v4404
    %v4406 = vtanh.pop %v4352
    %v4407 = vxor.u32 %v4365, 2147483648
    %v4408 = vmul.f32 %v4407, 1.442695
    %v4409 = vpow.pop %v4408
    %v4410 = vadd.f32 %v4409, 1.0
    %v4411 = vrcp.pop %v4410
    %v4412 = vmul.f32 %v4410, %v4411
    %v4413 = vsub.f32 1.0, %v4412
    %v4414 = vmul.f32 %v4411, %v4413
    %v4415 = vadd.f32 %v4411, %v4414
    %vm4416 = vweird.f32 %v4410
    %vm4417 = vweird.f32 %v4411
    %vm4418 = vmor %vm4416, %vm4417
    %v4419 = vsel %vm4418, %v4411, %v4415
    %v4420 = vand.u32 2147483647, %v4410
    %vm4421 = vcmp.eq.f32.partialorder %v4420, 8.507059e+37
    %v4422 = vand.u32 %v4410, 2147483648
    %v4423 = vor.u32 1.1754944e-38, %v4422
    %v4424 = vsel %vm4421, %v4423, %v4419
    %v4425 = vmul.f32 1.0, %v4424
    %v4426 = vmul.f32 %v4405, %v4276
    %v4427 = vmul.f32 %v4386, %v4406
    %v4428 = vadd.f32 %v4426, %v4427
    %v4429 = vtanh.pop %v4428
    %v4430 = vmul.f32 %v4425, %v4429
    %v4431 = vld [vmem:[#allocation2 + $0x80] sm:$0xf]
    %v4432 = vld [vmem:[#allocation2 + $0x88] sm:$0xf]
    %v4433 = vld [vmem:[#allocation2 + $0x90] sm:$0xf]
    %v4434 = vld [vmem:[#allocation2 + $0x98] sm:$0xf]
    %v4435 = vld [vmem:[#allocation3 + $0x20] sm:$0xf0]
    %v4436 = vld [vmem:[#allocation3 + $0x28] sm:$0xf0]
    %v4437 = vld [vmem:[#allocation3 + $0x30] sm:$0xf0]
    %v4438 = vld [vmem:[#allocation3 + $0x38] sm:$0xf0]
    %v4443 = vrot.slane %v4435, 4
    %v4444 = vrot.slane %v4436, 4
    %v4445 = vrot.slane %v4437, 4
    %v4446 = vrot.slane %v4438, 4
    %v4451 = vadd.f32 %v4431, %v4443
    %v4452 = vadd.f32 %v4432, %v4444
    %v4453 = vadd.f32 %v4433, %v4445
    %v4454 = vadd.f32 %v4434, %v4446
    %v4455 = vpack.c.bf16 %v4430, %v4430
    %4456 = vmatpush.bf16.msra.mxu0 %v3252
    %4457 = vmatpush.bf16.msra.mxu0 %v3248
    %4458 = vmatpush.bf16.msra.mxu0 %v3244
    %4459 = vmatpush.bf16.msra.mxu0 %v3240
    %4460 = vmatpush.bf16.msra.mxu0 %v3236
    %4461 = vmatpush.bf16.msra.mxu0 %v3232
    %4462 = vmatpush.bf16.msra.mxu0 %v3228
    %4463 = vmatpush.bf16.msra.mxu0 %v3224
    %4464 = vmatmul.bf16.gmra.mxu0 %v4455
    %v4465 = vpop.f32.mrf.mxu0
    %v4466 = vadd.f32 %v4451, %v4465
    %v4467 = vpop.f32.mrf.mxu0
    %4468 = vdwg.mxu0
    %4469 = vmatpush.bf16.msra.mxu0 %v3253
    %4470 = vmatpush.bf16.msra.mxu0 %v3249
    %4471 = vmatpush.bf16.msra.mxu0 %v3245
    %4472 = vmatpush.bf16.msra.mxu0 %v3241
    %4473 = vmatpush.bf16.msra.mxu0 %v3237
    %4474 = vmatpush.bf16.msra.mxu0 %v3233
    %4475 = vmatpush.bf16.msra.mxu0 %v3229
    %4476 = vmatpush.bf16.msra.mxu0 %v3225
    %4477 = vmatmul.bf16.gmra.mxu0 %v4455
    %v4478 = vpop.f32.mrf.mxu0
    %v4479 = vadd.f32 %v4452, %v4478
    %v4480 = vpop.f32.mrf.mxu0
    %4481 = vdwg.mxu0
    %4482 = vmatpush.bf16.msra.mxu0 %v3254
    %4483 = vmatpush.bf16.msra.mxu0 %v3250
    %4484 = vmatpush.bf16.msra.mxu0 %v3246
    %4485 = vmatpush.bf16.msra.mxu0 %v3242
    %4486 = vmatpush.bf16.msra.mxu0 %v3238
    %4487 = vmatpush.bf16.msra.mxu0 %v3234
    %4488 = vmatpush.bf16.msra.mxu0 %v3230
    %4489 = vmatpush.bf16.msra.mxu0 %v3226
    %4490 = vmatmul.bf16.gmra.mxu0 %v4455
    %v4491 = vpop.f32.mrf.mxu0
    %v4492 = vadd.f32 %v4453, %v4491
    %v4493 = vpop.f32.mrf.mxu0
    %4494 = vdwg.mxu0
    %4495 = vmatpush.bf16.msra.mxu0 %v3255
    %4496 = vmatpush.bf16.msra.mxu0 %v3251
    %4497 = vmatpush.bf16.msra.mxu0 %v3247
    %4498 = vmatpush.bf16.msra.mxu0 %v3243
    %4499 = vmatpush.bf16.msra.mxu0 %v3239
    %4500 = vmatpush.bf16.msra.mxu0 %v3235
    %4501 = vmatpush.bf16.msra.mxu0 %v3231
    %4502 = vmatpush.bf16.msra.mxu0 %v3227
    %4503 = vmatmul.bf16.gmra.mxu0 %v4455
    %v4504 = vpop.f32.mrf.mxu0
    %v4505 = vadd.f32 %v4454, %v4504
    %v4506 = vpop.f32.mrf.mxu0
    %4507 = vdwg.mxu0
    %v4508 = vxor.u32 %v4466, 2147483648
    %v4509 = vmul.f32 %v4508, 1.442695
    %v4510 = vpow.pop %v4509
    %v4511 = vadd.f32 %v4510, 1.0
    %v4512 = vrcp.pop %v4511
    %v4513 = vmul.f32 %v4511, %v4512
    %v4514 = vsub.f32 1.0, %v4513
    %v4515 = vmul.f32 %v4512, %v4514
    %v4516 = vadd.f32 %v4512, %v4515
    %vm4517 = vweird.f32 %v4511
    %vm4518 = vweird.f32 %v4512
    %vm4519 = vmor %vm4517, %vm4518
    %v4520 = vsel %vm4519, %v4512, %v4516
    %v4521 = vand.u32 2147483647, %v4511
    %vm4522 = vcmp.eq.f32.partialorder %v4521, 8.507059e+37
    %v4523 = vand.u32 %v4511, 2147483648
    %v4524 = vor.u32 1.1754944e-38, %v4523
    %v4525 = vsel %vm4522, %v4524, %v4520
    %v4526 = vmul.f32 1.0, %v4525
    %v4527 = vxor.u32 %v4479, 2147483648
    %v4528 = vmul.f32 %v4527, 1.442695
    %v4529 = vpow.pop %v4528
    %v4530 = vadd.f32 %v4529, 1.0
    %v4531 = vrcp.pop %v4530
    %v4532 = vmul.f32 %v4530, %v4531
    %v4533 = vsub.f32 1.0, %v4532
    %v4534 = vmul.f32 %v4531, %v4533
    %v4535 = vadd.f32 %v4531, %v4534
    %vm4536 = vweird.f32 %v4530
    %vm4537 = vweird.f32 %v4531
    %vm4538 = vmor %vm4536, %vm4537
    %v4539 = vsel %vm4538, %v4531, %v4535
    %v4540 = vand.u32 2147483647, %v4530
    %vm4541 = vcmp.eq.f32.partialorder %v4540, 8.507059e+37
    %v4542 = vand.u32 %v4530, 2147483648
    %v4543 = vor.u32 1.1754944e-38, %v4542
    %v4544 = vsel %vm4541, %v4543, %v4539
    %v4545 = vmul.f32 1.0, %v4544
    %v4546 = vtanh.pop %v4492
    %v4547 = vxor.u32 %v4505, 2147483648
    %v4548 = vmul.f32 %v4547, 1.442695
    %v4549 = vpow.pop %v4548
    %v4550 = vadd.f32 %v4549, 1.0
    %v4551 = vrcp.pop %v4550
    %v4552 = vmul.f32 %v4550, %v4551
    %v4553 = vsub.f32 1.0, %v4552
    %v4554 = vmul.f32 %v4551, %v4553
    %v4555 = vadd.f32 %v4551, %v4554
    %vm4556 = vweird.f32 %v4550
    %vm4557 = vweird.f32 %v4551
    %vm4558 = vmor %vm4556, %vm4557
    %v4559 = vsel %vm4558, %v4551, %v4555
    %v4560 = vand.u32 2147483647, %v4550
    %vm4561 = vcmp.eq.f32.partialorder %v4560, 8.507059e+37
    %v4562 = vand.u32 %v4550, 2147483648
    %v4563 = vor.u32 1.1754944e-38, %v4562
    %v4564 = vsel %vm4561, %v4563, %v4559
    %v4565 = vmul.f32 1.0, %v4564
    %v4566 = vmul.f32 %v4545, %v4428
    %v4567 = vmul.f32 %v4526, %v4546
    %v4568 = vadd.f32 %v4566, %v4567
    %v4569 = vtanh.pop %v4568
    %v4570 = vmul.f32 %v4565, %v4569
    %v4571 = vld [vmem:[#allocation2 + $0x80] sm:$0xf0]
    %v4572 = vld [vmem:[#allocation2 + $0x88] sm:$0xf0]
    %v4573 = vld [vmem:[#allocation2 + $0x90] sm:$0xf0]
    %v4574 = vld [vmem:[#allocation2 + $0x98] sm:$0xf0]
    %v4575 = vld [vmem:[#allocation3 + $0x20] sm:$0xf]
    %v4576 = vld [vmem:[#allocation3 + $0x28] sm:$0xf]
    %v4577 = vld [vmem:[#allocation3 + $0x30] sm:$0xf]
    %v4578 = vld [vmem:[#allocation3 + $0x38] sm:$0xf]
    %v4583 = vrot.slane %v4575, 4
    %v4584 = vrot.slane %v4576, 4
    %v4585 = vrot.slane %v4577, 4
    %v4586 = vrot.slane %v4578, 4
    %v4591 = vadd.f32 %v4571, %v4583
    %v4592 = vadd.f32 %v4572, %v4584
    %v4593 = vadd.f32 %v4573, %v4585
    %v4594 = vadd.f32 %v4574, %v4586
    %v4595 = vpack.c.bf16 %v4570, %v4570
    %v4600 = vrot.slane %v4591, 4
    %v4601 = vrot.slane %v4592, 4
    %v4602 = vrot.slane %v4593, 4
    %v4603 = vrot.slane %v4594, 4
    %4608 = vmatpush.bf16.msra.mxu0 %v3252
    %4609 = vmatpush.bf16.msra.mxu0 %v3248
    %4610 = vmatpush.bf16.msra.mxu0 %v3244
    %4611 = vmatpush.bf16.msra.mxu0 %v3240
    %4612 = vmatpush.bf16.msra.mxu0 %v3236
    %4613 = vmatpush.bf16.msra.mxu0 %v3232
    %4614 = vmatpush.bf16.msra.mxu0 %v3228
    %4615 = vmatpush.bf16.msra.mxu0 %v3224
    %4616 = vmatmul.bf16.gmra.mxu0 %v4595
    %v4617 = vpop.f32.mrf.mxu0
    %v4618 = vadd.f32 %v4600, %v4617
    %v4619 = vpop.f32.mrf.mxu0
    %4620 = vdwg.mxu0
    %4621 = vmatpush.bf16.msra.mxu0 %v3253
    %4622 = vmatpush.bf16.msra.mxu0 %v3249
    %4623 = vmatpush.bf16.msra.mxu0 %v3245
    %4624 = vmatpush.bf16.msra.mxu0 %v3241
    %4625 = vmatpush.bf16.msra.mxu0 %v3237
    %4626 = vmatpush.bf16.msra.mxu0 %v3233
    %4627 = vmatpush.bf16.msra.mxu0 %v3229
    %4628 = vmatpush.bf16.msra.mxu0 %v3225
    %4629 = vmatmul.bf16.gmra.mxu0 %v4595
    %v4630 = vpop.f32.mrf.mxu0
    %v4631 = vadd.f32 %v4601, %v4630
    %v4632 = vpop.f32.mrf.mxu0
    %4633 = vdwg.mxu0
    %4634 = vmatpush.bf16.msra.mxu0 %v3254
    %4635 = vmatpush.bf16.msra.mxu0 %v3250
    %4636 = vmatpush.bf16.msra.mxu0 %v3246
    %4637 = vmatpush.bf16.msra.mxu0 %v3242
    %4638 = vmatpush.bf16.msra.mxu0 %v3238
    %4639 = vmatpush.bf16.msra.mxu0 %v3234
    %4640 = vmatpush.bf16.msra.mxu0 %v3230
    %4641 = vmatpush.bf16.msra.mxu0 %v3226
    %4642 = vmatmul.bf16.gmra.mxu0 %v4595
    %v4643 = vpop.f32.mrf.mxu0
    %v4644 = vadd.f32 %v4602, %v4643
    %v4645 = vpop.f32.mrf.mxu0
    %4646 = vdwg.mxu0
    %4647 = vmatpush.bf16.msra.mxu0 %v3255
    %4648 = vmatpush.bf16.msra.mxu0 %v3251
    %4649 = vmatpush.bf16.msra.mxu0 %v3247
    %4650 = vmatpush.bf16.msra.mxu0 %v3243
    %4651 = vmatpush.bf16.msra.mxu0 %v3239
    %4652 = vmatpush.bf16.msra.mxu0 %v3235
    %4653 = vmatpush.bf16.msra.mxu0 %v3231
    %4654 = vmatpush.bf16.msra.mxu0 %v3227
    %4655 = vmatmul.bf16.gmra.mxu0 %v4595
    %v4656 = vpop.f32.mrf.mxu0
    %v4657 = vadd.f32 %v4603, %v4656
    %v4658 = vpop.f32.mrf.mxu0
    %4659 = vdwg.mxu0
    %v4660 = vxor.u32 %v4618, 2147483648
    %v4661 = vmul.f32 %v4660, 1.442695
    %v4662 = vpow.pop %v4661
    %v4663 = vadd.f32 %v4662, 1.0
    %v4664 = vrcp.pop %v4663
    %v4665 = vmul.f32 %v4663, %v4664
    %v4666 = vsub.f32 1.0, %v4665
    %v4667 = vmul.f32 %v4664, %v4666
    %v4668 = vadd.f32 %v4664, %v4667
    %vm4669 = vweird.f32 %v4663
    %vm4670 = vweird.f32 %v4664
    %vm4671 = vmor %vm4669, %vm4670
    %v4672 = vsel %vm4671, %v4664, %v4668
    %v4673 = vand.u32 2147483647, %v4663
    %vm4674 = vcmp.eq.f32.partialorder %v4673, 8.507059e+37
    %v4675 = vand.u32 %v4663, 2147483648
    %v4676 = vor.u32 1.1754944e-38, %v4675
    %v4677 = vsel %vm4674, %v4676, %v4672
    %v4678 = vmul.f32 1.0, %v4677
    %v4679 = vxor.u32 %v4631, 2147483648
    %v4680 = vmul.f32 %v4679, 1.442695
    %v4681 = vpow.pop %v4680
    %v4682 = vadd.f32 %v4681, 1.0
    %v4683 = vrcp.pop %v4682
    %v4684 = vmul.f32 %v4682, %v4683
    %v4685 = vsub.f32 1.0, %v4684
    %v4686 = vmul.f32 %v4683, %v4685
    %v4687 = vadd.f32 %v4683, %v4686
    %vm4688 = vweird.f32 %v4682
    %vm4689 = vweird.f32 %v4683
    %vm4690 = vmor %vm4688, %vm4689
    %v4691 = vsel %vm4690, %v4683, %v4687
    %v4692 = vand.u32 2147483647, %v4682
    %vm4693 = vcmp.eq.f32.partialorder %v4692, 8.507059e+37
    %v4694 = vand.u32 %v4682, 2147483648
    %v4695 = vor.u32 1.1754944e-38, %v4694
    %v4696 = vsel %vm4693, %v4695, %v4691
    %v4697 = vmul.f32 1.0, %v4696
    %v4698 = vtanh.pop %v4644
    %v4699 = vxor.u32 %v4657, 2147483648
    %v4700 = vmul.f32 %v4699, 1.442695
    %v4701 = vpow.pop %v4700
    %v4702 = vadd.f32 %v4701, 1.0
    %v4703 = vrcp.pop %v4702
    %v4704 = vmul.f32 %v4702, %v4703
    %v4705 = vsub.f32 1.0, %v4704
    %v4706 = vmul.f32 %v4703, %v4705
    %v4707 = vadd.f32 %v4703, %v4706
    %vm4708 = vweird.f32 %v4702
    %vm4709 = vweird.f32 %v4703
    %vm4710 = vmor %vm4708, %vm4709
    %v4711 = vsel %vm4710, %v4703, %v4707
    %v4712 = vand.u32 2147483647, %v4702
    %vm4713 = vcmp.eq.f32.partialorder %v4712, 8.507059e+37
    %v4714 = vand.u32 %v4702, 2147483648
    %v4715 = vor.u32 1.1754944e-38, %v4714
    %v4716 = vsel %vm4713, %v4715, %v4711
    %v4717 = vmul.f32 1.0, %v4716
    %v4718 = vmul.f32 %v4697, %v4568
    %v4719 = vmul.f32 %v4678, %v4698
    %v4720 = vadd.f32 %v4718, %v4719
    %v4721 = vtanh.pop %v4720
    %v4722 = vmul.f32 %v4717, %v4721
    %v4723 = vld [vmem:[#allocation2 + $0xa0] sm:$0xf]
    %v4724 = vld [vmem:[#allocation2 + $0xa8] sm:$0xf]
    %v4725 = vld [vmem:[#allocation2 + $0xb0] sm:$0xf]
    %v4726 = vld [vmem:[#allocation2 + $0xb8] sm:$0xf]
    %v4727 = vld [vmem:[#allocation3] sm:$0xf0]
    %v4728 = vld [vmem:[#allocation3 + $0x8] sm:$0xf0]
    %v4729 = vld [vmem:[#allocation3 + $0x10] sm:$0xf0]
    %v4730 = vld [vmem:[#allocation3 + $0x18] sm:$0xf0]
    %v4735 = vrot.slane %v4727, 4
    %v4736 = vrot.slane %v4728, 4
    %v4737 = vrot.slane %v4729, 4
    %v4738 = vrot.slane %v4730, 4
    %v4743 = vadd.f32 %v4723, %v4735
    %v4744 = vadd.f32 %v4724, %v4736
    %v4745 = vadd.f32 %v4725, %v4737
    %v4746 = vadd.f32 %v4726, %v4738
    %v4747 = vpack.c.bf16 %v4722, %v4722
    %4748 = vmatpush.bf16.msra.mxu0 %v3252
    %4749 = vmatpush.bf16.msra.mxu0 %v3248
    %4750 = vmatpush.bf16.msra.mxu0 %v3244
    %4751 = vmatpush.bf16.msra.mxu0 %v3240
    %4752 = vmatpush.bf16.msra.mxu0 %v3236
    %4753 = vmatpush.bf16.msra.mxu0 %v3232
    %4754 = vmatpush.bf16.msra.mxu0 %v3228
    %4755 = vmatpush.bf16.msra.mxu0 %v3224
    %4756 = vmatmul.bf16.gmra.mxu0 %v4747
    %v4757 = vpop.f32.mrf.mxu0
    %v4758 = vadd.f32 %v4743, %v4757
    %v4759 = vpop.f32.mrf.mxu0
    %4760 = vdwg.mxu0
    %4761 = vmatpush.bf16.msra.mxu0 %v3253
    %4762 = vmatpush.bf16.msra.mxu0 %v3249
    %4763 = vmatpush.bf16.msra.mxu0 %v3245
    %4764 = vmatpush.bf16.msra.mxu0 %v3241
    %4765 = vmatpush.bf16.msra.mxu0 %v3237
    %4766 = vmatpush.bf16.msra.mxu0 %v3233
    %4767 = vmatpush.bf16.msra.mxu0 %v3229
    %4768 = vmatpush.bf16.msra.mxu0 %v3225
    %4769 = vmatmul.bf16.gmra.mxu0 %v4747
    %v4770 = vpop.f32.mrf.mxu0
    %v4771 = vadd.f32 %v4744, %v4770
    %v4772 = vpop.f32.mrf.mxu0
    %4773 = vdwg.mxu0
    %4774 = vmatpush.bf16.msra.mxu0 %v3254
    %4775 = vmatpush.bf16.msra.mxu0 %v3250
    %4776 = vmatpush.bf16.msra.mxu0 %v3246
    %4777 = vmatpush.bf16.msra.mxu0 %v3242
    %4778 = vmatpush.bf16.msra.mxu0 %v3238
    %4779 = vmatpush.bf16.msra.mxu0 %v3234
    %4780 = vmatpush.bf16.msra.mxu0 %v3230
    %4781 = vmatpush.bf16.msra.mxu0 %v3226
    %4782 = vmatmul.bf16.gmra.mxu0 %v4747
    %v4783 = vpop.f32.mrf.mxu0
    %v4784 = vadd.f32 %v4745, %v4783
    %v4785 = vpop.f32.mrf.mxu0
    %4786 = vdwg.mxu0
    %4787 = vmatpush.bf16.msra.mxu0 %v3255
    %4788 = vmatpush.bf16.msra.mxu0 %v3251
    %4789 = vmatpush.bf16.msra.mxu0 %v3247
    %4790 = vmatpush.bf16.msra.mxu0 %v3243
    %4791 = vmatpush.bf16.msra.mxu0 %v3239
    %4792 = vmatpush.bf16.msra.mxu0 %v3235
    %4793 = vmatpush.bf16.msra.mxu0 %v3231
    %4794 = vmatpush.bf16.msra.mxu0 %v3227
    %4795 = vmatmul.bf16.gmra.mxu0 %v4747
    %v4796 = vpop.f32.mrf.mxu0
    %v4797 = vadd.f32 %v4746, %v4796
    %v4798 = vpop.f32.mrf.mxu0
    %4799 = vdwg.mxu0
    %v4800 = vxor.u32 %v4758, 2147483648
    %v4801 = vmul.f32 %v4800, 1.442695
    %v4802 = vpow.pop %v4801
    %v4803 = vadd.f32 %v4802, 1.0
    %v4804 = vrcp.pop %v4803
    %v4805 = vmul.f32 %v4803, %v4804
    %v4806 = vsub.f32 1.0, %v4805
    %v4807 = vmul.f32 %v4804, %v4806
    %v4808 = vadd.f32 %v4804, %v4807
    %vm4809 = vweird.f32 %v4803
    %vm4810 = vweird.f32 %v4804
    %vm4811 = vmor %vm4809, %vm4810
    %v4812 = vsel %vm4811, %v4804, %v4808
    %v4813 = vand.u32 2147483647, %v4803
    %vm4814 = vcmp.eq.f32.partialorder %v4813, 8.507059e+37
    %v4815 = vand.u32 %v4803, 2147483648
    %v4816 = vor.u32 1.1754944e-38, %v4815
    %v4817 = vsel %vm4814, %v4816, %v4812
    %v4818 = vmul.f32 1.0, %v4817
    %v4819 = vxor.u32 %v4771, 2147483648
    %v4820 = vmul.f32 %v4819, 1.442695
    %v4821 = vpow.pop %v4820
    %v4822 = vadd.f32 %v4821, 1.0
    %v4823 = vrcp.pop %v4822
    %v4824 = vmul.f32 %v4822, %v4823
    %v4825 = vsub.f32 1.0, %v4824
    %v4826 = vmul.f32 %v4823, %v4825
    %v4827 = vadd.f32 %v4823, %v4826
    %vm4828 = vweird.f32 %v4822
    %vm4829 = vweird.f32 %v4823
    %vm4830 = vmor %vm4828, %vm4829
    %v4831 = vsel %vm4830, %v4823, %v4827
    %v4832 = vand.u32 2147483647, %v4822
    %vm4833 = vcmp.eq.f32.partialorder %v4832, 8.507059e+37
    %v4834 = vand.u32 %v4822, 2147483648
    %v4835 = vor.u32 1.1754944e-38, %v4834
    %v4836 = vsel %vm4833, %v4835, %v4831
    %v4837 = vmul.f32 1.0, %v4836
    %v4838 = vtanh.pop %v4784
    %v4839 = vxor.u32 %v4797, 2147483648
    %v4840 = vmul.f32 %v4839, 1.442695
    %v4841 = vpow.pop %v4840
    %v4842 = vadd.f32 %v4841, 1.0
    %v4843 = vrcp.pop %v4842
    %v4844 = vmul.f32 %v4842, %v4843
    %v4845 = vsub.f32 1.0, %v4844
    %v4846 = vmul.f32 %v4843, %v4845
    %v4847 = vadd.f32 %v4843, %v4846
    %vm4848 = vweird.f32 %v4842
    %vm4849 = vweird.f32 %v4843
    %vm4850 = vmor %vm4848, %vm4849
    %v4851 = vsel %vm4850, %v4843, %v4847
    %v4852 = vand.u32 2147483647, %v4842
    %vm4853 = vcmp.eq.f32.partialorder %v4852, 8.507059e+37
    %v4854 = vand.u32 %v4842, 2147483648
    %v4855 = vor.u32 1.1754944e-38, %v4854
    %v4856 = vsel %vm4853, %v4855, %v4851
    %v4857 = vmul.f32 1.0, %v4856
    %v4858 = vmul.f32 %v4837, %v4720
    %v4859 = vmul.f32 %v4818, %v4838
    %v4860 = vadd.f32 %v4858, %v4859
    %v4861 = vtanh.pop %v4860
    %v4862 = vmul.f32 %v4857, %v4861
    %v4863 = vld [vmem:[#allocation2 + $0xa0] sm:$0xf0]
    %v4864 = vld [vmem:[#allocation2 + $0xa8] sm:$0xf0]
    %v4865 = vld [vmem:[#allocation2 + $0xb0] sm:$0xf0]
    %v4866 = vld [vmem:[#allocation2 + $0xb8] sm:$0xf0]
    %v4867 = vld [vmem:[#allocation3] sm:$0xf]
    %v4868 = vld [vmem:[#allocation3 + $0x8] sm:$0xf]
    %v4869 = vld [vmem:[#allocation3 + $0x10] sm:$0xf]
    %v4870 = vld [vmem:[#allocation3 + $0x18] sm:$0xf]
    %v4875 = vrot.slane %v4867, 4
    %v4876 = vrot.slane %v4868, 4
    %v4877 = vrot.slane %v4869, 4
    %v4878 = vrot.slane %v4870, 4
    %v4883 = vadd.f32 %v4863, %v4875
    %v4884 = vadd.f32 %v4864, %v4876
    %v4885 = vadd.f32 %v4865, %v4877
    %v4886 = vadd.f32 %v4866, %v4878
    %v4887 = vpack.c.bf16 %v4862, %v4862
    %v4892 = vrot.slane %v4883, 4
    %v4893 = vrot.slane %v4884, 4
    %v4894 = vrot.slane %v4885, 4
    %v4895 = vrot.slane %v4886, 4
    %4900 = vmatpush.bf16.msra.mxu0 %v3252
    %4901 = vmatpush.bf16.msra.mxu0 %v3248
    %4902 = vmatpush.bf16.msra.mxu0 %v3244
    %4903 = vmatpush.bf16.msra.mxu0 %v3240
    %4904 = vmatpush.bf16.msra.mxu0 %v3236
    %4905 = vmatpush.bf16.msra.mxu0 %v3232
    %4906 = vmatpush.bf16.msra.mxu0 %v3228
    %4907 = vmatpush.bf16.msra.mxu0 %v3224
    %4908 = vmatmul.bf16.gmra.mxu0 %v4887
    %v4909 = vpop.f32.mrf.mxu0
    %v4910 = vadd.f32 %v4892, %v4909
    %v4911 = vpop.f32.mrf.mxu0
    %4912 = vdwg.mxu0
    %4913 = vmatpush.bf16.msra.mxu0 %v3253
    %4914 = vmatpush.bf16.msra.mxu0 %v3249
    %4915 = vmatpush.bf16.msra.mxu0 %v3245
    %4916 = vmatpush.bf16.msra.mxu0 %v3241
    %4917 = vmatpush.bf16.msra.mxu0 %v3237
    %4918 = vmatpush.bf16.msra.mxu0 %v3233
    %4919 = vmatpush.bf16.msra.mxu0 %v3229
    %4920 = vmatpush.bf16.msra.mxu0 %v3225
    %4921 = vmatmul.bf16.gmra.mxu0 %v4887
    %v4922 = vpop.f32.mrf.mxu0
    %v4923 = vadd.f32 %v4893, %v4922
    %v4924 = vpop.f32.mrf.mxu0
    %4925 = vdwg.mxu0
    %4926 = vmatpush.bf16.msra.mxu0 %v3254
    %4927 = vmatpush.bf16.msra.mxu0 %v3250
    %4928 = vmatpush.bf16.msra.mxu0 %v3246
    %4929 = vmatpush.bf16.msra.mxu0 %v3242
    %4930 = vmatpush.bf16.msra.mxu0 %v3238
    %4931 = vmatpush.bf16.msra.mxu0 %v3234
    %4932 = vmatpush.bf16.msra.mxu0 %v3230
    %4933 = vmatpush.bf16.msra.mxu0 %v3226
    %4934 = vmatmul.bf16.gmra.mxu0 %v4887
    %v4935 = vpop.f32.mrf.mxu0
    %v4936 = vadd.f32 %v4894, %v4935
    %v4937 = vpop.f32.mrf.mxu0
    %4938 = vdwg.mxu0
    %4939 = vmatpush.bf16.msra.mxu0 %v3255
    %4940 = vmatpush.bf16.msra.mxu0 %v3251
    %4941 = vmatpush.bf16.msra.mxu0 %v3247
    %4942 = vmatpush.bf16.msra.mxu0 %v3243
    %4943 = vmatpush.bf16.msra.mxu0 %v3239
    %4944 = vmatpush.bf16.msra.mxu0 %v3235
    %4945 = vmatpush.bf16.msra.mxu0 %v3231
    %4946 = vmatpush.bf16.msra.mxu0 %v3227
    %4947 = vmatmul.bf16.gmra.mxu0 %v4887
    %v4948 = vpop.f32.mrf.mxu0
    %v4949 = vadd.f32 %v4895, %v4948
    %v4950 = vpop.f32.mrf.mxu0
    %4951 = vdwg.mxu0
    %v4952 = vxor.u32 %v4910, 2147483648
    %v4953 = vmul.f32 %v4952, 1.442695
    %v4954 = vpow.pop %v4953
    %v4955 = vadd.f32 %v4954, 1.0
    %v4956 = vrcp.pop %v4955
    %v4957 = vmul.f32 %v4955, %v4956
    %v4958 = vsub.f32 1.0, %v4957
    %v4959 = vmul.f32 %v4956, %v4958
    %v4960 = vadd.f32 %v4956, %v4959
    %vm4961 = vweird.f32 %v4955
    %vm4962 = vweird.f32 %v4956
    %vm4963 = vmor %vm4961, %vm4962
    %v4964 = vsel %vm4963, %v4956, %v4960
    %v4965 = vand.u32 2147483647, %v4955
    %vm4966 = vcmp.eq.f32.partialorder %v4965, 8.507059e+37
    %v4967 = vand.u32 %v4955, 2147483648
    %v4968 = vor.u32 1.1754944e-38, %v4967
    %v4969 = vsel %vm4966, %v4968, %v4964
    %v4970 = vmul.f32 1.0, %v4969
    %v4971 = vxor.u32 %v4923, 2147483648
    %v4972 = vmul.f32 %v4971, 1.442695
    %v4973 = vpow.pop %v4972
    %v4974 = vadd.f32 %v4973, 1.0
    %v4975 = vrcp.pop %v4974
    %v4976 = vmul.f32 %v4974, %v4975
    %v4977 = vsub.f32 1.0, %v4976
    %v4978 = vmul.f32 %v4975, %v4977
    %v4979 = vadd.f32 %v4975, %v4978
    %vm4980 = vweird.f32 %v4974
    %vm4981 = vweird.f32 %v4975
    %vm4982 = vmor %vm4980, %vm4981
    %v4983 = vsel %vm4982, %v4975, %v4979
    %v4984 = vand.u32 2147483647, %v4974
    %vm4985 = vcmp.eq.f32.partialorder %v4984, 8.507059e+37
    %v4986 = vand.u32 %v4974, 2147483648
    %v4987 = vor.u32 1.1754944e-38, %v4986
    %v4988 = vsel %vm4985, %v4987, %v4983
    %v4989 = vmul.f32 1.0, %v4988
    %v4990 = vtanh.pop %v4936
    %v4991 = vxor.u32 %v4949, 2147483648
    %v4992 = vmul.f32 %v4991, 1.442695
    %v4993 = vpow.pop %v4992
    %v4994 = vadd.f32 %v4993, 1.0
    %v4995 = vrcp.pop %v4994
    %v4996 = vmul.f32 %v4994, %v4995
    %v4997 = vsub.f32 1.0, %v4996
    %v4998 = vmul.f32 %v4995, %v4997
    %v4999 = vadd.f32 %v4995, %v4998
    %vm5000 = vweird.f32 %v4994
    %vm5001 = vweird.f32 %v4995
    %vm5002 = vmor %vm5000, %vm5001
    %v5003 = vsel %vm5002, %v4995, %v4999
    %v5004 = vand.u32 2147483647, %v4994
    %vm5005 = vcmp.eq.f32.partialorder %v5004, 8.507059e+37
    %v5006 = vand.u32 %v4994, 2147483648
    %v5007 = vor.u32 1.1754944e-38, %v5006
    %v5008 = vsel %vm5005, %v5007, %v5003
    %v5009 = vmul.f32 1.0, %v5008
    %v5010 = vmul.f32 %v4989, %v4860
    %v5011 = vmul.f32 %v4970, %v4990
    %v5012 = vadd.f32 %v5010, %v5011
    %v5013 = vtanh.pop %v5012
    %v5014 = vmul.f32 %v5009, %v5013
    %v5016 = vrot.slane %v3554, 4
    %v5019 = vrot.slane %v3846, 4
    %v5022 = vrot.slane %v4138, 4
    %v5025 = vrot.slane %v4430, 4
    %v5028 = vrot.slane %v4722, 4
    %v5031 = vrot.slane %v5014, 4
    %v5033 = vsel %vm2397, %v3402, %v5016
    %v5034 = vsel %vm2397, %v3694, %v5019
    %v5035 = vsel %vm2397, %v3986, %v5022
    %v5036 = vsel %vm2397, %v4278, %v5025
    %v5037 = vsel %vm2397, %v4570, %v5028
    %v5038 = vsel %vm2397, %v4862, %v5031
    %v5040 = vrot.slane %v4862, 4
    %v5043 = vrot.slane %v4570, 4
    %v5046 = vrot.slane %v4278, 4
    %v5049 = vrot.slane %v3986, 4
    %v5052 = vrot.slane %v3694, 4
    %v5055 = vrot.slane %v3402, 4
    %v5057 = vsel %vm2397, %v5014, %v5040
    %v5058 = vsel %vm2397, %v4722, %v5043
    %v5059 = vsel %vm2397, %v4430, %v5046
    %v5060 = vsel %vm2397, %v4138, %v5049
    %v5061 = vsel %vm2397, %v3846, %v5052
    %v5062 = vsel %vm2397, %v3554, %v5055
    %v5063 = vsel %vm2428, %v5033, %v5057
    %v5064 = vsel %vm2428, %v5034, %v5058
    %v5065 = vsel %vm2428, %v5035, %v5059
    %v5066 = vsel %vm2428, %v5036, %v5060
    %v5067 = vsel %vm2428, %v5037, %v5061
    %v5068 = vsel %vm2428, %v5038, %v5062
    %v5069 = vld [vmem:[%s9] sm:$0xff]
    %v5070 = vld [vmem:[%s9 + $0x8] sm:$0xff]
    %v5071 = vld [vmem:[%s9 + $0x10] sm:$0xff]
    %v5072 = vld [vmem:[%s9 + $0x18] sm:$0xff]
    %v5073 = vld [vmem:[%s9 + $0x20] sm:$0xff]
    %v5074 = vld [vmem:[%s9 + $0x28] sm:$0xff]
    %v5075 = vld [vmem:[%s9 + $0x30] sm:$0xff]
    %v5076 = vld [vmem:[%s9 + $0x38] sm:$0xff]
    %v5077 = vld [vmem:[%s9 + $0x40] sm:$0xff]
    %v5078 = vld [vmem:[%s9 + $0x48] sm:$0xff]
    %v5079 = vld [vmem:[%s9 + $0x50] sm:$0xff]
    %v5080 = vld [vmem:[%s9 + $0x58] sm:$0xff]
    %v5081 = vld [vmem:[%s9 + $0x60] sm:$0xff]
    %v5082 = vld [vmem:[%s9 + $0x68] sm:$0xff]
    %v5083 = vld [vmem:[%s9 + $0x70] sm:$0xff]
    %v5084 = vld [vmem:[%s9 + $0x78] sm:$0xff]
    %v5085 = vld [vmem:[%s10] sm:$0x1]
    %v5087 = vperm.slane %v5085, 0
    %5089 = vmatpush.msra.mxu0 %v5084
    %5090 = vmatpush.msra.mxu0 %v5083
    %5091 = vmatpush.msra.mxu0 %v5082
    %5092 = vmatpush.msra.mxu0 %v5081
    %5093 = vmatpush.msra.mxu0 %v5080
    %5094 = vmatpush.msra.mxu0 %v5079
    %5095 = vmatpush.msra.mxu0 %v5078
    %5096 = vmatpush.msra.mxu0 %v5077
    %5097 = vmatpush.msra.mxu0 %v5076
    %5098 = vmatpush.msra.mxu0 %v5075
    %5099 = vmatpush.msra.mxu0 %v5074
    %5100 = vmatpush.msra.mxu0 %v5073
    %5101 = vmatpush.msra.mxu0 %v5072
    %5102 = vmatpush.msra.mxu0 %v5071
    %5103 = vmatpush.msra.mxu0 %v5070
    %5104 = vmatpush.msra.mxu0 %v5069
    %5105 = vmatmul.f32.gmra.mxu0 %v5063
    %v5106 = vpop.f32.mrf.mxu0
    %v5107 = vadd.f32 %v5087, %v5106
    %5108 = vmatmul.f32.gmra.mxu0 %v5064
    %v5109 = vpop.f32.mrf.mxu0
    %v5110 = vadd.f32 %v5087, %v5109
    %5111 = vmatmul.f32.gmra.mxu0 %v5065
    %v5112 = vpop.f32.mrf.mxu0
    %v5113 = vadd.f32 %v5087, %v5112
    %5114 = vmatmul.f32.gmra.mxu0 %v5066
    %v5115 = vpop.f32.mrf.mxu0
    %v5116 = vadd.f32 %v5087, %v5115
    %5117 = vmatmul.f32.gmra.mxu0 %v5067
    %v5118 = vpop.f32.mrf.mxu0
    %v5119 = vadd.f32 %v5087, %v5118
    %5120 = vmatmul.f32.gmra.mxu0 %v5068
    %v5121 = vpop.f32.mrf.mxu0
    %v5122 = vadd.f32 %v5087, %v5121
    %5123 = vdwg.mxu0
    %vm5124 = vcmask 23552
    %5125 = vst.msk [vmem:[%s11] sm:$0xff] %vm5124, %v5107
    %5126 = vst.msk [vmem:[%s11 + $0x8] sm:$0xff] %vm5124, %v5110
    %5127 = vst.msk [vmem:[%s11 + $0x10] sm:$0xff] %vm5124, %v5113
    %5128 = vst.msk [vmem:[%s11 + $0x18] sm:$0xff] %vm5124, %v5116
    %5129 = vst.msk [vmem:[%s11 + $0x20] sm:$0xff] %vm5124, %v5119
    %5130 = vst.msk [vmem:[%s11 + $0x28] sm:$0xff] %vm5124, %v5122
    // Predicated region
    $region62: #{lstm_forecast_forward.1} parent=1 // pred_check
      _
    $region63: #{lstm_forecast_forward.1} parent=1 // pred_check_branch
      %5132 = sbr.rel (0) target = $region65
    $region64: #{lstm_forecast_forward.1} parent=1 // pred_region
      _
    $region65: #{lstm_forecast_forward.1} parent=1 // pred_fallthru
      _
    // Predicated region
    $region66: #{lstm_forecast_forward.1} parent=1 // pred_check
      _
    $region67: #{lstm_forecast_forward.1} parent=1 // pred_check_branch
      %5134 = sbr.rel (0) target = $region69
    $region68: #{lstm_forecast_forward.1} parent=1 // pred_region
      _
    $region69: #{lstm_forecast_forward.1} parent=1 // pred_fallthru
      _
    %5135 = vsyncpa [#allocation5], 1
    %5136 = vsyncpa [#allocation7], 1
    %5137 = vsyncpa [#allocation10], 1

</llo_original>
